<compile_context>
chip_gen: v5e
topology: v5e:2x2
jax: 0.10.0
libtpu: 0.0.40
codegen_flags: <defaults>
</compile_context>

<pallas_src>
import jax
import jax.numpy as jnp
from jax.experimental import pallas as pl
from jax.experimental.pallas import tpu as pltpu

HIDDEN = 32
M = 5            # encoder hard-codes M = 5
N_B = 8
N_LAYERS = 2


def _silu(x):
    return x * jax.nn.sigmoid(x)


def _mm(a, b):
    return jnp.dot(a, b, preferred_element_type=jnp.float32)


# ----------------------------------------------------------------------------
# The single fused kernel (runs once; batch folded into the lane axis).
#
# Pair index p = b*V*V + i*V + j  (i = sender, j = receiver), node index
# n = b*V + k.  All pair-sized tensors are feature-major: (rows, B*V*V).
# ----------------------------------------------------------------------------
def fused_encoder_kernel(rc_ref, geom_ref, agg_ref, rep_ref,
                         rwt_ref, rbc_ref, projt_ref, colp_ref,
                         wps_ref, wpo_ref, blkcol_ref, wout_ref,
                         o_ref):
    H = HIDDEN
    BP = geom_ref.shape[1]                         # B * V * V

    rc = rc_ref[0, 0]                              # batch-wide cutoff (SMEM)

    r = geom_ref[0:1, :]                           # (1, BP) clamped distance
    c1 = geom_ref[1:2, :]                          # cos(theta)
    s1 = geom_ref[2:3, :]                          # sin(theta)
    adj = geom_ref[3:4, :]                         # (1-graph)/sqrt(deg_i)

    # ---- Bessel radial basis, feature-major (N_B, BP) ----
    bvec = rbc_ref[:N_B, 4:5]                      # (N_B, 1) cumsum(softplus(g))
    bes = 2.0 * jnp.sin(bvec * ((jnp.pi / rc) * r)) / (rc * r)      # (N_B, BP)
    x = jnp.concatenate(
        [bes, jnp.zeros((64 - N_B, BP), jnp.float32)], axis=0)      # (64, BP)

    # ---- radial MLP: y = W^T x + b, all (64,64)@(64,BP) lane-dense ----
    x = _silu(_mm(rwt_ref[0], x) + rbc_ref[:, 0:1])
    x = _silu(_mm(rwt_ref[1], x) + rbc_ref[:, 1:2])
    x = _silu(_mm(rwt_ref[2], x) + rbc_ref[:, 2:3])
    R8 = _mm(rwt_ref[3, :8, :], x) + rbc_ref[:8, 3:4]   # (8, BP); rows M+1.. = 0

    # ---- cos(m t) / sin(m t) rows via exact angle-addition recurrence ----
    ones = jnp.ones_like(c1)
    zeros = jnp.zeros_like(c1)
    cos_rows = [ones, c1]
    sin_rows = [zeros, s1]
    cm, sm = c1, s1
    for _ in range(2, M + 1):
        cm, sm = cm * c1 - sm * s1, sm * c1 + cm * s1
        cos_rows.append(cm)
        sin_rows.append(sm)
    pad_rows = [zeros] * (8 - (M + 1))
    C8 = jnp.concatenate(cos_rows + pad_rows, axis=0)   # (8, BP)
    S8 = jnp.concatenate(sin_rows + pad_rows, axis=0)   # (8, BP), row 0 = 0

    # ---- circular-harmonic projection on the MXU: e = P @ [R*cos; R*sin] ----
    F = jnp.concatenate([R8 * C8, R8 * S8], axis=0)     # (16, BP)
    e = _mm(projt_ref[...], F) + colp_ref[:, 0:1]        # (H, BP)

    # adjacency mask + degree normalization folded into e ONCE
    e_n = e * adj                                        # (H, BP)

    # h = e.sum(dim=1): sum over sender i, via selection-matrix matmul
    hT = _mm(e, agg_ref[0])                              # (H, B*V)

    # ---- interaction blocks (statically unrolled) ----
    for l in range(N_LAYERS):
        # fused pre_fc + skip_interact: one (2H,H)@(H,BV) matmul
        hs = _silu(_mm(wps_ref[l], hT) + blkcol_ref[l, :, 0:1])      # (2H, BV)
        h0T = hs[:H]
        skipT = hs[H:]

        # broadcast h0 over edges on the MXU, then masked/normalized sum
        h0_tiled = _mm(h0T, rep_ref[...])                            # (H, BP)
        neighT = _mm(e_n * h0_tiled, agg_ref[1])                     # (H, BV)

        cat = jnp.concatenate([h0T, neighT], axis=0)                 # (2H, BV)
        h1 = _silu(_mm(wpo_ref[l], cat) + blkcol_ref[l, :H, 1:2])

        # LayerNorm over channels (eps=1e-5, affine), rsqrt on the EUP
        mu = jnp.mean(h1, axis=0, keepdims=True)
        var = jnp.mean((h1 - mu) ** 2, axis=0, keepdims=True)
        h1 = ((h1 - mu) * jax.lax.rsqrt(var + 1e-5)
              * blkcol_ref[l, :H, 2:3] + blkcol_ref[l, :H, 3:4])

        hT = _silu(skipT + h1)

    # output head; (H, B*V) is only 4 KB — transposed back to (B,V,H) by XLA.
    o_ref[...] = _silu(_mm(wout_ref[...], hT) + colp_ref[:, 1:2])


# ----------------------------------------------------------------------------
# Wrapper: trivial O(B*V^2) geometry preprocessing + single pallas_call.
# ----------------------------------------------------------------------------
def encoder_forward(pos, graph, pk):
    B, V, _ = pos.shape
    H = HIDDEN
    P = V * V
    BP = B * P
    BV = B * V

    # pairwise geometry (cheap XLA work hoisted out of the kernel per review)
    delta = pos[:, :, None, :] - pos[:, None, :, :]
    dx = delta[..., 0]
    dy = delta[..., 1]
    r = jnp.maximum(jnp.sqrt(dx * dx + dy * dy), 1e-6)
    rc = jnp.max(r).reshape(1, 1)                        # batch-wide cutoff
    theta = jnp.arctan2(dy, dx + 1e-6)
    adj = (graph == 0.0).astype(jnp.float32) / jnp.sqrt(
        jnp.sum(1.0 - graph, axis=-1, keepdims=True))    # (B, V, V)

    geom = jnp.concatenate([
        r.reshape(1, BP),
        jnp.cos(theta).reshape(1, BP),
        jnp.sin(theta).reshape(1, BP),
        adj.reshape(1, BP),
        jnp.zeros((4, BP), jnp.float32)], axis=0)        # (8, BP)

    # constant 0/1 selection matrices: sender/receiver sums run on the MXU
    p_idx = jnp.arange(BP)
    n_idx = jnp.arange(BV)
    p_b, p_i, p_j = p_idx // P, (p_idx // V) % V, p_idx % V
    n_b, n_k = n_idx // V, n_idx % V
    same_b = p_b[:, None] == n_b[None, :]
    aggJ = (same_b & (p_j[:, None] == n_k[None, :])).astype(jnp.float32)
    aggI = (same_b & (p_i[:, None] == n_k[None, :])).astype(jnp.float32)
    agg = jnp.stack([aggJ, aggI], axis=0)                # (2, BP, BV)
    rep = aggJ.T                                         # (BV, BP)

    flops = int(
        2 * BP * (64 * 64 * 3 + 64 * 8 + 16 * H)         # radial MLP + projection
        + 2 * H * BP * BV * (1 + 2 * N_LAYERS)           # edge<->node selection matmuls
        + 2 * BV * H * H * (8 * N_LAYERS + 2)            # node-feature matmuls
        + 24 * H * BP)                                    # edge elementwise
    transc = int(BP * (N_B + 3 * 64 + 8) + BV * 4 * H * (N_LAYERS + 1))
    bytes_accessed = int(4 * (geom.size + agg.size + rep.size + 1
                              + sum(int(v.size) for v in pk.values())
                              + H * BV))

    vmem = pl.BlockSpec(memory_space=pltpu.MemorySpace.VMEM)
    out = pl.pallas_call(
        fused_encoder_kernel,
        out_shape=jax.ShapeDtypeStruct((H, BV), jnp.float32),
        in_specs=[pl.BlockSpec(memory_space=pltpu.MemorySpace.SMEM)] + [vmem] * 11,
        out_specs=vmem,
        cost_estimate=pl.CostEstimate(flops=flops, transcendentals=transc,
                                      bytes_accessed=bytes_accessed),
    )(rc, geom, agg, rep, pk["rwt"], pk["rbc"], pk["projT"], pk["colp"],
      pk["wps"], pk["wpo"], pk["blkcol"], pk["wout"])

    # (H, B*V) -> (B, V, H): free layout plumbing in XLA.
    return out.T.reshape(B, V, H)


# ----------------------------------------------------------------------------
# Deterministic synthetic parameters (shapes from the PyTorch __init__).
# ----------------------------------------------------------------------------
def make_params(key, hidden, n_layers):
    keys = iter(jax.random.split(key, 64))

    def lin(fi, fo):
        w = jax.random.normal(next(keys), (fi, fo), jnp.float32) / jnp.sqrt(
            jnp.float32(fi))
        b = 0.01 * jax.random.normal(next(keys), (fo,), jnp.float32)
        return w, b

    g = jnp.arange(1, N_B + 1, dtype=jnp.float32)
    bvec = jnp.cumsum(jax.nn.softplus(g))            # (N_B,)

    radial = [lin(N_B, 64), lin(64, 64), lin(64, 64), lin(64, M + 1)]
    proj = lin(2 * M + 1, hidden)
    blocks = []
    for _ in range(n_layers):
        blocks.append(dict(pre=lin(hidden, hidden),
                           post=lin(2 * hidden, hidden),
                           skip=lin(hidden, hidden),
                           ln_g=jnp.ones((hidden,), jnp.float32),
                           ln_b=jnp.zeros((hidden,), jnp.float32)))
    out = lin(hidden, hidden)
    # TODO(synk): InteractionBlock.order_weights is declared but unused in the
    # PyTorch forward pass, so it is intentionally omitted here.
    return dict(bvec=bvec, radial=radial, proj=proj, blocks=blocks, out=out)


def pack_params(p):
    """Pack the weights into a few compute-ready (transposed, padded) arrays."""
    H = HIDDEN
    L = len(p["blocks"])
    (w1, b1), (w2, b2), (w3, b3), (w4, b4) = p["radial"]

    rwt = jnp.zeros((4, 64, 64), jnp.float32)
    rwt = rwt.at[0, :, :N_B].set(w1.T)               # W1^T in first N_B cols
    rwt = rwt.at[1].set(w2.T)
    rwt = rwt.at[2].set(w3.T)
    rwt = rwt.at[3, :M + 1, :].set(w4.T)             # W4^T in first M+1 rows

    rbc = jnp.zeros((64, 8), jnp.float32)            # bias columns + bvec
    rbc = rbc.at[:, 0].set(b1).at[:, 1].set(b2).at[:, 2].set(b3)
    rbc = rbc.at[:M + 1, 3].set(b4)
    rbc = rbc.at[:N_B, 4].set(p["bvec"])

    pw, pbias = p["proj"]                            # (2M+1, H), (H,)
    projT = jnp.zeros((H, 16), jnp.float32)
    projT = projT.at[:, :M + 1].set(pw[:M + 1].T)    # cos rows m = 0..M
    projT = projT.at[:, 9:9 + M].set(pw[M + 1:].T)   # sin rows m = 1..M

    ow, ob = p["out"]
    colp = jnp.zeros((H, 8), jnp.float32)
    colp = colp.at[:, 0].set(pbias)                  # projection bias
    colp = colp.at[:, 1].set(ob)                     # output-head bias

    wps = jnp.zeros((L, 2 * H, H), jnp.float32)      # [pre^T ; skip^T]
    wpo = jnp.zeros((L, H, 2 * H), jnp.float32)      # post^T
    blkcol = jnp.zeros((L, 2 * H, 8), jnp.float32)   # bias / LN columns
    for l, blk in enumerate(p["blocks"]):
        pre_w, pre_b = blk["pre"]
        post_w, post_b = blk["post"]
        skip_w, skip_b = blk["skip"]
        wps = wps.at[l, :H, :].set(pre_w.T)
        wps = wps.at[l, H:, :].set(skip_w.T)
        wpo = wpo.at[l].set(post_w.T)
        blkcol = blkcol.at[l, :H, 0].set(pre_b)
        blkcol = blkcol.at[l, H:, 0].set(skip_b)
        blkcol = blkcol.at[l, :H, 1].set(post_b)
        blkcol = blkcol.at[l, :H, 2].set(blk["ln_g"])
        blkcol = blkcol.at[l, :H, 3].set(blk["ln_b"])

    return dict(rwt=rwt, rbc=rbc, projT=projT, colp=colp,
                wps=wps, wpo=wpo, blkcol=blkcol, wout=ow.T)


# ----------------------------------------------------------------------------
# Pure-JAX reference mirroring the PyTorch forward (incl. atan2) for checking.
# ----------------------------------------------------------------------------
def reference_forward(pos, graph, p):
    delta = pos[:, :, None, :] - pos[:, None, :, :]
    r = jnp.maximum(jnp.linalg.norm(delta, axis=-1, keepdims=True), 1e-6)
    rc = jnp.max(r)
    bvec = p["bvec"].reshape(1, 1, 1, -1)
    bessel = 2.0 * jnp.sin(bvec * jnp.pi * r / rc) / (rc * r)
    x = bessel
    for (w, bb) in p["radial"][:3]:
        x = jax.nn.silu(x @ w + bb)
    w4, b4 = p["radial"][3]
    R = x @ w4 + b4
    theta = jnp.arctan2(delta[..., 1:2], delta[..., 0:1] + 1e-6)
    mvec = jnp.arange(0, M + 1, dtype=jnp.float32).reshape(1, 1, 1, -1)
    cosm, sinm = jnp.cos(mvec * theta), jnp.sin(mvec * theta)
    edge = jnp.concatenate([R * cosm, R[..., 1:] * sinm[..., 1:]], axis=-1)
    pw, pbias = p["proj"]
    e = edge @ pw + pbias
    h = e.sum(axis=1)
    for blk in p["blocks"]:
        pre_w, pre_b = blk["pre"]
        post_w, post_b = blk["post"]
        skip_w, skip_b = blk["skip"]
        h0 = jax.nn.silu(h @ pre_w + pre_b)
        msg = e * h0[:, None, :, :]
        msg = jnp.where(graph[..., None] != 0.0, 0.0, msg)
        neigh = msg.sum(axis=2) / jnp.sqrt(
            jnp.sum(1.0 - graph, axis=-1, keepdims=True))
        h1 = jax.nn.silu(jnp.concatenate([h0, neigh], -1) @ post_w + post_b)
        mu = h1.mean(-1, keepdims=True)
        var = ((h1 - mu) ** 2).mean(-1, keepdims=True)
        h1 = (h1 - mu) / jnp.sqrt(var + 1e-5) * blk["ln_g"] + blk["ln_b"]
        skip = jax.nn.silu(h @ skip_w + skip_b)
        h = jax.nn.silu(skip + h1)
    ow, ob = p["out"]
    return jax.nn.silu(h @ ow + ob)


if __name__ == "__main__":
    key = jax.random.PRNGKey(0)
    kp, kg, kw = jax.random.split(key, 3)
    B, V = 2, 16
    pos = jax.random.uniform(kp, (B, V, 2), jnp.float32)
    graph = (jax.random.uniform(kg, (B, V, V)) > 0.5).astype(jnp.float32)
    idx = jnp.arange(V)
    graph = graph.at[:, idx, idx].set(0.0)       # guarantee >= 1 edge per node

    params = make_params(kw, HIDDEN, N_LAYERS)
    packed = pack_params(params)

    out = encoder_forward(pos, graph, packed)
    out = jax.block_until_ready(out)

    ref = reference_forward(pos, graph, params)
    assert out.shape == (B, V, HIDDEN)
    err = float(jnp.max(jnp.abs(out - ref)))
    assert jnp.allclose(out, ref, atol=2e-3, rtol=2e-3), f"max abs err {err}"
    print("KERNEL_OK")
</pallas_src>

<mosaic_0001>
module attributes {stable_mosaic.version = 11 : i64} {
  func.func @fused_encoder_kernel(%arg0: memref<1x1xf32, #tpu.memory_space<smem>>, %arg1: memref<8x512xf32, #tpu.memory_space<vmem>>, %arg2: memref<2x512x32xf32, #tpu.memory_space<vmem>>, %arg3: memref<32x512xf32, #tpu.memory_space<vmem>>, %arg4: memref<4x64x64xf32, #tpu.memory_space<vmem>>, %arg5: memref<64x8xf32, #tpu.memory_space<vmem>>, %arg6: memref<32x16xf32, #tpu.memory_space<vmem>>, %arg7: memref<32x8xf32, #tpu.memory_space<vmem>>, %arg8: memref<2x64x32xf32, #tpu.memory_space<vmem>>, %arg9: memref<2x32x64xf32, #tpu.memory_space<vmem>>, %arg10: memref<2x64x8xf32, #tpu.memory_space<vmem>>, %arg11: memref<32x32xf32, #tpu.memory_space<vmem>>, %arg12: memref<32x32xf32, #tpu.memory_space<vmem>>) attributes {dimension_semantics = [], scalar_prefetch = 0 : i64, scratch_operands = 0 : i64, tpu.core_type = #tpu.core_type<tc>} {
    %c0 = arith.constant 0 : index
    %c0_0 = arith.constant 0 : index
    %0 = memref.load %arg0[%c0, %c0_0] : memref<1x1xf32, #tpu.memory_space<smem>>
    %c0_1 = arith.constant 0 : index
    %c0_2 = arith.constant 0 : index
    %1 = vector.load %arg1[%c0_1, %c0_2] : memref<8x512xf32, #tpu.memory_space<vmem>>, vector<1x512xf32>
    %c1 = arith.constant 1 : index
    %c0_3 = arith.constant 0 : index
    %2 = vector.load %arg1[%c1, %c0_3] : memref<8x512xf32, #tpu.memory_space<vmem>>, vector<1x512xf32>
    %c2 = arith.constant 2 : index
    %c0_4 = arith.constant 0 : index
    %3 = vector.load %arg1[%c2, %c0_4] : memref<8x512xf32, #tpu.memory_space<vmem>>, vector<1x512xf32>
    %c3 = arith.constant 3 : index
    %c0_5 = arith.constant 0 : index
    %4 = vector.load %arg1[%c3, %c0_5] : memref<8x512xf32, #tpu.memory_space<vmem>>, vector<1x512xf32>
    %c0_6 = arith.constant 0 : index
    %c4 = arith.constant 4 : index
    %5 = vector.load %arg5[%c0_6, %c4] : memref<64x8xf32, #tpu.memory_space<vmem>>, vector<8x1xf32>
    %cst = arith.constant 3.14159274 : f32
    %6 = arith.divf %cst, %0 : f32
    %7 = vector.broadcast %6 : f32 to vector<1x512xf32>
    %8 = arith.mulf %7, %1 : vector<1x512xf32>
    %9 = vector.broadcast %5 : vector<8x1xf32> to vector<8x512xf32>
    %10 = vector.broadcast %8 : vector<1x512xf32> to vector<8x512xf32>
    %11 = arith.mulf %9, %10 : vector<8x512xf32>
    %12 = math.sin %11 : vector<8x512xf32>
    %cst_7 = arith.constant 2.000000e+00 : f32
    %13 = vector.broadcast %cst_7 : f32 to vector<8x512xf32>
    %14 = arith.mulf %13, %12 : vector<8x512xf32>
    %15 = vector.broadcast %0 : f32 to vector<1x512xf32>
    %16 = arith.mulf %15, %1 : vector<1x512xf32>
    %17 = vector.broadcast %16 : vector<1x512xf32> to vector<8x512xf32>
    %18 = arith.divf %14, %17 : vector<8x512xf32>
    %cst_8 = arith.constant 0.000000e+00 : f32
    %19 = vector.broadcast %cst_8 : f32 to vector<56x512xf32>
    %20 = tpu.concatenate %18, %19 in 0 : vector<8x512xf32>, vector<56x512xf32> -> vector<64x512xf32>
    %c0_9 = arith.constant 0 : index
    %c0_10 = arith.constant 0 : index
    %c0_11 = arith.constant 0 : index
    %21 = vector.load %arg4[%c0_9, %c0_10, %c0_11] : memref<4x64x64xf32, #tpu.memory_space<vmem>>, vector<1x64x64xf32>
    %22 = vector.shape_cast %21 : vector<1x64x64xf32> to vector<64x64xf32>
    %cst_12 = arith.constant dense<0.000000e+00> : vector<64x512xf32>
    %23 = tpu.matmul %22, %20, %cst_12 {dimension_numbers = #tpu.dot_dimension_numbers<[1], [0], [0], [1], [0, 0, 1, 1], [], []>} : vector<64x64xf32>, vector<64x512xf32>, vector<64x512xf32> -> vector<64x512xf32>
    %c0_13 = arith.constant 0 : index
    %c0_14 = arith.constant 0 : index
    %24 = vector.load %arg5[%c0_13, %c0_14] : memref<64x8xf32, #tpu.memory_space<vmem>>, vector<64x1xf32>
    %25 = vector.broadcast %24 : vector<64x1xf32> to vector<64x512xf32>
    %26 = arith.addf %23, %25 : vector<64x512xf32>
    %27 = arith.negf %26 : vector<64x512xf32>
    %28 = math.exp %27 : vector<64x512xf32>
    %cst_15 = arith.constant 1.000000e+00 : f32
    %29 = vector.broadcast %cst_15 : f32 to vector<64x512xf32>
    %30 = arith.addf %29, %28 : vector<64x512xf32>
    %31 = arith.divf %29, %30 : vector<64x512xf32>
    %32 = arith.mulf %26, %31 : vector<64x512xf32>
    %c1_16 = arith.constant 1 : index
    %c0_17 = arith.constant 0 : index
    %c0_18 = arith.constant 0 : index
    %33 = vector.load %arg4[%c1_16, %c0_17, %c0_18] : memref<4x64x64xf32, #tpu.memory_space<vmem>>, vector<1x64x64xf32>
    %34 = vector.shape_cast %33 : vector<1x64x64xf32> to vector<64x64xf32>
    %cst_19 = arith.constant dense<0.000000e+00> : vector<64x512xf32>
    %35 = tpu.matmul %34, %32, %cst_19 {dimension_numbers = #tpu.dot_dimension_numbers<[1], [0], [0], [1], [0, 0, 1, 1], [], []>} : vector<64x64xf32>, vector<64x512xf32>, vector<64x512xf32> -> vector<64x512xf32>
    %c0_20 = arith.constant 0 : index
    %c1_21 = arith.constant 1 : index
    %36 = vector.load %arg5[%c0_20, %c1_21] : memref<64x8xf32, #tpu.memory_space<vmem>>, vector<64x1xf32>
    %37 = vector.broadcast %36 : vector<64x1xf32> to vector<64x512xf32>
    %38 = arith.addf %35, %37 : vector<64x512xf32>
    %39 = arith.negf %38 : vector<64x512xf32>
    %40 = math.exp %39 : vector<64x512xf32>
    %cst_22 = arith.constant 1.000000e+00 : f32
    %41 = vector.broadcast %cst_22 : f32 to vector<64x512xf32>
    %42 = arith.addf %41, %40 : vector<64x512xf32>
    %43 = arith.divf %41, %42 : vector<64x512xf32>
    %44 = arith.mulf %38, %43 : vector<64x512xf32>
    %c2_23 = arith.constant 2 : index
    %c0_24 = arith.constant 0 : index
    %c0_25 = arith.constant 0 : index
    %45 = vector.load %arg4[%c2_23, %c0_24, %c0_25] : memref<4x64x64xf32, #tpu.memory_space<vmem>>, vector<1x64x64xf32>
    %46 = vector.shape_cast %45 : vector<1x64x64xf32> to vector<64x64xf32>
    %cst_26 = arith.constant dense<0.000000e+00> : vector<64x512xf32>
    %47 = tpu.matmul %46, %44, %cst_26 {dimension_numbers = #tpu.dot_dimension_numbers<[1], [0], [0], [1], [0, 0, 1, 1], [], []>} : vector<64x64xf32>, vector<64x512xf32>, vector<64x512xf32> -> vector<64x512xf32>
    %c0_27 = arith.constant 0 : index
    %c2_28 = arith.constant 2 : index
    %48 = vector.load %arg5[%c0_27, %c2_28] : memref<64x8xf32, #tpu.memory_space<vmem>>, vector<64x1xf32>
    %49 = vector.broadcast %48 : vector<64x1xf32> to vector<64x512xf32>
    %50 = arith.addf %47, %49 : vector<64x512xf32>
    %51 = arith.negf %50 : vector<64x512xf32>
    %52 = math.exp %51 : vector<64x512xf32>
    %cst_29 = arith.constant 1.000000e+00 : f32
    %53 = vector.broadcast %cst_29 : f32 to vector<64x512xf32>
    %54 = arith.addf %53, %52 : vector<64x512xf32>
    %55 = arith.divf %53, %54 : vector<64x512xf32>
    %56 = arith.mulf %50, %55 : vector<64x512xf32>
    %c3_30 = arith.constant 3 : index
    %c0_31 = arith.constant 0 : index
    %c0_32 = arith.constant 0 : index
    %57 = vector.load %arg4[%c3_30, %c0_31, %c0_32] : memref<4x64x64xf32, #tpu.memory_space<vmem>>, vector<1x8x64xf32>
    %58 = vector.shape_cast %57 : vector<1x8x64xf32> to vector<8x64xf32>
    %cst_33 = arith.constant dense<0.000000e+00> : vector<8x512xf32>
    %59 = tpu.matmul %58, %56, %cst_33 {dimension_numbers = #tpu.dot_dimension_numbers<[1], [0], [0], [1], [0, 0, 1, 1], [], []>} : vector<8x64xf32>, vector<64x512xf32>, vector<8x512xf32> -> vector<8x512xf32>
    %c0_34 = arith.constant 0 : index
    %c3_35 = arith.constant 3 : index
    %60 = vector.load %arg5[%c0_34, %c3_35] : memref<64x8xf32, #tpu.memory_space<vmem>>, vector<8x1xf32>
    %61 = vector.broadcast %60 : vector<8x1xf32> to vector<8x512xf32>
    %62 = arith.addf %59, %61 : vector<8x512xf32>
    %cst_36 = arith.constant 1.000000e+00 : f32
    %63 = vector.broadcast %cst_36 : f32 to vector<1x512xf32>
    %cst_37 = arith.constant 0.000000e+00 : f32
    %64 = vector.broadcast %cst_37 : f32 to vector<1x512xf32>
    %65 = arith.mulf %2, %2 : vector<1x512xf32>
    %66 = arith.mulf %3, %3 : vector<1x512xf32>
    %67 = arith.subf %65, %66 : vector<1x512xf32>
    %68 = arith.mulf %3, %2 : vector<1x512xf32>
    %69 = arith.mulf %2, %3 : vector<1x512xf32>
    %70 = arith.addf %68, %69 : vector<1x512xf32>
    %71 = arith.mulf %67, %2 : vector<1x512xf32>
    %72 = arith.mulf %70, %3 : vector<1x512xf32>
    %73 = arith.subf %71, %72 : vector<1x512xf32>
    %74 = arith.mulf %70, %2 : vector<1x512xf32>
    %75 = arith.mulf %67, %3 : vector<1x512xf32>
    %76 = arith.addf %74, %75 : vector<1x512xf32>
    %77 = arith.mulf %73, %2 : vector<1x512xf32>
    %78 = arith.mulf %76, %3 : vector<1x512xf32>
    %79 = arith.subf %77, %78 : vector<1x512xf32>
    %80 = arith.mulf %76, %2 : vector<1x512xf32>
    %81 = arith.mulf %73, %3 : vector<1x512xf32>
    %82 = arith.addf %80, %81 : vector<1x512xf32>
    %83 = arith.mulf %79, %2 : vector<1x512xf32>
    %84 = arith.mulf %82, %3 : vector<1x512xf32>
    %85 = arith.subf %83, %84 : vector<1x512xf32>
    %86 = arith.mulf %82, %2 : vector<1x512xf32>
    %87 = arith.mulf %79, %3 : vector<1x512xf32>
    %88 = arith.addf %86, %87 : vector<1x512xf32>
    %89 = tpu.concatenate %63, %2, %67, %73, %79, %85, %64, %64 in 0 : vector<1x512xf32>, vector<1x512xf32>, vector<1x512xf32>, vector<1x512xf32>, vector<1x512xf32>, vector<1x512xf32>, vector<1x512xf32>, vector<1x512xf32> -> vector<8x512xf32>
    %90 = tpu.concatenate %64, %3, %70, %76, %82, %88, %64, %64 in 0 : vector<1x512xf32>, vector<1x512xf32>, vector<1x512xf32>, vector<1x512xf32>, vector<1x512xf32>, vector<1x512xf32>, vector<1x512xf32>, vector<1x512xf32> -> vector<8x512xf32>
    %91 = arith.mulf %62, %89 : vector<8x512xf32>
    %92 = arith.mulf %62, %90 : vector<8x512xf32>
    %93 = tpu.concatenate %91, %92 in 0 : vector<8x512xf32>, vector<8x512xf32> -> vector<16x512xf32>
    %c0_38 = arith.constant 0 : index
    %c0_39 = arith.constant 0 : index
    %94 = vector.load %arg6[%c0_38, %c0_39] : memref<32x16xf32, #tpu.memory_space<vmem>>, vector<32x16xf32>
    %cst_40 = arith.constant dense<0.000000e+00> : vector<32x512xf32>
    %95 = tpu.matmul %94, %93, %cst_40 {dimension_numbers = #tpu.dot_dimension_numbers<[1], [0], [0], [1], [0, 0, 1, 1], [], []>} : vector<32x16xf32>, vector<16x512xf32>, vector<32x512xf32> -> vector<32x512xf32>
    %c0_41 = arith.constant 0 : index
    %c0_42 = arith.constant 0 : index
    %96 = vector.load %arg7[%c0_41, %c0_42] : memref<32x8xf32, #tpu.memory_space<vmem>>, vector<32x1xf32>
    %97 = vector.broadcast %96 : vector<32x1xf32> to vector<32x512xf32>
    %98 = arith.addf %95, %97 : vector<32x512xf32>
    %99 = vector.broadcast %4 : vector<1x512xf32> to vector<32x512xf32>
    %100 = arith.mulf %98, %99 : vector<32x512xf32>
    %c0_43 = arith.constant 0 : index
    %c0_44 = arith.constant 0 : index
    %c0_45 = arith.constant 0 : index
    %101 = vector.load %arg2[%c0_43, %c0_44, %c0_45] : memref<2x512x32xf32, #tpu.memory_space<vmem>>, vector<1x512x32xf32>
    %102 = vector.shape_cast %101 : vector<1x512x32xf32> to vector<512x32xf32>
    %cst_46 = arith.constant dense<0.000000e+00> : vector<32x32xf32>
    %103 = tpu.matmul %98, %102, %cst_46 {dimension_numbers = #tpu.dot_dimension_numbers<[1], [0], [0], [1], [0, 0, 1, 1], [], []>} : vector<32x512xf32>, vector<512x32xf32>, vector<32x32xf32> -> vector<32x32xf32>
    %c0_47 = arith.constant 0 : index
    %c0_48 = arith.constant 0 : index
    %c0_49 = arith.constant 0 : index
    %104 = vector.load %arg8[%c0_47, %c0_48, %c0_49] : memref<2x64x32xf32, #tpu.memory_space<vmem>>, vector<1x64x32xf32>
    %105 = vector.shape_cast %104 : vector<1x64x32xf32> to vector<64x32xf32>
    %cst_50 = arith.constant dense<0.000000e+00> : vector<64x32xf32>
    %106 = tpu.matmul %105, %103, %cst_50 {dimension_numbers = #tpu.dot_dimension_numbers<[1], [0], [0], [1], [0, 0, 1, 1], [], []>} : vector<64x32xf32>, vector<32x32xf32>, vector<64x32xf32> -> vector<64x32xf32>
    %c0_51 = arith.constant 0 : index
    %c0_52 = arith.constant 0 : index
    %c0_53 = arith.constant 0 : index
    %107 = vector.load %arg10[%c0_51, %c0_52, %c0_53] : memref<2x64x8xf32, #tpu.memory_space<vmem>>, vector<1x64x1xf32>
    %108 = vector.shape_cast %107 : vector<1x64x1xf32> to vector<64x1xf32>
    %109 = vector.broadcast %108 : vector<64x1xf32> to vector<64x32xf32>
    %110 = arith.addf %106, %109 : vector<64x32xf32>
    %111 = arith.negf %110 : vector<64x32xf32>
    %112 = math.exp %111 : vector<64x32xf32>
    %cst_54 = arith.constant 1.000000e+00 : f32
    %113 = vector.broadcast %cst_54 : f32 to vector<64x32xf32>
    %114 = arith.addf %113, %112 : vector<64x32xf32>
    %115 = arith.divf %113, %114 : vector<64x32xf32>
    %116 = arith.mulf %110, %115 : vector<64x32xf32>
    %117 = vector.extract_strided_slice %116 {offsets = [0, 0], sizes = [32, 32], strides = [1, 1]} : vector<64x32xf32> to vector<32x32xf32>
    %118 = vector.extract_strided_slice %116 {offsets = [32, 0], sizes = [32, 32], strides = [1, 1]} : vector<64x32xf32> to vector<32x32xf32>
    %c0_55 = arith.constant 0 : index
    %c0_56 = arith.constant 0 : index
    %119 = vector.load %arg3[%c0_55, %c0_56] : memref<32x512xf32, #tpu.memory_space<vmem>>, vector<32x512xf32>
    %cst_57 = arith.constant dense<0.000000e+00> : vector<32x512xf32>
    %120 = tpu.matmul %117, %119, %cst_57 {dimension_numbers = #tpu.dot_dimension_numbers<[1], [0], [0], [1], [0, 0, 1, 1], [], []>} : vector<32x32xf32>, vector<32x512xf32>, vector<32x512xf32> -> vector<32x512xf32>
    %121 = arith.mulf %100, %120 : vector<32x512xf32>
    %c1_58 = arith.constant 1 : index
    %c0_59 = arith.constant 0 : index
    %c0_60 = arith.constant 0 : index
    %122 = vector.load %arg2[%c1_58, %c0_59, %c0_60] : memref<2x512x32xf32, #tpu.memory_space<vmem>>, vector<1x512x32xf32>
    %123 = vector.shape_cast %122 : vector<1x512x32xf32> to vector<512x32xf32>
    %cst_61 = arith.constant dense<0.000000e+00> : vector<32x32xf32>
    %124 = tpu.matmul %121, %123, %cst_61 {dimension_numbers = #tpu.dot_dimension_numbers<[1], [0], [0], [1], [0, 0, 1, 1], [], []>} : vector<32x512xf32>, vector<512x32xf32>, vector<32x32xf32> -> vector<32x32xf32>
    %125 = tpu.concatenate %117, %124 in 0 : vector<32x32xf32>, vector<32x32xf32> -> vector<64x32xf32>
    %c0_62 = arith.constant 0 : index
    %c0_63 = arith.constant 0 : index
    %c0_64 = arith.constant 0 : index
    %126 = vector.load %arg9[%c0_62, %c0_63, %c0_64] : memref<2x32x64xf32, #tpu.memory_space<vmem>>, vector<1x32x64xf32>
    %127 = vector.shape_cast %126 : vector<1x32x64xf32> to vector<32x64xf32>
    %cst_65 = arith.constant dense<0.000000e+00> : vector<32x32xf32>
    %128 = tpu.matmul %127, %125, %cst_65 {dimension_numbers = #tpu.dot_dimension_numbers<[1], [0], [0], [1], [0, 0, 1, 1], [], []>} : vector<32x64xf32>, vector<64x32xf32>, vector<32x32xf32> -> vector<32x32xf32>
    %c0_66 = arith.constant 0 : index
    %c0_67 = arith.constant 0 : index
    %c1_68 = arith.constant 1 : index
    %129 = vector.load %arg10[%c0_66, %c0_67, %c1_68] : memref<2x64x8xf32, #tpu.memory_space<vmem>>, vector<1x32x1xf32>
    %130 = vector.shape_cast %129 : vector<1x32x1xf32> to vector<32x1xf32>
    %131 = vector.broadcast %130 : vector<32x1xf32> to vector<32x32xf32>
    %132 = arith.addf %128, %131 : vector<32x32xf32>
    %133 = arith.negf %132 : vector<32x32xf32>
    %134 = math.exp %133 : vector<32x32xf32>
    %cst_69 = arith.constant 1.000000e+00 : f32
    %135 = vector.broadcast %cst_69 : f32 to vector<32x32xf32>
    %136 = arith.addf %135, %134 : vector<32x32xf32>
    %137 = arith.divf %135, %136 : vector<32x32xf32>
    %138 = arith.mulf %132, %137 : vector<32x32xf32>
    %cst_70 = arith.constant dense<0.000000e+00> : vector<32xf32>
    %139 = vector.multi_reduction <add>, %138, %cst_70 [0] : vector<32x32xf32> to vector<32xf32>
    %140 = vector.shape_cast %139 : vector<32xf32> to vector<1x32xf32>
    %cst_71 = arith.constant 3.200000e+01 : f32
    %141 = vector.broadcast %cst_71 : f32 to vector<1x32xf32>
    %142 = arith.divf %140, %141 : vector<1x32xf32>
    %143 = vector.broadcast %142 : vector<1x32xf32> to vector<32x32xf32>
    %144 = arith.subf %138, %143 : vector<32x32xf32>
    %145 = arith.mulf %144, %144 : vector<32x32xf32>
    %cst_72 = arith.constant dense<0.000000e+00> : vector<32xf32>
    %146 = vector.multi_reduction <add>, %145, %cst_72 [0] : vector<32x32xf32> to vector<32xf32>
    %147 = vector.shape_cast %146 : vector<32xf32> to vector<1x32xf32>
    %cst_73 = arith.constant 3.200000e+01 : f32
    %148 = vector.broadcast %cst_73 : f32 to vector<1x32xf32>
    %149 = arith.divf %147, %148 : vector<1x32xf32>
    %150 = vector.broadcast %142 : vector<1x32xf32> to vector<32x32xf32>
    %151 = arith.subf %138, %150 : vector<32x32xf32>
    %cst_74 = arith.constant 9.99999974E-6 : f32
    %152 = vector.broadcast %cst_74 : f32 to vector<1x32xf32>
    %153 = arith.addf %149, %152 : vector<1x32xf32>
    %154 = math.rsqrt %153 : vector<1x32xf32>
    %155 = vector.broadcast %154 : vector<1x32xf32> to vector<32x32xf32>
    %156 = arith.mulf %151, %155 : vector<32x32xf32>
    %c0_75 = arith.constant 0 : index
    %c0_76 = arith.constant 0 : index
    %c2_77 = arith.constant 2 : index
    %157 = vector.load %arg10[%c0_75, %c0_76, %c2_77] : memref<2x64x8xf32, #tpu.memory_space<vmem>>, vector<1x32x1xf32>
    %158 = vector.shape_cast %157 : vector<1x32x1xf32> to vector<32x1xf32>
    %159 = vector.broadcast %158 : vector<32x1xf32> to vector<32x32xf32>
    %160 = arith.mulf %156, %159 : vector<32x32xf32>
    %c0_78 = arith.constant 0 : index
    %c0_79 = arith.constant 0 : index
    %c3_80 = arith.constant 3 : index
    %161 = vector.load %arg10[%c0_78, %c0_79, %c3_80] : memref<2x64x8xf32, #tpu.memory_space<vmem>>, vector<1x32x1xf32>
    %162 = vector.shape_cast %161 : vector<1x32x1xf32> to vector<32x1xf32>
    %163 = vector.broadcast %162 : vector<32x1xf32> to vector<32x32xf32>
    %164 = arith.addf %160, %163 : vector<32x32xf32>
    %165 = arith.addf %118, %164 : vector<32x32xf32>
    %166 = arith.negf %165 : vector<32x32xf32>
    %167 = math.exp %166 : vector<32x32xf32>
    %cst_81 = arith.constant 1.000000e+00 : f32
    %168 = vector.broadcast %cst_81 : f32 to vector<32x32xf32>
    %169 = arith.addf %168, %167 : vector<32x32xf32>
    %170 = arith.divf %168, %169 : vector<32x32xf32>
    %171 = arith.mulf %165, %170 : vector<32x32xf32>
    %c1_82 = arith.constant 1 : index
    %c0_83 = arith.constant 0 : index
    %c0_84 = arith.constant 0 : index
    %172 = vector.load %arg8[%c1_82, %c0_83, %c0_84] : memref<2x64x32xf32, #tpu.memory_space<vmem>>, vector<1x64x32xf32>
    %173 = vector.shape_cast %172 : vector<1x64x32xf32> to vector<64x32xf32>
    %cst_85 = arith.constant dense<0.000000e+00> : vector<64x32xf32>
    %174 = tpu.matmul %173, %171, %cst_85 {dimension_numbers = #tpu.dot_dimension_numbers<[1], [0], [0], [1], [0, 0, 1, 1], [], []>} : vector<64x32xf32>, vector<32x32xf32>, vector<64x32xf32> -> vector<64x32xf32>
    %c1_86 = arith.constant 1 : index
    %c0_87 = arith.constant 0 : index
    %c0_88 = arith.constant 0 : index
    %175 = vector.load %arg10[%c1_86, %c0_87, %c0_88] : memref<2x64x8xf32, #tpu.memory_space<vmem>>, vector<1x64x1xf32>
    %176 = vector.shape_cast %175 : vector<1x64x1xf32> to vector<64x1xf32>
    %177 = vector.broadcast %176 : vector<64x1xf32> to vector<64x32xf32>
    %178 = arith.addf %174, %177 : vector<64x32xf32>
    %179 = arith.negf %178 : vector<64x32xf32>
    %180 = math.exp %179 : vector<64x32xf32>
    %cst_89 = arith.constant 1.000000e+00 : f32
    %181 = vector.broadcast %cst_89 : f32 to vector<64x32xf32>
    %182 = arith.addf %181, %180 : vector<64x32xf32>
    %183 = arith.divf %181, %182 : vector<64x32xf32>
    %184 = arith.mulf %178, %183 : vector<64x32xf32>
    %185 = vector.extract_strided_slice %184 {offsets = [0, 0], sizes = [32, 32], strides = [1, 1]} : vector<64x32xf32> to vector<32x32xf32>
    %186 = vector.extract_strided_slice %184 {offsets = [32, 0], sizes = [32, 32], strides = [1, 1]} : vector<64x32xf32> to vector<32x32xf32>
    %c0_90 = arith.constant 0 : index
    %c0_91 = arith.constant 0 : index
    %187 = vector.load %arg3[%c0_90, %c0_91] : memref<32x512xf32, #tpu.memory_space<vmem>>, vector<32x512xf32>
    %cst_92 = arith.constant dense<0.000000e+00> : vector<32x512xf32>
    %188 = tpu.matmul %185, %187, %cst_92 {dimension_numbers = #tpu.dot_dimension_numbers<[1], [0], [0], [1], [0, 0, 1, 1], [], []>} : vector<32x32xf32>, vector<32x512xf32>, vector<32x512xf32> -> vector<32x512xf32>
    %189 = arith.mulf %100, %188 : vector<32x512xf32>
    %c1_93 = arith.constant 1 : index
    %c0_94 = arith.constant 0 : index
    %c0_95 = arith.constant 0 : index
    %190 = vector.load %arg2[%c1_93, %c0_94, %c0_95] : memref<2x512x32xf32, #tpu.memory_space<vmem>>, vector<1x512x32xf32>
    %191 = vector.shape_cast %190 : vector<1x512x32xf32> to vector<512x32xf32>
    %cst_96 = arith.constant dense<0.000000e+00> : vector<32x32xf32>
    %192 = tpu.matmul %189, %191, %cst_96 {dimension_numbers = #tpu.dot_dimension_numbers<[1], [0], [0], [1], [0, 0, 1, 1], [], []>} : vector<32x512xf32>, vector<512x32xf32>, vector<32x32xf32> -> vector<32x32xf32>
    %193 = tpu.concatenate %185, %192 in 0 : vector<32x32xf32>, vector<32x32xf32> -> vector<64x32xf32>
    %c1_97 = arith.constant 1 : index
    %c0_98 = arith.constant 0 : index
    %c0_99 = arith.constant 0 : index
    %194 = vector.load %arg9[%c1_97, %c0_98, %c0_99] : memref<2x32x64xf32, #tpu.memory_space<vmem>>, vector<1x32x64xf32>
    %195 = vector.shape_cast %194 : vector<1x32x64xf32> to vector<32x64xf32>
    %cst_100 = arith.constant dense<0.000000e+00> : vector<32x32xf32>
    %196 = tpu.matmul %195, %193, %cst_100 {dimension_numbers = #tpu.dot_dimension_numbers<[1], [0], [0], [1], [0, 0, 1, 1], [], []>} : vector<32x64xf32>, vector<64x32xf32>, vector<32x32xf32> -> vector<32x32xf32>
    %c1_101 = arith.constant 1 : index
    %c0_102 = arith.constant 0 : index
    %c1_103 = arith.constant 1 : index
    %197 = vector.load %arg10[%c1_101, %c0_102, %c1_103] : memref<2x64x8xf32, #tpu.memory_space<vmem>>, vector<1x32x1xf32>
    %198 = vector.shape_cast %197 : vector<1x32x1xf32> to vector<32x1xf32>
    %199 = vector.broadcast %198 : vector<32x1xf32> to vector<32x32xf32>
    %200 = arith.addf %196, %199 : vector<32x32xf32>
    %201 = arith.negf %200 : vector<32x32xf32>
    %202 = math.exp %201 : vector<32x32xf32>
    %cst_104 = arith.constant 1.000000e+00 : f32
    %203 = vector.broadcast %cst_104 : f32 to vector<32x32xf32>
    %204 = arith.addf %203, %202 : vector<32x32xf32>
    %205 = arith.divf %203, %204 : vector<32x32xf32>
    %206 = arith.mulf %200, %205 : vector<32x32xf32>
    %cst_105 = arith.constant dense<0.000000e+00> : vector<32xf32>
    %207 = vector.multi_reduction <add>, %206, %cst_105 [0] : vector<32x32xf32> to vector<32xf32>
    %208 = vector.shape_cast %207 : vector<32xf32> to vector<1x32xf32>
    %cst_106 = arith.constant 3.200000e+01 : f32
    %209 = vector.broadcast %cst_106 : f32 to vector<1x32xf32>
    %210 = arith.divf %208, %209 : vector<1x32xf32>
    %211 = vector.broadcast %210 : vector<1x32xf32> to vector<32x32xf32>
    %212 = arith.subf %206, %211 : vector<32x32xf32>
    %213 = arith.mulf %212, %212 : vector<32x32xf32>
    %cst_107 = arith.constant dense<0.000000e+00> : vector<32xf32>
    %214 = vector.multi_reduction <add>, %213, %cst_107 [0] : vector<32x32xf32> to vector<32xf32>
    %215 = vector.shape_cast %214 : vector<32xf32> to vector<1x32xf32>
    %cst_108 = arith.constant 3.200000e+01 : f32
    %216 = vector.broadcast %cst_108 : f32 to vector<1x32xf32>
    %217 = arith.divf %215, %216 : vector<1x32xf32>
    %218 = vector.broadcast %210 : vector<1x32xf32> to vector<32x32xf32>
    %219 = arith.subf %206, %218 : vector<32x32xf32>
    %cst_109 = arith.constant 9.99999974E-6 : f32
    %220 = vector.broadcast %cst_109 : f32 to vector<1x32xf32>
    %221 = arith.addf %217, %220 : vector<1x32xf32>
    %222 = math.rsqrt %221 : vector<1x32xf32>
    %223 = vector.broadcast %222 : vector<1x32xf32> to vector<32x32xf32>
    %224 = arith.mulf %219, %223 : vector<32x32xf32>
    %c1_110 = arith.constant 1 : index
    %c0_111 = arith.constant 0 : index
    %c2_112 = arith.constant 2 : index
    %225 = vector.load %arg10[%c1_110, %c0_111, %c2_112] : memref<2x64x8xf32, #tpu.memory_space<vmem>>, vector<1x32x1xf32>
    %226 = vector.shape_cast %225 : vector<1x32x1xf32> to vector<32x1xf32>
    %227 = vector.broadcast %226 : vector<32x1xf32> to vector<32x32xf32>
    %228 = arith.mulf %224, %227 : vector<32x32xf32>
    %c1_113 = arith.constant 1 : index
    %c0_114 = arith.constant 0 : index
    %c3_115 = arith.constant 3 : index
    %229 = vector.load %arg10[%c1_113, %c0_114, %c3_115] : memref<2x64x8xf32, #tpu.memory_space<vmem>>, vector<1x32x1xf32>
    %230 = vector.shape_cast %229 : vector<1x32x1xf32> to vector<32x1xf32>
    %231 = vector.broadcast %230 : vector<32x1xf32> to vector<32x32xf32>
    %232 = arith.addf %228, %231 : vector<32x32xf32>
    %233 = arith.addf %186, %232 : vector<32x32xf32>
    %234 = arith.negf %233 : vector<32x32xf32>
    %235 = math.exp %234 : vector<32x32xf32>
    %cst_116 = arith.constant 1.000000e+00 : f32
    %236 = vector.broadcast %cst_116 : f32 to vector<32x32xf32>
    %237 = arith.addf %236, %235 : vector<32x32xf32>
    %238 = arith.divf %236, %237 : vector<32x32xf32>
    %239 = arith.mulf %233, %238 : vector<32x32xf32>
    %c0_117 = arith.constant 0 : index
    %c0_118 = arith.constant 0 : index
    %240 = vector.load %arg11[%c0_117, %c0_118] : memref<32x32xf32, #tpu.memory_space<vmem>>, vector<32x32xf32>
    %cst_119 = arith.constant dense<0.000000e+00> : vector<32x32xf32>
    %241 = tpu.matmul %240, %239, %cst_119 {dimension_numbers = #tpu.dot_dimension_numbers<[1], [0], [0], [1], [0, 0, 1, 1], [], []>} : vector<32x32xf32>, vector<32x32xf32>, vector<32x32xf32> -> vector<32x32xf32>
    %c0_120 = arith.constant 0 : index
    %c1_121 = arith.constant 1 : index
    %242 = vector.load %arg7[%c0_120, %c1_121] : memref<32x8xf32, #tpu.memory_space<vmem>>, vector<32x1xf32>
    %243 = vector.broadcast %242 : vector<32x1xf32> to vector<32x32xf32>
    %244 = arith.addf %241, %243 : vector<32x32xf32>
    %245 = arith.negf %244 : vector<32x32xf32>
    %246 = math.exp %245 : vector<32x32xf32>
    %cst_122 = arith.constant 1.000000e+00 : f32
    %247 = vector.broadcast %cst_122 : f32 to vector<32x32xf32>
    %248 = arith.addf %247, %246 : vector<32x32xf32>
    %249 = arith.divf %247, %248 : vector<32x32xf32>
    %250 = arith.mulf %244, %249 : vector<32x32xf32>
    %c0_123 = arith.constant 0 : index
    %c0_124 = arith.constant 0 : index
    %251 = vector.load %arg12[%c0_123, %c0_124] : memref<32x32xf32, #tpu.memory_space<vmem>>, vector<32x32xf32>
    tpu.vector_store %arg12[%c0_123, %c0_124], %250 {strides = array<i32>} : memref<32x32xf32, #tpu.memory_space<vmem>>, vector<32x32xf32>,
    return
  }
}

</mosaic_0001>

<llo_original>
// kernel: tpu_custom_call.1
$region0: #{tpu_custom_call.1}
  #allocation0 [shape = 'u32[]', space=smem, size = 0x4, offset = 0x4, fixed_abs, tag = 'smem constant byte address 0x4 - core index']
  #allocation1 [shape = 'u32[72,128]{1,0:T(1,128)}', space=vmem, size = 0x9000, scoped, tag = 'internal scratch']
  #allocation2 [shape = 'f32[1,1]{1,0:T(1,128)S(6)}', space=smem, size = 0x200, scoped, tag = 'scoped memory for tpu_custom_call.1']
  %s0 = inlined_call_operand.<no memory space> [shape: f32[1,1], index: 0, kind: input, shape index: {}]
  %s1 = inlined_call_operand.vmem [shape: f32[8,512], index: 1, kind: input, shape index: {}]
  %s2 = inlined_call_operand.vmem [shape: f32[2,512,32], index: 2, kind: input, shape index: {}]
  %s3 = inlined_call_operand.vmem [shape: f32[32,512], index: 3, kind: input, shape index: {}]
  %s4 = inlined_call_operand.vmem [shape: f32[4,64,64], index: 4, kind: input, shape index: {}]
  %s5 = inlined_call_operand.vmem [shape: f32[64,8], index: 5, kind: input, shape index: {}]
  %s6 = inlined_call_operand.vmem [shape: f32[32,16], index: 6, kind: input, shape index: {}]
  %s7 = inlined_call_operand.vmem [shape: f32[32,8], index: 7, kind: input, shape index: {}]
  %s8 = inlined_call_operand.vmem [shape: f32[2,64,32], index: 8, kind: input, shape index: {}]
  %s9 = inlined_call_operand.vmem [shape: f32[2,32,64], index: 9, kind: input, shape index: {}]
  %s10 = inlined_call_operand.vmem [shape: f32[2,64,8], index: 10, kind: input, shape index: {}]
  %s11 = inlined_call_operand.vmem [shape: f32[32,32], index: 11, kind: input, shape index: {}]
  %s12 = inlined_call_operand.hbm [shape: f32[32,32], index: 12, kind: output, shape index: {}]
  %s13 = sld [smem:[#allocation0]]
  $region58: #{tpu_custom_call.1} parent=0
    _
  %s15 = ssub.s32 1, %s13
  %s16 = scalar_select 0, %s15, %s13
  %17 = sst [smem:[#allocation2]] %s0
  $region1: #{tpu_custom_call.1} parent=0
    #allocation3 [shape = 'u8[16384]{0}', space=vmem, size = 0x4000, scoped, tag = 'output window, operand 0, single buffered']
    #allocation4 [shape = 's32[1]{0}', space=sflag, size = 0x4, scoped, tag = 'scoped memory for tpu_custom_call.1']
    %18 = vsyncpa [#allocation4], 0
    // Predicated region
    $region2: #{tpu_custom_call.1} parent=1 // pred_check
      _
    $region3: #{tpu_custom_call.1} parent=1 // pred_check_branch
      %20 = sbr.rel (0) target = $region5
    $region4: #{tpu_custom_call.1} parent=1 // pred_region
      _
    $region5: #{tpu_custom_call.1} parent=1 // pred_fallthru
      _
    // Predicated region
    $region6: #{tpu_custom_call.1} parent=1 // pred_check
      _
    $region7: #{tpu_custom_call.1} parent=1 // pred_check_branch
      %22 = sbr.rel (0) target = $region9
    $region8: #{tpu_custom_call.1} parent=1 // pred_region
      _
    $region9: #{tpu_custom_call.1} parent=1 // pred_fallthru
      _
    // Predicated region
    $region10: #{tpu_custom_call.1} parent=1 // pred_check
      _
    $region11: #{tpu_custom_call.1} parent=1 // pred_check_branch
      %24 = sbr.rel (0) target = $region13
    $region12: #{tpu_custom_call.1} parent=1 // pred_region
      _
    $region13: #{tpu_custom_call.1} parent=1 // pred_fallthru
      _
    // Predicated region
    $region14: #{tpu_custom_call.1} parent=1 // pred_check
      _
    $region15: #{tpu_custom_call.1} parent=1 // pred_check_branch
      %26 = sbr.rel (0) target = $region17
    $region16: #{tpu_custom_call.1} parent=1 // pred_region
      _
    $region17: #{tpu_custom_call.1} parent=1 // pred_fallthru
      _
    // Predicated region
    $region18: #{tpu_custom_call.1} parent=1 // pred_check
      _
    $region19: #{tpu_custom_call.1} parent=1 // pred_check_branch
      %28 = sbr.rel (0) target = $region21
    $region20: #{tpu_custom_call.1} parent=1 // pred_region
      _
    $region21: #{tpu_custom_call.1} parent=1 // pred_fallthru
      _
    // Predicated region
    $region22: #{tpu_custom_call.1} parent=1 // pred_check
      _
    $region23: #{tpu_custom_call.1} parent=1 // pred_check_branch
      %30 = sbr.rel (0) target = $region25
    $region24: #{tpu_custom_call.1} parent=1 // pred_region
      _
    $region25: #{tpu_custom_call.1} parent=1 // pred_fallthru
      _
    // Predicated region
    $region26: #{tpu_custom_call.1} parent=1 // pred_check
      _
    $region27: #{tpu_custom_call.1} parent=1 // pred_check_branch
      %32 = sbr.rel (0) target = $region29
    $region28: #{tpu_custom_call.1} parent=1 // pred_region
      _
    $region29: #{tpu_custom_call.1} parent=1 // pred_fallthru
      _
    // Predicated region
    $region30: #{tpu_custom_call.1} parent=1 // pred_check
      _
    $region31: #{tpu_custom_call.1} parent=1 // pred_check_branch
      %34 = sbr.rel (0) target = $region33
    $region32: #{tpu_custom_call.1} parent=1 // pred_region
      _
    $region33: #{tpu_custom_call.1} parent=1 // pred_fallthru
      _
    // Predicated region
    $region34: #{tpu_custom_call.1} parent=1 // pred_check
      _
    $region35: #{tpu_custom_call.1} parent=1 // pred_check_branch
      %36 = sbr.rel (0) target = $region37
    $region36: #{tpu_custom_call.1} parent=1 // pred_region
      _
    $region37: #{tpu_custom_call.1} parent=1 // pred_fallthru
      _
    // Predicated region
    $region38: #{tpu_custom_call.1} parent=1 // pred_check
      _
    $region39: #{tpu_custom_call.1} parent=1 // pred_check_branch
      %38 = sbr.rel (0) target = $region41
    $region40: #{tpu_custom_call.1} parent=1 // pred_region
      _
    $region41: #{tpu_custom_call.1} parent=1 // pred_fallthru
      _
    // Predicated region
    $region42: #{tpu_custom_call.1} parent=1 // pred_check
      _
    $region43: #{tpu_custom_call.1} parent=1 // pred_check_branch
      %40 = sbr.rel (0) target = $region45
    $region44: #{tpu_custom_call.1} parent=1 // pred_region
      _
    $region45: #{tpu_custom_call.1} parent=1 // pred_fallthru
      _
    // Predicated region
    $region46: #{tpu_custom_call.1} parent=1 // pred_check
      _
    $region47: #{tpu_custom_call.1} parent=1 // pred_check_branch
      %42 = sbr.rel (0) target = $region49
    $region48: #{tpu_custom_call.1} parent=1 // pred_region
      _
    $region49: #{tpu_custom_call.1} parent=1 // pred_fallthru
      _
    %s43 = sld [smem:[#allocation2]]
    %v44 = vld [vmem:[%s1] ss:$8 sm:$0xf]
    %s45 = scalar_lea.vmem %s1, 1
    %v46 = vld [vmem:[%s45] ss:$8 sm:$0xf]
    %s47 = scalar_lea.vmem %s1, 2
    %v48 = vld [vmem:[%s47] ss:$8 sm:$0xf]
    %s49 = scalar_lea.vmem %s1, 3
    %v50 = vld [vmem:[%s49] ss:$8 sm:$0xf]
    %v51 = vld [vmem:[%s5] sm:$0xff]
    %v52 = vstv %s43
    %v53 = vrcp.pop %v52
    %v54 = vmul.f32 %v52, %v53
    %v55 = vsub.f32 1.0, %v54
    %v56 = vmul.f32 %v53, %v55
    %v57 = vadd.f32 %v53, %v56
    %vm58 = vweird.f32 %v52
    %vm59 = vweird.f32 %v53
    %vm60 = vmor %vm58, %vm59
    %v61 = vsel %vm60, %v53, %v57
    %v62 = vand.u32 2147483647, %v52
    %vm63 = vcmp.eq.f32.partialorder %v62, 8.507059e+37
    %v64 = vand.u32 %v52, 2147483648
    %v65 = vor.u32 1.1754944e-38, %v64
    %v66 = vsel %vm63, %v65, %v61
    %s67 = vtos %v66
    %s68 = smul.f32 3.1415927, %s67
    %v69 = vstv %s68
    %v70 = vmul.f32 %v69, %v44
    %72 = vset.pattern.permute.xlu0 4
    %73 = vperm.xlu0 %72, %v51
    %v74 = vpop.permute.xlu0 %73
    %v77 = vperm.slane %v70, 0
    %v78 = vperm.slane %v70, 1
    %v79 = vperm.slane %v70, 2
    %v80 = vperm.slane %v70, 3
    %v85 = vmul.f32 %v74, %v77
    %v86 = vmul.f32 %v74, %v78
    %v87 = vmul.f32 %v74, %v79
    %v88 = vmul.f32 %v74, %v80
    %v89 = vand.u32 2147483647, %v85
    %vm90 = vcmp.le.f32.partialorder %v89, 0.7853982
    %vm91 = vcmp.lt.s32.totalorder %v85, 0
    %v92 = vand.u32 %v85, 2139095040
    %v93 = vshrl.u32 %v92, 23
    %v94 = vsub.s32 %v93, 127
    %v95 = vand.u32 2147483647, %v85
    %v96 = vand.u32 %v95, 8388607
    %v97 = vor.u32 %v96, 8388608
    %v98 = vsub.s32 0, %v97
    %v99 = vadd.s32 %v94, 1
    %vm100 = vcmp.gt.s32.totalorder %v99, 0
    %v101 = vsel %vm100, %v99, 0
    %v102 = vshrl.u32 %v101, 5
    %v103 = vand.u32 %v101, 31
    %v104 = vsub.s32 32, %v103
    %v105 = vshrl.u32 683565275, %v104
    %v106 = vshll.u32 683565275, %v103
    %v107 = vshrl.u32 2475754826, %v104
    %v108 = vor.u32 %v106, %v107
    %v109 = vshll.u32 2475754826, %v103
    %v110 = vshrl.u32 2131351028, %v104
    %v111 = vor.u32 %v109, %v110
    %v112 = vshll.u32 2131351028, %v103
    %v113 = vshrl.u32 2102212464, %v104
    %v114 = vor.u32 %v112, %v113
    %v115 = vshll.u32 2102212464, %v103
    %v116 = vshrl.u32 920167782, %v104
    %v117 = vor.u32 %v115, %v116
    %v118 = vshll.u32 920167782, %v103
    %v119 = vshrl.u32 1326507024, %v104
    %v120 = vor.u32 %v118, %v119
    %vm121 = vcmp.lt.s32.totalorder %v102, 1
    %vm122 = vcmp.lt.s32.totalorder %v102, 2
    %vm123 = vcmp.lt.s32.totalorder %v102, 3
    %vm124 = vcmp.lt.s32.totalorder %v102, 4
    %v125 = vsel %vm121, %v105, %v108
    %v126 = vsel %vm124, %v114, 2102212464
    %v127 = vsel %vm123, %v111, %v126
    %v128 = vsel %vm122, %v125, %v127
    %v129 = vsel %vm121, %v108, %v111
    %v130 = vsel %vm124, %v117, 920167782
    %v131 = vsel %vm123, %v114, %v130
    %v132 = vsel %vm122, %v129, %v131
    %v133 = vsel %vm121, %v111, %v114
    %v134 = vsel %vm124, %v120, 1326507024
    %v135 = vsel %vm123, %v117, %v134
    %v136 = vsel %vm122, %v133, %v135
    %v137 = vshll.u32 %v97, 8
    %v138 = vand.u32 %v137, 65535
    %v139 = vshrl.u32 %v137, 16
    %v140 = vand.u32 %v136, 65535
    %v141 = vshrl.u32 %v136, 16
    %v142 = vmul.u32 %v138, %v140
    %v143 = vmul.u32 %v138, %v141
    %v144 = vmul.u32 %v139, %v140
    %v145 = vmul.u32 %v139, %v141
    %v146 = vshll.u32 %v143, 16
    %v147 = vshrl.u32 %v143, 16
    %v148 = vshll.u32 %v144, 16
    %v149 = vshrl.u32 %v144, 16
    %vm150 = vc.u32 %v142, %v146
    %v151 = vsel %vm150, 1, 0
    %v152 = vadd.s32 %v142, %v146
    %v153 = vadd.s32 %v145, %v151
    %vm154 = vc.u32 %v152, %v148
    %v155 = vsel %vm154, 1, 0
    %v156 = vadd.s32 %v152, %v148
    %v157 = vadd.s32 %v153, %v155
    %v158 = vadd.s32 %v157, %v147
    %v159 = vadd.s32 %v158, %v149
    %v160 = vand.u32 %v137, 65535
    %v161 = vshrl.u32 %v137, 16
    %v162 = vand.u32 %v132, 65535
    %v163 = vshrl.u32 %v132, 16
    %v164 = vmul.u32 %v160, %v162
    %v165 = vmul.u32 %v160, %v163
    %v166 = vmul.u32 %v161, %v162
    %v167 = vmul.u32 %v161, %v163
    %v168 = vshll.u32 %v165, 16
    %v169 = vshrl.u32 %v165, 16
    %v170 = vshll.u32 %v166, 16
    %v171 = vshrl.u32 %v166, 16
    %vm172 = vc.u32 %v164, %v168
    %v173 = vsel %vm172, 1, 0
    %v174 = vadd.s32 %v164, %v168
    %v175 = vadd.s32 %v167, %v173
    %vm176 = vc.u32 %v174, %v170
    %v177 = vsel %vm176, 1, 0
    %v178 = vadd.s32 %v174, %v170
    %v179 = vadd.s32 %v175, %v177
    %v180 = vadd.s32 %v179, %v169
    %v181 = vadd.s32 %v180, %v171
    %v182 = vmul.u32 %v137, %v128
    %v183 = vadd.s32 %v159, %v178
    %vm184 = vc.u32 %v159, %v178
    %v185 = vadd.s32 %v181, 1
    %v186 = vsel %vm184, %v185, %v181
    %v187 = vadd.s32 %v182, %v186
    %v188 = vadd.s32 %v187, 536870912
    %v189 = vshrl.u32 %v188, 30
    %v190 = vshll.u32 %v189, 30
    %v191 = vsub.s32 %v187, %v190
    %vm192 = vcmp.lt.s32.totalorder %v191, 0
    %v193 = vsub.s32 0, %v191
    %v194 = vsel %vm192, %v193, %v191
    %v195 = vclz %v194
    %v196 = vsub.s32 %v195, 2
    %vm197 = vcmp.gt.s32.totalorder 0, %v196
    %v198 = vsel %vm197, 0, %v196
    %v199 = vsub.s32 32, %v198
    %v200 = vshll.u32 %v191, %v198
    %v201 = vshrl.u32 %v183, %v199
    %v202 = vor.u32 %v200, %v201
    %v203 = vsub.s32 4294967266, %v198
    %v204 = vadd.s32 %v203, 127
    %v205 = vshll.u32 %v204, 23
    %v206 = vor.u32 4788187, %v205
    %v207 = vand.u32 2147483647, %v206
    %v209 = vcvt.s32.f32 %v202
    %v210 = vmul.f32 %v209, %v207
    %v211 = vxor.u32 %v210, 2147483648
    %v212 = vsel %vm91, %v211, %v210
    %v213 = vsub.s32 4, %v189
    %v214 = vsel %vm91, %v213, %v189
    %v215 = vsel %vm90, %v85, %v212
    %v216 = vsel %vm90, 0, %v214
    %v217 = vmul.f32 %v215, %v215
    %v218 = vmul.f32 %v217, -0.001358992
    %v219 = vadd.f32 %v218, 0.041655596
    %v220 = vmul.f32 %v217, %v219
    %v221 = vadd.f32 %v220, -0.4999988
    %v222 = vmul.f32 %v217, %v221
    %v223 = vadd.f32 1.0, %v222
    %v224 = vmul.f32 %v215, %v215
    %v225 = vmul.f32 %v224, -0.00019511016
    %v226 = vadd.f32 %v225, 0.008332121
    %v227 = vmul.f32 %v224, %v226
    %v228 = vadd.f32 %v227, -0.16666654
    %v229 = vmul.f32 %v224, %v228
    %v230 = vadd.f32 %v229, 1.0
    %v231 = vmul.f32 %v230, %v215
    %vm232 = vweird.f32 %v85
    %v233 = vadd.s32 %v216, 3
    %v234 = vand.u32 %v233, 3
    %vm235 = vcmp.lt.s32.totalorder %v234, 2
    %vm236 = vcmp.eq.s32.totalorder %v234, 0
    %v237 = vxor.u32 %v231, 2147483648
    %v238 = vsel %vm236, %v223, %v237
    %vm239 = vcmp.eq.s32.totalorder %v234, 2
    %v240 = vxor.u32 %v223, 2147483648
    %v241 = vsel %vm239, %v240, %v231
    %v242 = vsel %vm235, %v238, %v241
    %v243 = vsel %vm232, nan, %v242
    %v244 = vand.u32 2147483647, %v86
    %vm245 = vcmp.le.f32.partialorder %v244, 0.7853982
    %vm246 = vcmp.lt.s32.totalorder %v86, 0
    %v247 = vand.u32 %v86, 2139095040
    %v248 = vshrl.u32 %v247, 23
    %v249 = vsub.s32 %v248, 127
    %v250 = vand.u32 2147483647, %v86
    %v251 = vand.u32 %v250, 8388607
    %v252 = vor.u32 %v251, 8388608
    %v253 = vsub.s32 0, %v252
    %v254 = vadd.s32 %v249, 1
    %vm255 = vcmp.gt.s32.totalorder %v254, 0
    %v256 = vsel %vm255, %v254, 0
    %v257 = vshrl.u32 %v256, 5
    %v258 = vand.u32 %v256, 31
    %v259 = vsub.s32 32, %v258
    %v260 = vshrl.u32 683565275, %v259
    %v261 = vshll.u32 683565275, %v258
    %v262 = vshrl.u32 2475754826, %v259
    %v263 = vor.u32 %v261, %v262
    %v264 = vshll.u32 2475754826, %v258
    %v265 = vshrl.u32 2131351028, %v259
    %v266 = vor.u32 %v264, %v265
    %v267 = vshll.u32 2131351028, %v258
    %v268 = vshrl.u32 2102212464, %v259
    %v269 = vor.u32 %v267, %v268
    %v270 = vshll.u32 2102212464, %v258
    %v271 = vshrl.u32 920167782, %v259
    %v272 = vor.u32 %v270, %v271
    %v273 = vshll.u32 920167782, %v258
    %v274 = vshrl.u32 1326507024, %v259
    %v275 = vor.u32 %v273, %v274
    %vm276 = vcmp.lt.s32.totalorder %v257, 1
    %vm277 = vcmp.lt.s32.totalorder %v257, 2
    %vm278 = vcmp.lt.s32.totalorder %v257, 3
    %vm279 = vcmp.lt.s32.totalorder %v257, 4
    %v280 = vsel %vm276, %v260, %v263
    %v281 = vsel %vm279, %v269, 2102212464
    %v282 = vsel %vm278, %v266, %v281
    %v283 = vsel %vm277, %v280, %v282
    %v284 = vsel %vm276, %v263, %v266
    %v285 = vsel %vm279, %v272, 920167782
    %v286 = vsel %vm278, %v269, %v285
    %v287 = vsel %vm277, %v284, %v286
    %v288 = vsel %vm276, %v266, %v269
    %v289 = vsel %vm279, %v275, 1326507024
    %v290 = vsel %vm278, %v272, %v289
    %v291 = vsel %vm277, %v288, %v290
    %v292 = vshll.u32 %v252, 8
    %v293 = vand.u32 %v292, 65535
    %v294 = vshrl.u32 %v292, 16
    %v295 = vand.u32 %v291, 65535
    %v296 = vshrl.u32 %v291, 16
    %v297 = vmul.u32 %v293, %v295
    %v298 = vmul.u32 %v293, %v296
    %v299 = vmul.u32 %v294, %v295
    %v300 = vmul.u32 %v294, %v296
    %v301 = vshll.u32 %v298, 16
    %v302 = vshrl.u32 %v298, 16
    %v303 = vshll.u32 %v299, 16
    %v304 = vshrl.u32 %v299, 16
    %vm305 = vc.u32 %v297, %v301
    %v306 = vsel %vm305, 1, 0
    %v307 = vadd.s32 %v297, %v301
    %v308 = vadd.s32 %v300, %v306
    %vm309 = vc.u32 %v307, %v303
    %v310 = vsel %vm309, 1, 0
    %v311 = vadd.s32 %v307, %v303
    %v312 = vadd.s32 %v308, %v310
    %v313 = vadd.s32 %v312, %v302
    %v314 = vadd.s32 %v313, %v304
    %v315 = vand.u32 %v292, 65535
    %v316 = vshrl.u32 %v292, 16
    %v317 = vand.u32 %v287, 65535
    %v318 = vshrl.u32 %v287, 16
    %v319 = vmul.u32 %v315, %v317
    %v320 = vmul.u32 %v315, %v318
    %v321 = vmul.u32 %v316, %v317
    %v322 = vmul.u32 %v316, %v318
    %v323 = vshll.u32 %v320, 16
    %v324 = vshrl.u32 %v320, 16
    %v325 = vshll.u32 %v321, 16
    %v326 = vshrl.u32 %v321, 16
    %vm327 = vc.u32 %v319, %v323
    %v328 = vsel %vm327, 1, 0
    %v329 = vadd.s32 %v319, %v323
    %v330 = vadd.s32 %v322, %v328
    %vm331 = vc.u32 %v329, %v325
    %v332 = vsel %vm331, 1, 0
    %v333 = vadd.s32 %v329, %v325
    %v334 = vadd.s32 %v330, %v332
    %v335 = vadd.s32 %v334, %v324
    %v336 = vadd.s32 %v335, %v326
    %v337 = vmul.u32 %v292, %v283
    %v338 = vadd.s32 %v314, %v333
    %vm339 = vc.u32 %v314, %v333
    %v340 = vadd.s32 %v336, 1
    %v341 = vsel %vm339, %v340, %v336
    %v342 = vadd.s32 %v337, %v341
    %v343 = vadd.s32 %v342, 536870912
    %v344 = vshrl.u32 %v343, 30
    %v345 = vshll.u32 %v344, 30
    %v346 = vsub.s32 %v342, %v345
    %vm347 = vcmp.lt.s32.totalorder %v346, 0
    %v348 = vsub.s32 0, %v346
    %v349 = vsel %vm347, %v348, %v346
    %v350 = vclz %v349
    %v351 = vsub.s32 %v350, 2
    %vm352 = vcmp.gt.s32.totalorder 0, %v351
    %v353 = vsel %vm352, 0, %v351
    %v354 = vsub.s32 32, %v353
    %v355 = vshll.u32 %v346, %v353
    %v356 = vshrl.u32 %v338, %v354
    %v357 = vor.u32 %v355, %v356
    %v358 = vsub.s32 4294967266, %v353
    %v359 = vadd.s32 %v358, 127
    %v360 = vshll.u32 %v359, 23
    %v361 = vor.u32 4788187, %v360
    %v362 = vand.u32 2147483647, %v361
    %v364 = vcvt.s32.f32 %v357
    %v365 = vmul.f32 %v364, %v362
    %v366 = vxor.u32 %v365, 2147483648
    %v367 = vsel %vm246, %v366, %v365
    %v368 = vsub.s32 4, %v344
    %v369 = vsel %vm246, %v368, %v344
    %v370 = vsel %vm245, %v86, %v367
    %v371 = vsel %vm245, 0, %v369
    %v372 = vmul.f32 %v370, %v370
    %v373 = vmul.f32 %v372, -0.001358992
    %v374 = vadd.f32 %v373, 0.041655596
    %v375 = vmul.f32 %v372, %v374
    %v376 = vadd.f32 %v375, -0.4999988
    %v377 = vmul.f32 %v372, %v376
    %v378 = vadd.f32 1.0, %v377
    %v379 = vmul.f32 %v370, %v370
    %v380 = vmul.f32 %v379, -0.00019511016
    %v381 = vadd.f32 %v380, 0.008332121
    %v382 = vmul.f32 %v379, %v381
    %v383 = vadd.f32 %v382, -0.16666654
    %v384 = vmul.f32 %v379, %v383
    %v385 = vadd.f32 %v384, 1.0
    %v386 = vmul.f32 %v385, %v370
    %vm387 = vweird.f32 %v86
    %v388 = vadd.s32 %v371, 3
    %v389 = vand.u32 %v388, 3
    %vm390 = vcmp.lt.s32.totalorder %v389, 2
    %vm391 = vcmp.eq.s32.totalorder %v389, 0
    %v392 = vxor.u32 %v386, 2147483648
    %v393 = vsel %vm391, %v378, %v392
    %vm394 = vcmp.eq.s32.totalorder %v389, 2
    %v395 = vxor.u32 %v378, 2147483648
    %v396 = vsel %vm394, %v395, %v386
    %v397 = vsel %vm390, %v393, %v396
    %v398 = vsel %vm387, nan, %v397
    %v399 = vand.u32 2147483647, %v87
    %vm400 = vcmp.le.f32.partialorder %v399, 0.7853982
    %vm401 = vcmp.lt.s32.totalorder %v87, 0
    %v402 = vand.u32 %v87, 2139095040
    %v403 = vshrl.u32 %v402, 23
    %v404 = vsub.s32 %v403, 127
    %v405 = vand.u32 2147483647, %v87
    %v406 = vand.u32 %v405, 8388607
    %v407 = vor.u32 %v406, 8388608
    %v408 = vsub.s32 0, %v407
    %v409 = vadd.s32 %v404, 1
    %vm410 = vcmp.gt.s32.totalorder %v409, 0
    %v411 = vsel %vm410, %v409, 0
    %v412 = vshrl.u32 %v411, 5
    %v413 = vand.u32 %v411, 31
    %v414 = vsub.s32 32, %v413
    %v415 = vshrl.u32 683565275, %v414
    %v416 = vshll.u32 683565275, %v413
    %v417 = vshrl.u32 2475754826, %v414
    %v418 = vor.u32 %v416, %v417
    %v419 = vshll.u32 2475754826, %v413
    %v420 = vshrl.u32 2131351028, %v414
    %v421 = vor.u32 %v419, %v420
    %v422 = vshll.u32 2131351028, %v413
    %v423 = vshrl.u32 2102212464, %v414
    %v424 = vor.u32 %v422, %v423
    %v425 = vshll.u32 2102212464, %v413
    %v426 = vshrl.u32 920167782, %v414
    %v427 = vor.u32 %v425, %v426
    %v428 = vshll.u32 920167782, %v413
    %v429 = vshrl.u32 1326507024, %v414
    %v430 = vor.u32 %v428, %v429
    %vm431 = vcmp.lt.s32.totalorder %v412, 1
    %vm432 = vcmp.lt.s32.totalorder %v412, 2
    %vm433 = vcmp.lt.s32.totalorder %v412, 3
    %vm434 = vcmp.lt.s32.totalorder %v412, 4
    %v435 = vsel %vm431, %v415, %v418
    %v436 = vsel %vm434, %v424, 2102212464
    %v437 = vsel %vm433, %v421, %v436
    %v438 = vsel %vm432, %v435, %v437
    %v439 = vsel %vm431, %v418, %v421
    %v440 = vsel %vm434, %v427, 920167782
    %v441 = vsel %vm433, %v424, %v440
    %v442 = vsel %vm432, %v439, %v441
    %v443 = vsel %vm431, %v421, %v424
    %v444 = vsel %vm434, %v430, 1326507024
    %v445 = vsel %vm433, %v427, %v444
    %v446 = vsel %vm432, %v443, %v445
    %v447 = vshll.u32 %v407, 8
    %v448 = vand.u32 %v447, 65535
    %v449 = vshrl.u32 %v447, 16
    %v450 = vand.u32 %v446, 65535
    %v451 = vshrl.u32 %v446, 16
    %v452 = vmul.u32 %v448, %v450
    %v453 = vmul.u32 %v448, %v451
    %v454 = vmul.u32 %v449, %v450
    %v455 = vmul.u32 %v449, %v451
    %v456 = vshll.u32 %v453, 16
    %v457 = vshrl.u32 %v453, 16
    %v458 = vshll.u32 %v454, 16
    %v459 = vshrl.u32 %v454, 16
    %vm460 = vc.u32 %v452, %v456
    %v461 = vsel %vm460, 1, 0
    %v462 = vadd.s32 %v452, %v456
    %v463 = vadd.s32 %v455, %v461
    %vm464 = vc.u32 %v462, %v458
    %v465 = vsel %vm464, 1, 0
    %v466 = vadd.s32 %v462, %v458
    %v467 = vadd.s32 %v463, %v465
    %v468 = vadd.s32 %v467, %v457
    %v469 = vadd.s32 %v468, %v459
    %v470 = vand.u32 %v447, 65535
    %v471 = vshrl.u32 %v447, 16
    %v472 = vand.u32 %v442, 65535
    %v473 = vshrl.u32 %v442, 16
    %v474 = vmul.u32 %v470, %v472
    %v475 = vmul.u32 %v470, %v473
    %v476 = vmul.u32 %v471, %v472
    %v477 = vmul.u32 %v471, %v473
    %v478 = vshll.u32 %v475, 16
    %v479 = vshrl.u32 %v475, 16
    %v480 = vshll.u32 %v476, 16
    %v481 = vshrl.u32 %v476, 16
    %vm482 = vc.u32 %v474, %v478
    %v483 = vsel %vm482, 1, 0
    %v484 = vadd.s32 %v474, %v478
    %v485 = vadd.s32 %v477, %v483
    %vm486 = vc.u32 %v484, %v480
    %v487 = vsel %vm486, 1, 0
    %v488 = vadd.s32 %v484, %v480
    %v489 = vadd.s32 %v485, %v487
    %v490 = vadd.s32 %v489, %v479
    %v491 = vadd.s32 %v490, %v481
    %v492 = vmul.u32 %v447, %v438
    %v493 = vadd.s32 %v469, %v488
    %vm494 = vc.u32 %v469, %v488
    %v495 = vadd.s32 %v491, 1
    %v496 = vsel %vm494, %v495, %v491
    %v497 = vadd.s32 %v492, %v496
    %v498 = vadd.s32 %v497, 536870912
    %v499 = vshrl.u32 %v498, 30
    %v500 = vshll.u32 %v499, 30
    %v501 = vsub.s32 %v497, %v500
    %vm502 = vcmp.lt.s32.totalorder %v501, 0
    %v503 = vsub.s32 0, %v501
    %v504 = vsel %vm502, %v503, %v501
    %v505 = vclz %v504
    %v506 = vsub.s32 %v505, 2
    %vm507 = vcmp.gt.s32.totalorder 0, %v506
    %v508 = vsel %vm507, 0, %v506
    %v509 = vsub.s32 32, %v508
    %v510 = vshll.u32 %v501, %v508
    %v511 = vshrl.u32 %v493, %v509
    %v512 = vor.u32 %v510, %v511
    %v513 = vsub.s32 4294967266, %v508
    %v514 = vadd.s32 %v513, 127
    %v515 = vshll.u32 %v514, 23
    %v516 = vor.u32 4788187, %v515
    %v517 = vand.u32 2147483647, %v516
    %v519 = vcvt.s32.f32 %v512
    %v520 = vmul.f32 %v519, %v517
    %v521 = vxor.u32 %v520, 2147483648
    %v522 = vsel %vm401, %v521, %v520
    %v523 = vsub.s32 4, %v499
    %v524 = vsel %vm401, %v523, %v499
    %v525 = vsel %vm400, %v87, %v522
    %v526 = vsel %vm400, 0, %v524
    %v527 = vmul.f32 %v525, %v525
    %v528 = vmul.f32 %v527, -0.001358992
    %v529 = vadd.f32 %v528, 0.041655596
    %v530 = vmul.f32 %v527, %v529
    %v531 = vadd.f32 %v530, -0.4999988
    %v532 = vmul.f32 %v527, %v531
    %v533 = vadd.f32 1.0, %v532
    %v534 = vmul.f32 %v525, %v525
    %v535 = vmul.f32 %v534, -0.00019511016
    %v536 = vadd.f32 %v535, 0.008332121
    %v537 = vmul.f32 %v534, %v536
    %v538 = vadd.f32 %v537, -0.16666654
    %v539 = vmul.f32 %v534, %v538
    %v540 = vadd.f32 %v539, 1.0
    %v541 = vmul.f32 %v540, %v525
    %vm542 = vweird.f32 %v87
    %v543 = vadd.s32 %v526, 3
    %v544 = vand.u32 %v543, 3
    %vm545 = vcmp.lt.s32.totalorder %v544, 2
    %vm546 = vcmp.eq.s32.totalorder %v544, 0
    %v547 = vxor.u32 %v541, 2147483648
    %v548 = vsel %vm546, %v533, %v547
    %vm549 = vcmp.eq.s32.totalorder %v544, 2
    %v550 = vxor.u32 %v533, 2147483648
    %v551 = vsel %vm549, %v550, %v541
    %v552 = vsel %vm545, %v548, %v551
    %v553 = vsel %vm542, nan, %v552
    %v554 = vand.u32 2147483647, %v88
    %vm555 = vcmp.le.f32.partialorder %v554, 0.7853982
    %vm556 = vcmp.lt.s32.totalorder %v88, 0
    %v557 = vand.u32 %v88, 2139095040
    %v558 = vshrl.u32 %v557, 23
    %v559 = vsub.s32 %v558, 127
    %v560 = vand.u32 2147483647, %v88
    %v561 = vand.u32 %v560, 8388607
    %v562 = vor.u32 %v561, 8388608
    %v563 = vsub.s32 0, %v562
    %v564 = vadd.s32 %v559, 1
    %vm565 = vcmp.gt.s32.totalorder %v564, 0
    %v566 = vsel %vm565, %v564, 0
    %v567 = vshrl.u32 %v566, 5
    %v568 = vand.u32 %v566, 31
    %v569 = vsub.s32 32, %v568
    %v570 = vshrl.u32 683565275, %v569
    %v571 = vshll.u32 683565275, %v568
    %v572 = vshrl.u32 2475754826, %v569
    %v573 = vor.u32 %v571, %v572
    %v574 = vshll.u32 2475754826, %v568
    %v575 = vshrl.u32 2131351028, %v569
    %v576 = vor.u32 %v574, %v575
    %v577 = vshll.u32 2131351028, %v568
    %v578 = vshrl.u32 2102212464, %v569
    %v579 = vor.u32 %v577, %v578
    %v580 = vshll.u32 2102212464, %v568
    %v581 = vshrl.u32 920167782, %v569
    %v582 = vor.u32 %v580, %v581
    %v583 = vshll.u32 920167782, %v568
    %v584 = vshrl.u32 1326507024, %v569
    %v585 = vor.u32 %v583, %v584
    %vm586 = vcmp.lt.s32.totalorder %v567, 1
    %vm587 = vcmp.lt.s32.totalorder %v567, 2
    %vm588 = vcmp.lt.s32.totalorder %v567, 3
    %vm589 = vcmp.lt.s32.totalorder %v567, 4
    %v590 = vsel %vm586, %v570, %v573
    %v591 = vsel %vm589, %v579, 2102212464
    %v592 = vsel %vm588, %v576, %v591
    %v593 = vsel %vm587, %v590, %v592
    %v594 = vsel %vm586, %v573, %v576
    %v595 = vsel %vm589, %v582, 920167782
    %v596 = vsel %vm588, %v579, %v595
    %v597 = vsel %vm587, %v594, %v596
    %v598 = vsel %vm586, %v576, %v579
    %v599 = vsel %vm589, %v585, 1326507024
    %v600 = vsel %vm588, %v582, %v599
    %v601 = vsel %vm587, %v598, %v600
    %v602 = vshll.u32 %v562, 8
    %v603 = vand.u32 %v602, 65535
    %v604 = vshrl.u32 %v602, 16
    %v605 = vand.u32 %v601, 65535
    %v606 = vshrl.u32 %v601, 16
    %v607 = vmul.u32 %v603, %v605
    %v608 = vmul.u32 %v603, %v606
    %v609 = vmul.u32 %v604, %v605
    %v610 = vmul.u32 %v604, %v606
    %v611 = vshll.u32 %v608, 16
    %v612 = vshrl.u32 %v608, 16
    %v613 = vshll.u32 %v609, 16
    %v614 = vshrl.u32 %v609, 16
    %vm615 = vc.u32 %v607, %v611
    %v616 = vsel %vm615, 1, 0
    %v617 = vadd.s32 %v607, %v611
    %v618 = vadd.s32 %v610, %v616
    %vm619 = vc.u32 %v617, %v613
    %v620 = vsel %vm619, 1, 0
    %v621 = vadd.s32 %v617, %v613
    %v622 = vadd.s32 %v618, %v620
    %v623 = vadd.s32 %v622, %v612
    %v624 = vadd.s32 %v623, %v614
    %v625 = vand.u32 %v602, 65535
    %v626 = vshrl.u32 %v602, 16
    %v627 = vand.u32 %v597, 65535
    %v628 = vshrl.u32 %v597, 16
    %v629 = vmul.u32 %v625, %v627
    %v630 = vmul.u32 %v625, %v628
    %v631 = vmul.u32 %v626, %v627
    %v632 = vmul.u32 %v626, %v628
    %v633 = vshll.u32 %v630, 16
    %v634 = vshrl.u32 %v630, 16
    %v635 = vshll.u32 %v631, 16
    %v636 = vshrl.u32 %v631, 16
    %vm637 = vc.u32 %v629, %v633
    %v638 = vsel %vm637, 1, 0
    %v639 = vadd.s32 %v629, %v633
    %v640 = vadd.s32 %v632, %v638
    %vm641 = vc.u32 %v639, %v635
    %v642 = vsel %vm641, 1, 0
    %v643 = vadd.s32 %v639, %v635
    %v644 = vadd.s32 %v640, %v642
    %v645 = vadd.s32 %v644, %v634
    %v646 = vadd.s32 %v645, %v636
    %v647 = vmul.u32 %v602, %v593
    %v648 = vadd.s32 %v624, %v643
    %vm649 = vc.u32 %v624, %v643
    %v650 = vadd.s32 %v646, 1
    %v651 = vsel %vm649, %v650, %v646
    %v652 = vadd.s32 %v647, %v651
    %v653 = vadd.s32 %v652, 536870912
    %v654 = vshrl.u32 %v653, 30
    %v655 = vshll.u32 %v654, 30
    %v656 = vsub.s32 %v652, %v655
    %vm657 = vcmp.lt.s32.totalorder %v656, 0
    %v658 = vsub.s32 0, %v656
    %v659 = vsel %vm657, %v658, %v656
    %v660 = vclz %v659
    %v661 = vsub.s32 %v660, 2
    %vm662 = vcmp.gt.s32.totalorder 0, %v661
    %v663 = vsel %vm662, 0, %v661
    %v664 = vsub.s32 32, %v663
    %v665 = vshll.u32 %v656, %v663
    %v666 = vshrl.u32 %v648, %v664
    %v667 = vor.u32 %v665, %v666
    %v668 = vsub.s32 4294967266, %v663
    %v669 = vadd.s32 %v668, 127
    %v670 = vshll.u32 %v669, 23
    %v671 = vor.u32 4788187, %v670
    %v672 = vand.u32 2147483647, %v671
    %v674 = vcvt.s32.f32 %v667
    %v675 = vmul.f32 %v674, %v672
    %v676 = vxor.u32 %v675, 2147483648
    %v677 = vsel %vm556, %v676, %v675
    %v678 = vsub.s32 4, %v654
    %v679 = vsel %vm556, %v678, %v654
    %v680 = vsel %vm555, %v88, %v677
    %v681 = vsel %vm555, 0, %v679
    %v682 = vmul.f32 %v680, %v680
    %v683 = vmul.f32 %v682, -0.001358992
    %v684 = vadd.f32 %v683, 0.041655596
    %v685 = vmul.f32 %v682, %v684
    %v686 = vadd.f32 %v685, -0.4999988
    %v687 = vmul.f32 %v682, %v686
    %v688 = vadd.f32 1.0, %v687
    %v689 = vmul.f32 %v680, %v680
    %v690 = vmul.f32 %v689, -0.00019511016
    %v691 = vadd.f32 %v690, 0.008332121
    %v692 = vmul.f32 %v689, %v691
    %v693 = vadd.f32 %v692, -0.16666654
    %v694 = vmul.f32 %v689, %v693
    %v695 = vadd.f32 %v694, 1.0
    %v696 = vmul.f32 %v695, %v680
    %vm697 = vweird.f32 %v88
    %v698 = vadd.s32 %v681, 3
    %v699 = vand.u32 %v698, 3
    %vm700 = vcmp.lt.s32.totalorder %v699, 2
    %vm701 = vcmp.eq.s32.totalorder %v699, 0
    %v702 = vxor.u32 %v696, 2147483648
    %v703 = vsel %vm701, %v688, %v702
    %vm704 = vcmp.eq.s32.totalorder %v699, 2
    %v705 = vxor.u32 %v688, 2147483648
    %v706 = vsel %vm704, %v705, %v696
    %v707 = vsel %vm700, %v703, %v706
    %v708 = vsel %vm697, nan, %v707
    %v709 = vmul.f32 %v243, 2.0
    %v710 = vmul.f32 %v398, 2.0
    %v711 = vmul.f32 %v553, 2.0
    %v712 = vmul.f32 %v708, 2.0
    %v713 = vstv %s43
    %v714 = vmul.f32 %v713, %v44
    %v716 = vperm.slane %v714, 0
    %v717 = vperm.slane %v714, 1
    %v718 = vperm.slane %v714, 2
    %v719 = vperm.slane %v714, 3
    %v724 = vrcp.pop %v716
    %v725 = vmul.f32 %v716, %v724
    %v726 = vsub.f32 1.0, %v725
    %v727 = vmul.f32 %v724, %v726
    %v728 = vadd.f32 %v724, %v727
    %vm729 = vweird.f32 %v716
    %vm730 = vweird.f32 %v724
    %vm731 = vmor %vm729, %vm730
    %v732 = vsel %vm731, %v724, %v728
    %v733 = vand.u32 2147483647, %v716
    %vm734 = vcmp.eq.f32.partialorder %v733, 8.507059e+37
    %v735 = vand.u32 %v716, 2147483648
    %v736 = vor.u32 1.1754944e-38, %v735
    %v737 = vsel %vm734, %v736, %v732
    %v738 = vmul.f32 %v709, %v737
    %v739 = vrcp.pop %v717
    %v740 = vmul.f32 %v717, %v739
    %v741 = vsub.f32 1.0, %v740
    %v742 = vmul.f32 %v739, %v741
    %v743 = vadd.f32 %v739, %v742
    %vm744 = vweird.f32 %v717
    %vm745 = vweird.f32 %v739
    %vm746 = vmor %vm744, %vm745
    %v747 = vsel %vm746, %v739, %v743
    %v748 = vand.u32 2147483647, %v717
    %vm749 = vcmp.eq.f32.partialorder %v748, 8.507059e+37
    %v750 = vand.u32 %v717, 2147483648
    %v751 = vor.u32 1.1754944e-38, %v750
    %v752 = vsel %vm749, %v751, %v747
    %v753 = vmul.f32 %v710, %v752
    %v754 = vrcp.pop %v718
    %v755 = vmul.f32 %v718, %v754
    %v756 = vsub.f32 1.0, %v755
    %v757 = vmul.f32 %v754, %v756
    %v758 = vadd.f32 %v754, %v757
    %vm759 = vweird.f32 %v718
    %vm760 = vweird.f32 %v754
    %vm761 = vmor %vm759, %vm760
    %v762 = vsel %vm761, %v754, %v758
    %v763 = vand.u32 2147483647, %v718
    %vm764 = vcmp.eq.f32.partialorder %v763, 8.507059e+37
    %v765 = vand.u32 %v718, 2147483648
    %v766 = vor.u32 1.1754944e-38, %v765
    %v767 = vsel %vm764, %v766, %v762
    %v768 = vmul.f32 %v711, %v767
    %v769 = vrcp.pop %v719
    %v770 = vmul.f32 %v719, %v769
    %v771 = vsub.f32 1.0, %v770
    %v772 = vmul.f32 %v769, %v771
    %v773 = vadd.f32 %v769, %v772
    %vm774 = vweird.f32 %v719
    %vm775 = vweird.f32 %v769
    %vm776 = vmor %vm774, %vm775
    %v777 = vsel %vm776, %v769, %v773
    %v778 = vand.u32 2147483647, %v719
    %vm779 = vcmp.eq.f32.partialorder %v778, 8.507059e+37
    %v780 = vand.u32 %v719, 2147483648
    %v781 = vor.u32 1.1754944e-38, %v780
    %v782 = vsel %vm779, %v781, %v777
    %v783 = vmul.f32 %v712, %v782
    %v784 = vld [vmem:[%s4] sm:$0xff]
    %v785 = vld [vmem:[%s4 + $0x8] sm:$0xff]
    %v786 = vld [vmem:[%s4 + $0x10] sm:$0xff]
    %v787 = vld [vmem:[%s4 + $0x18] sm:$0xff]
    %v788 = vld [vmem:[%s4 + $0x20] sm:$0xff]
    %v789 = vld [vmem:[%s4 + $0x28] sm:$0xff]
    %v790 = vld [vmem:[%s4 + $0x30] sm:$0xff]
    %v791 = vld [vmem:[%s4 + $0x38] sm:$0xff]
    %v792 = vld [vmem:[%s5] sm:$0xff]
    %v793 = vld [vmem:[%s5 + $0x8] sm:$0xff]
    %v794 = vld [vmem:[%s5 + $0x10] sm:$0xff]
    %v795 = vld [vmem:[%s5 + $0x18] sm:$0xff]
    %v796 = vld [vmem:[%s5 + $0x20] sm:$0xff]
    %v797 = vld [vmem:[%s5 + $0x28] sm:$0xff]
    %v798 = vld [vmem:[%s5 + $0x30] sm:$0xff]
    %v799 = vld [vmem:[%s5 + $0x38] sm:$0xff]
    %801 = vset.pattern.permute.xlu0 0
    %802 = vperm.xlu0 %801, %v792
    %v803 = vpop.permute.xlu0 %802
    %806 = vset.pattern.permute.xlu0 0
    %807 = vperm.xlu0 %806, %v793
    %v808 = vpop.permute.xlu0 %807
    %811 = vset.pattern.permute.xlu0 0
    %812 = vperm.xlu0 %811, %v794
    %v813 = vpop.permute.xlu0 %812
    %816 = vset.pattern.permute.xlu0 0
    %817 = vperm.xlu0 %816, %v795
    %v818 = vpop.permute.xlu0 %817
    %821 = vset.pattern.permute.xlu0 0
    %822 = vperm.xlu0 %821, %v796
    %v823 = vpop.permute.xlu0 %822
    %826 = vset.pattern.permute.xlu0 0
    %827 = vperm.xlu0 %826, %v797
    %v828 = vpop.permute.xlu0 %827
    %831 = vset.pattern.permute.xlu0 0
    %832 = vperm.xlu0 %831, %v798
    %v833 = vpop.permute.xlu0 %832
    %836 = vset.pattern.permute.xlu0 0
    %837 = vperm.xlu0 %836, %v799
    %v838 = vpop.permute.xlu0 %837
    %vm840 = vcmask 523264
    %v842 = vsel %vm840, %v784, 0
    %v845 = vsel %vm840, %v785, 0
    %v848 = vsel %vm840, %v786, 0
    %v851 = vsel %vm840, %v787, 0
    %v854 = vsel %vm840, %v788, 0
    %v857 = vsel %vm840, %v789, 0
    %v860 = vsel %vm840, %v790, 0
    %v863 = vsel %vm840, %v791, 0
    %865 = vmatpush.msra.mxu0 0.0
    %866 = vmatpush.msra.mxu0 0.0
    %867 = vmatpush.msra.mxu0 0.0
    %868 = vmatpush.msra.mxu0 0.0
    %869 = vmatpush.msra.mxu0 0.0
    %870 = vmatpush.msra.mxu0 0.0
    %871 = vmatpush.msra.mxu0 0.0
    %872 = vmatpush.msra.mxu0 0.0
    %873 = vmatpush.msra.mxu0 0.0
    %874 = vmatpush.msra.mxu0 0.0
    %875 = vmatpush.msra.mxu0 0.0
    %876 = vmatpush.msra.mxu0 0.0
    %877 = vmatpush.msra.mxu0 0.0
    %878 = vmatpush.msra.mxu0 0.0
    %879 = vmatpush.msra.mxu0 0.0
    %880 = vmatpush.msra.mxu0 %v738
    %881 = vmatmul.f32.gmra.mxu0 %v842
    %v882 = vpop.f32.mrf.mxu0
    %v883 = vadd.f32 %v803, %v882
    %884 = vmatmul.f32.gmra.mxu0 %v845
    %v885 = vpop.f32.mrf.mxu0
    %v886 = vadd.f32 %v808, %v885
    %887 = vmatmul.f32.gmra.mxu0 %v848
    %v888 = vpop.f32.mrf.mxu0
    %v889 = vadd.f32 %v813, %v888
    %890 = vmatmul.f32.gmra.mxu0 %v851
    %v891 = vpop.f32.mrf.mxu0
    %v892 = vadd.f32 %v818, %v891
    %893 = vmatmul.f32.gmra.mxu0 %v854
    %v894 = vpop.f32.mrf.mxu0
    %v895 = vadd.f32 %v823, %v894
    %896 = vmatmul.f32.gmra.mxu0 %v857
    %v897 = vpop.f32.mrf.mxu0
    %v898 = vadd.f32 %v828, %v897
    %899 = vmatmul.f32.gmra.mxu0 %v860
    %v900 = vpop.f32.mrf.mxu0
    %v901 = vadd.f32 %v833, %v900
    %902 = vmatmul.f32.gmra.mxu0 %v863
    %v903 = vpop.f32.mrf.mxu0
    %v904 = vadd.f32 %v838, %v903
    %905 = vdwg.mxu0
    %906 = vmatpush.msra.mxu0 0.0
    %907 = vmatpush.msra.mxu0 0.0
    %908 = vmatpush.msra.mxu0 0.0
    %909 = vmatpush.msra.mxu0 0.0
    %910 = vmatpush.msra.mxu0 0.0
    %911 = vmatpush.msra.mxu0 0.0
    %912 = vmatpush.msra.mxu0 0.0
    %913 = vmatpush.msra.mxu0 0.0
    %914 = vmatpush.msra.mxu0 0.0
    %915 = vmatpush.msra.mxu0 0.0
    %916 = vmatpush.msra.mxu0 0.0
    %917 = vmatpush.msra.mxu0 0.0
    %918 = vmatpush.msra.mxu0 0.0
    %919 = vmatpush.msra.mxu0 0.0
    %920 = vmatpush.msra.mxu0 0.0
    %921 = vmatpush.msra.mxu0 %v753
    %922 = vmatmul.f32.gmra.mxu0 %v842
    %v923 = vpop.f32.mrf.mxu0
    %v924 = vadd.f32 %v803, %v923
    %925 = vmatmul.f32.gmra.mxu0 %v845
    %v926 = vpop.f32.mrf.mxu0
    %v927 = vadd.f32 %v808, %v926
    %928 = vmatmul.f32.gmra.mxu0 %v848
    %v929 = vpop.f32.mrf.mxu0
    %v930 = vadd.f32 %v813, %v929
    %931 = vmatmul.f32.gmra.mxu0 %v851
    %v932 = vpop.f32.mrf.mxu0
    %v933 = vadd.f32 %v818, %v932
    %934 = vmatmul.f32.gmra.mxu0 %v854
    %v935 = vpop.f32.mrf.mxu0
    %v936 = vadd.f32 %v823, %v935
    %937 = vmatmul.f32.gmra.mxu0 %v857
    %v938 = vpop.f32.mrf.mxu0
    %v939 = vadd.f32 %v828, %v938
    %940 = vmatmul.f32.gmra.mxu0 %v860
    %v941 = vpop.f32.mrf.mxu0
    %v942 = vadd.f32 %v833, %v941
    %943 = vmatmul.f32.gmra.mxu0 %v863
    %v944 = vpop.f32.mrf.mxu0
    %v945 = vadd.f32 %v838, %v944
    %946 = vdwg.mxu0
    %947 = vmatpush.msra.mxu0 0.0
    %948 = vmatpush.msra.mxu0 0.0
    %949 = vmatpush.msra.mxu0 0.0
    %950 = vmatpush.msra.mxu0 0.0
    %951 = vmatpush.msra.mxu0 0.0
    %952 = vmatpush.msra.mxu0 0.0
    %953 = vmatpush.msra.mxu0 0.0
    %954 = vmatpush.msra.mxu0 0.0
    %955 = vmatpush.msra.mxu0 0.0
    %956 = vmatpush.msra.mxu0 0.0
    %957 = vmatpush.msra.mxu0 0.0
    %958 = vmatpush.msra.mxu0 0.0
    %959 = vmatpush.msra.mxu0 0.0
    %960 = vmatpush.msra.mxu0 0.0
    %961 = vmatpush.msra.mxu0 0.0
    %962 = vmatpush.msra.mxu0 %v768
    %963 = vmatmul.f32.gmra.mxu0 %v842
    %v964 = vpop.f32.mrf.mxu0
    %v965 = vadd.f32 %v803, %v964
    %966 = vmatmul.f32.gmra.mxu0 %v845
    %v967 = vpop.f32.mrf.mxu0
    %v968 = vadd.f32 %v808, %v967
    %969 = vmatmul.f32.gmra.mxu0 %v848
    %v970 = vpop.f32.mrf.mxu0
    %v971 = vadd.f32 %v813, %v970
    %972 = vmatmul.f32.gmra.mxu0 %v851
    %v973 = vpop.f32.mrf.mxu0
    %v974 = vadd.f32 %v818, %v973
    %975 = vmatmul.f32.gmra.mxu0 %v854
    %v976 = vpop.f32.mrf.mxu0
    %v977 = vadd.f32 %v823, %v976
    %978 = vmatmul.f32.gmra.mxu0 %v857
    %v979 = vpop.f32.mrf.mxu0
    %v980 = vadd.f32 %v828, %v979
    %981 = vmatmul.f32.gmra.mxu0 %v860
    %v982 = vpop.f32.mrf.mxu0
    %v983 = vadd.f32 %v833, %v982
    %984 = vmatmul.f32.gmra.mxu0 %v863
    %v985 = vpop.f32.mrf.mxu0
    %v986 = vadd.f32 %v838, %v985
    %987 = vdwg.mxu0
    %988 = vmatpush.msra.mxu0 0.0
    %989 = vmatpush.msra.mxu0 0.0
    %990 = vmatpush.msra.mxu0 0.0
    %991 = vmatpush.msra.mxu0 0.0
    %992 = vmatpush.msra.mxu0 0.0
    %993 = vmatpush.msra.mxu0 0.0
    %994 = vmatpush.msra.mxu0 0.0
    %995 = vmatpush.msra.mxu0 0.0
    %996 = vmatpush.msra.mxu0 0.0
    %997 = vmatpush.msra.mxu0 0.0
    %998 = vmatpush.msra.mxu0 0.0
    %999 = vmatpush.msra.mxu0 0.0
    %1000 = vmatpush.msra.mxu0 0.0
    %1001 = vmatpush.msra.mxu0 0.0
    %1002 = vmatpush.msra.mxu0 0.0
    %1003 = vmatpush.msra.mxu0 %v783
    %1004 = vmatmul.f32.gmra.mxu0 %v842
    %v1005 = vpop.f32.mrf.mxu0
    %v1006 = vadd.f32 %v803, %v1005
    %1007 = vmatmul.f32.gmra.mxu0 %v845
    %v1008 = vpop.f32.mrf.mxu0
    %v1009 = vadd.f32 %v808, %v1008
    %1010 = vmatmul.f32.gmra.mxu0 %v848
    %v1011 = vpop.f32.mrf.mxu0
    %v1012 = vadd.f32 %v813, %v1011
    %1013 = vmatmul.f32.gmra.mxu0 %v851
    %v1014 = vpop.f32.mrf.mxu0
    %v1015 = vadd.f32 %v818, %v1014
    %1016 = vmatmul.f32.gmra.mxu0 %v854
    %v1017 = vpop.f32.mrf.mxu0
    %v1018 = vadd.f32 %v823, %v1017
    %1019 = vmatmul.f32.gmra.mxu0 %v857
    %v1020 = vpop.f32.mrf.mxu0
    %v1021 = vadd.f32 %v828, %v1020
    %1022 = vmatmul.f32.gmra.mxu0 %v860
    %v1023 = vpop.f32.mrf.mxu0
    %v1024 = vadd.f32 %v833, %v1023
    %1025 = vmatmul.f32.gmra.mxu0 %v863
    %v1026 = vpop.f32.mrf.mxu0
    %v1027 = vadd.f32 %v838, %v1026
    %1028 = vdwg.mxu0
    %v1029 = vxor.u32 %v883, 2147483648
    %v1030 = vxor.u32 %v924, 2147483648
    %v1031 = vxor.u32 %v965, 2147483648
    %v1032 = vxor.u32 %v1006, 2147483648
    %v1033 = vxor.u32 %v886, 2147483648
    %v1034 = vxor.u32 %v927, 2147483648
    %v1035 = vxor.u32 %v968, 2147483648
    %v1036 = vxor.u32 %v1009, 2147483648
    %v1037 = vxor.u32 %v889, 2147483648
    %v1038 = vxor.u32 %v930, 2147483648
    %v1039 = vxor.u32 %v971, 2147483648
    %v1040 = vxor.u32 %v1012, 2147483648
    %v1041 = vxor.u32 %v892, 2147483648
    %v1042 = vxor.u32 %v933, 2147483648
    %v1043 = vxor.u32 %v974, 2147483648
    %v1044 = vxor.u32 %v1015, 2147483648
    %v1045 = vxor.u32 %v895, 2147483648
    %v1046 = vxor.u32 %v936, 2147483648
    %v1047 = vxor.u32 %v977, 2147483648
    %v1048 = vxor.u32 %v1018, 2147483648
    %v1049 = vxor.u32 %v898, 2147483648
    %v1050 = vxor.u32 %v939, 2147483648
    %v1051 = vxor.u32 %v980, 2147483648
    %v1052 = vxor.u32 %v1021, 2147483648
    %v1053 = vxor.u32 %v901, 2147483648
    %v1054 = vxor.u32 %v942, 2147483648
    %v1055 = vxor.u32 %v983, 2147483648
    %v1056 = vxor.u32 %v1024, 2147483648
    %v1057 = vxor.u32 %v904, 2147483648
    %v1058 = vxor.u32 %v945, 2147483648
    %v1059 = vxor.u32 %v986, 2147483648
    %v1060 = vxor.u32 %v1027, 2147483648
    %v1061 = vmul.f32 %v1029, 1.442695
    %v1062 = vpow.pop %v1061
    %v1063 = vmul.f32 %v1030, 1.442695
    %v1064 = vpow.pop %v1063
    %v1065 = vmul.f32 %v1031, 1.442695
    %v1066 = vpow.pop %v1065
    %v1067 = vmul.f32 %v1032, 1.442695
    %v1068 = vpow.pop %v1067
    %v1069 = vmul.f32 %v1033, 1.442695
    %v1070 = vpow.pop %v1069
    %v1071 = vmul.f32 %v1034, 1.442695
    %v1072 = vpow.pop %v1071
    %v1073 = vmul.f32 %v1035, 1.442695
    %v1074 = vpow.pop %v1073
    %v1075 = vmul.f32 %v1036, 1.442695
    %v1076 = vpow.pop %v1075
    %v1077 = vmul.f32 %v1037, 1.442695
    %v1078 = vpow.pop %v1077
    %v1079 = vmul.f32 %v1038, 1.442695
    %v1080 = vpow.pop %v1079
    %v1081 = vmul.f32 %v1039, 1.442695
    %v1082 = vpow.pop %v1081
    %v1083 = vmul.f32 %v1040, 1.442695
    %v1084 = vpow.pop %v1083
    %v1085 = vmul.f32 %v1041, 1.442695
    %v1086 = vpow.pop %v1085
    %v1087 = vmul.f32 %v1042, 1.442695
    %v1088 = vpow.pop %v1087
    %v1089 = vmul.f32 %v1043, 1.442695
    %v1090 = vpow.pop %v1089
    %v1091 = vmul.f32 %v1044, 1.442695
    %v1092 = vpow.pop %v1091
    %v1093 = vmul.f32 %v1045, 1.442695
    %v1094 = vpow.pop %v1093
    %v1095 = vmul.f32 %v1046, 1.442695
    %v1096 = vpow.pop %v1095
    %v1097 = vmul.f32 %v1047, 1.442695
    %v1098 = vpow.pop %v1097
    %v1099 = vmul.f32 %v1048, 1.442695
    %v1100 = vpow.pop %v1099
    %v1101 = vmul.f32 %v1049, 1.442695
    %v1102 = vpow.pop %v1101
    %v1103 = vmul.f32 %v1050, 1.442695
    %v1104 = vpow.pop %v1103
    %v1105 = vmul.f32 %v1051, 1.442695
    %v1106 = vpow.pop %v1105
    %v1107 = vmul.f32 %v1052, 1.442695
    %v1108 = vpow.pop %v1107
    %v1109 = vmul.f32 %v1053, 1.442695
    %v1110 = vpow.pop %v1109
    %v1111 = vmul.f32 %v1054, 1.442695
    %v1112 = vpow.pop %v1111
    %v1113 = vmul.f32 %v1055, 1.442695
    %v1114 = vpow.pop %v1113
    %v1115 = vmul.f32 %v1056, 1.442695
    %v1116 = vpow.pop %v1115
    %v1117 = vmul.f32 %v1057, 1.442695
    %v1118 = vpow.pop %v1117
    %v1119 = vmul.f32 %v1058, 1.442695
    %v1120 = vpow.pop %v1119
    %v1121 = vmul.f32 %v1059, 1.442695
    %v1122 = vpow.pop %v1121
    %v1123 = vmul.f32 %v1060, 1.442695
    %v1124 = vpow.pop %v1123
    %v1125 = vadd.f32 %v1062, 1.0
    %v1126 = vadd.f32 %v1064, 1.0
    %v1127 = vadd.f32 %v1066, 1.0
    %v1128 = vadd.f32 %v1068, 1.0
    %v1129 = vadd.f32 %v1070, 1.0
    %v1130 = vadd.f32 %v1072, 1.0
    %v1131 = vadd.f32 %v1074, 1.0
    %v1132 = vadd.f32 %v1076, 1.0
    %v1133 = vadd.f32 %v1078, 1.0
    %v1134 = vadd.f32 %v1080, 1.0
    %v1135 = vadd.f32 %v1082, 1.0
    %v1136 = vadd.f32 %v1084, 1.0
    %v1137 = vadd.f32 %v1086, 1.0
    %v1138 = vadd.f32 %v1088, 1.0
    %v1139 = vadd.f32 %v1090, 1.0
    %v1140 = vadd.f32 %v1092, 1.0
    %v1141 = vadd.f32 %v1094, 1.0
    %v1142 = vadd.f32 %v1096, 1.0
    %v1143 = vadd.f32 %v1098, 1.0
    %v1144 = vadd.f32 %v1100, 1.0
    %v1145 = vadd.f32 %v1102, 1.0
    %v1146 = vadd.f32 %v1104, 1.0
    %v1147 = vadd.f32 %v1106, 1.0
    %v1148 = vadd.f32 %v1108, 1.0
    %v1149 = vadd.f32 %v1110, 1.0
    %v1150 = vadd.f32 %v1112, 1.0
    %v1151 = vadd.f32 %v1114, 1.0
    %v1152 = vadd.f32 %v1116, 1.0
    %v1153 = vadd.f32 %v1118, 1.0
    %v1154 = vadd.f32 %v1120, 1.0
    %v1155 = vadd.f32 %v1122, 1.0
    %v1156 = vadd.f32 %v1124, 1.0
    %v1157 = vrcp.pop %v1125
    %v1158 = vmul.f32 %v1125, %v1157
    %v1159 = vsub.f32 1.0, %v1158
    %v1160 = vmul.f32 %v1157, %v1159
    %v1161 = vadd.f32 %v1157, %v1160
    %vm1162 = vweird.f32 %v1125
    %vm1163 = vweird.f32 %v1157
    %vm1164 = vmor %vm1162, %vm1163
    %v1165 = vsel %vm1164, %v1157, %v1161
    %v1166 = vand.u32 2147483647, %v1125
    %vm1167 = vcmp.eq.f32.partialorder %v1166, 8.507059e+37
    %v1168 = vand.u32 %v1125, 2147483648
    %v1169 = vor.u32 1.1754944e-38, %v1168
    %v1170 = vsel %vm1167, %v1169, %v1165
    %v1171 = vmul.f32 1.0, %v1170
    %v1172 = vrcp.pop %v1126
    %v1173 = vmul.f32 %v1126, %v1172
    %v1174 = vsub.f32 1.0, %v1173
    %v1175 = vmul.f32 %v1172, %v1174
    %v1176 = vadd.f32 %v1172, %v1175
    %vm1177 = vweird.f32 %v1126
    %vm1178 = vweird.f32 %v1172
    %vm1179 = vmor %vm1177, %vm1178
    %v1180 = vsel %vm1179, %v1172, %v1176
    %v1181 = vand.u32 2147483647, %v1126
    %vm1182 = vcmp.eq.f32.partialorder %v1181, 8.507059e+37
    %v1183 = vand.u32 %v1126, 2147483648
    %v1184 = vor.u32 1.1754944e-38, %v1183
    %v1185 = vsel %vm1182, %v1184, %v1180
    %v1186 = vmul.f32 1.0, %v1185
    %v1187 = vrcp.pop %v1127
    %v1188 = vmul.f32 %v1127, %v1187
    %v1189 = vsub.f32 1.0, %v1188
    %v1190 = vmul.f32 %v1187, %v1189
    %v1191 = vadd.f32 %v1187, %v1190
    %vm1192 = vweird.f32 %v1127
    %vm1193 = vweird.f32 %v1187
    %vm1194 = vmor %vm1192, %vm1193
    %v1195 = vsel %vm1194, %v1187, %v1191
    %v1196 = vand.u32 2147483647, %v1127
    %vm1197 = vcmp.eq.f32.partialorder %v1196, 8.507059e+37
    %v1198 = vand.u32 %v1127, 2147483648
    %v1199 = vor.u32 1.1754944e-38, %v1198
    %v1200 = vsel %vm1197, %v1199, %v1195
    %v1201 = vmul.f32 1.0, %v1200
    %v1202 = vrcp.pop %v1128
    %v1203 = vmul.f32 %v1128, %v1202
    %v1204 = vsub.f32 1.0, %v1203
    %v1205 = vmul.f32 %v1202, %v1204
    %v1206 = vadd.f32 %v1202, %v1205
    %vm1207 = vweird.f32 %v1128
    %vm1208 = vweird.f32 %v1202
    %vm1209 = vmor %vm1207, %vm1208
    %v1210 = vsel %vm1209, %v1202, %v1206
    %v1211 = vand.u32 2147483647, %v1128
    %vm1212 = vcmp.eq.f32.partialorder %v1211, 8.507059e+37
    %v1213 = vand.u32 %v1128, 2147483648
    %v1214 = vor.u32 1.1754944e-38, %v1213
    %v1215 = vsel %vm1212, %v1214, %v1210
    %v1216 = vmul.f32 1.0, %v1215
    %v1217 = vrcp.pop %v1129
    %v1218 = vmul.f32 %v1129, %v1217
    %v1219 = vsub.f32 1.0, %v1218
    %v1220 = vmul.f32 %v1217, %v1219
    %v1221 = vadd.f32 %v1217, %v1220
    %vm1222 = vweird.f32 %v1129
    %vm1223 = vweird.f32 %v1217
    %vm1224 = vmor %vm1222, %vm1223
    %v1225 = vsel %vm1224, %v1217, %v1221
    %v1226 = vand.u32 2147483647, %v1129
    %vm1227 = vcmp.eq.f32.partialorder %v1226, 8.507059e+37
    %v1228 = vand.u32 %v1129, 2147483648
    %v1229 = vor.u32 1.1754944e-38, %v1228
    %v1230 = vsel %vm1227, %v1229, %v1225
    %v1231 = vmul.f32 1.0, %v1230
    %v1232 = vrcp.pop %v1130
    %v1233 = vmul.f32 %v1130, %v1232
    %v1234 = vsub.f32 1.0, %v1233
    %v1235 = vmul.f32 %v1232, %v1234
    %v1236 = vadd.f32 %v1232, %v1235
    %vm1237 = vweird.f32 %v1130
    %vm1238 = vweird.f32 %v1232
    %vm1239 = vmor %vm1237, %vm1238
    %v1240 = vsel %vm1239, %v1232, %v1236
    %v1241 = vand.u32 2147483647, %v1130
    %vm1242 = vcmp.eq.f32.partialorder %v1241, 8.507059e+37
    %v1243 = vand.u32 %v1130, 2147483648
    %v1244 = vor.u32 1.1754944e-38, %v1243
    %v1245 = vsel %vm1242, %v1244, %v1240
    %v1246 = vmul.f32 1.0, %v1245
    %v1247 = vrcp.pop %v1131
    %v1248 = vmul.f32 %v1131, %v1247
    %v1249 = vsub.f32 1.0, %v1248
    %v1250 = vmul.f32 %v1247, %v1249
    %v1251 = vadd.f32 %v1247, %v1250
    %vm1252 = vweird.f32 %v1131
    %vm1253 = vweird.f32 %v1247
    %vm1254 = vmor %vm1252, %vm1253
    %v1255 = vsel %vm1254, %v1247, %v1251
    %v1256 = vand.u32 2147483647, %v1131
    %vm1257 = vcmp.eq.f32.partialorder %v1256, 8.507059e+37
    %v1258 = vand.u32 %v1131, 2147483648
    %v1259 = vor.u32 1.1754944e-38, %v1258
    %v1260 = vsel %vm1257, %v1259, %v1255
    %v1261 = vmul.f32 1.0, %v1260
    %v1262 = vrcp.pop %v1132
    %v1263 = vmul.f32 %v1132, %v1262
    %v1264 = vsub.f32 1.0, %v1263
    %v1265 = vmul.f32 %v1262, %v1264
    %v1266 = vadd.f32 %v1262, %v1265
    %vm1267 = vweird.f32 %v1132
    %vm1268 = vweird.f32 %v1262
    %vm1269 = vmor %vm1267, %vm1268
    %v1270 = vsel %vm1269, %v1262, %v1266
    %v1271 = vand.u32 2147483647, %v1132
    %vm1272 = vcmp.eq.f32.partialorder %v1271, 8.507059e+37
    %v1273 = vand.u32 %v1132, 2147483648
    %v1274 = vor.u32 1.1754944e-38, %v1273
    %v1275 = vsel %vm1272, %v1274, %v1270
    %v1276 = vmul.f32 1.0, %v1275
    %v1277 = vrcp.pop %v1133
    %v1278 = vmul.f32 %v1133, %v1277
    %v1279 = vsub.f32 1.0, %v1278
    %v1280 = vmul.f32 %v1277, %v1279
    %v1281 = vadd.f32 %v1277, %v1280
    %vm1282 = vweird.f32 %v1133
    %vm1283 = vweird.f32 %v1277
    %vm1284 = vmor %vm1282, %vm1283
    %v1285 = vsel %vm1284, %v1277, %v1281
    %v1286 = vand.u32 2147483647, %v1133
    %vm1287 = vcmp.eq.f32.partialorder %v1286, 8.507059e+37
    %v1288 = vand.u32 %v1133, 2147483648
    %v1289 = vor.u32 1.1754944e-38, %v1288
    %v1290 = vsel %vm1287, %v1289, %v1285
    %v1291 = vmul.f32 1.0, %v1290
    %v1292 = vrcp.pop %v1134
    %v1293 = vmul.f32 %v1134, %v1292
    %v1294 = vsub.f32 1.0, %v1293
    %v1295 = vmul.f32 %v1292, %v1294
    %v1296 = vadd.f32 %v1292, %v1295
    %vm1297 = vweird.f32 %v1134
    %vm1298 = vweird.f32 %v1292
    %vm1299 = vmor %vm1297, %vm1298
    %v1300 = vsel %vm1299, %v1292, %v1296
    %v1301 = vand.u32 2147483647, %v1134
    %vm1302 = vcmp.eq.f32.partialorder %v1301, 8.507059e+37
    %v1303 = vand.u32 %v1134, 2147483648
    %v1304 = vor.u32 1.1754944e-38, %v1303
    %v1305 = vsel %vm1302, %v1304, %v1300
    %v1306 = vmul.f32 1.0, %v1305
    %v1307 = vrcp.pop %v1135
    %v1308 = vmul.f32 %v1135, %v1307
    %v1309 = vsub.f32 1.0, %v1308
    %v1310 = vmul.f32 %v1307, %v1309
    %v1311 = vadd.f32 %v1307, %v1310
    %vm1312 = vweird.f32 %v1135
    %vm1313 = vweird.f32 %v1307
    %vm1314 = vmor %vm1312, %vm1313
    %v1315 = vsel %vm1314, %v1307, %v1311
    %v1316 = vand.u32 2147483647, %v1135
    %vm1317 = vcmp.eq.f32.partialorder %v1316, 8.507059e+37
    %v1318 = vand.u32 %v1135, 2147483648
    %v1319 = vor.u32 1.1754944e-38, %v1318
    %v1320 = vsel %vm1317, %v1319, %v1315
    %v1321 = vmul.f32 1.0, %v1320
    %v1322 = vrcp.pop %v1136
    %v1323 = vmul.f32 %v1136, %v1322
    %v1324 = vsub.f32 1.0, %v1323
    %v1325 = vmul.f32 %v1322, %v1324
    %v1326 = vadd.f32 %v1322, %v1325
    %vm1327 = vweird.f32 %v1136
    %vm1328 = vweird.f32 %v1322
    %vm1329 = vmor %vm1327, %vm1328
    %v1330 = vsel %vm1329, %v1322, %v1326
    %v1331 = vand.u32 2147483647, %v1136
    %vm1332 = vcmp.eq.f32.partialorder %v1331, 8.507059e+37
    %v1333 = vand.u32 %v1136, 2147483648
    %v1334 = vor.u32 1.1754944e-38, %v1333
    %v1335 = vsel %vm1332, %v1334, %v1330
    %v1336 = vmul.f32 1.0, %v1335
    %v1337 = vrcp.pop %v1137
    %v1338 = vmul.f32 %v1137, %v1337
    %v1339 = vsub.f32 1.0, %v1338
    %v1340 = vmul.f32 %v1337, %v1339
    %v1341 = vadd.f32 %v1337, %v1340
    %vm1342 = vweird.f32 %v1137
    %vm1343 = vweird.f32 %v1337
    %vm1344 = vmor %vm1342, %vm1343
    %v1345 = vsel %vm1344, %v1337, %v1341
    %v1346 = vand.u32 2147483647, %v1137
    %vm1347 = vcmp.eq.f32.partialorder %v1346, 8.507059e+37
    %v1348 = vand.u32 %v1137, 2147483648
    %v1349 = vor.u32 1.1754944e-38, %v1348
    %v1350 = vsel %vm1347, %v1349, %v1345
    %v1351 = vmul.f32 1.0, %v1350
    %v1352 = vrcp.pop %v1138
    %v1353 = vmul.f32 %v1138, %v1352
    %v1354 = vsub.f32 1.0, %v1353
    %v1355 = vmul.f32 %v1352, %v1354
    %v1356 = vadd.f32 %v1352, %v1355
    %vm1357 = vweird.f32 %v1138
    %vm1358 = vweird.f32 %v1352
    %vm1359 = vmor %vm1357, %vm1358
    %v1360 = vsel %vm1359, %v1352, %v1356
    %v1361 = vand.u32 2147483647, %v1138
    %vm1362 = vcmp.eq.f32.partialorder %v1361, 8.507059e+37
    %v1363 = vand.u32 %v1138, 2147483648
    %v1364 = vor.u32 1.1754944e-38, %v1363
    %v1365 = vsel %vm1362, %v1364, %v1360
    %v1366 = vmul.f32 1.0, %v1365
    %v1367 = vrcp.pop %v1139
    %v1368 = vmul.f32 %v1139, %v1367
    %v1369 = vsub.f32 1.0, %v1368
    %v1370 = vmul.f32 %v1367, %v1369
    %v1371 = vadd.f32 %v1367, %v1370
    %vm1372 = vweird.f32 %v1139
    %vm1373 = vweird.f32 %v1367
    %vm1374 = vmor %vm1372, %vm1373
    %v1375 = vsel %vm1374, %v1367, %v1371
    %v1376 = vand.u32 2147483647, %v1139
    %vm1377 = vcmp.eq.f32.partialorder %v1376, 8.507059e+37
    %v1378 = vand.u32 %v1139, 2147483648
    %v1379 = vor.u32 1.1754944e-38, %v1378
    %v1380 = vsel %vm1377, %v1379, %v1375
    %v1381 = vmul.f32 1.0, %v1380
    %v1382 = vrcp.pop %v1140
    %v1383 = vmul.f32 %v1140, %v1382
    %v1384 = vsub.f32 1.0, %v1383
    %v1385 = vmul.f32 %v1382, %v1384
    %v1386 = vadd.f32 %v1382, %v1385
    %vm1387 = vweird.f32 %v1140
    %vm1388 = vweird.f32 %v1382
    %vm1389 = vmor %vm1387, %vm1388
    %v1390 = vsel %vm1389, %v1382, %v1386
    %v1391 = vand.u32 2147483647, %v1140
    %vm1392 = vcmp.eq.f32.partialorder %v1391, 8.507059e+37
    %v1393 = vand.u32 %v1140, 2147483648
    %v1394 = vor.u32 1.1754944e-38, %v1393
    %v1395 = vsel %vm1392, %v1394, %v1390
    %v1396 = vmul.f32 1.0, %v1395
    %v1397 = vrcp.pop %v1141
    %v1398 = vmul.f32 %v1141, %v1397
    %v1399 = vsub.f32 1.0, %v1398
    %v1400 = vmul.f32 %v1397, %v1399
    %v1401 = vadd.f32 %v1397, %v1400
    %vm1402 = vweird.f32 %v1141
    %vm1403 = vweird.f32 %v1397
    %vm1404 = vmor %vm1402, %vm1403
    %v1405 = vsel %vm1404, %v1397, %v1401
    %v1406 = vand.u32 2147483647, %v1141
    %vm1407 = vcmp.eq.f32.partialorder %v1406, 8.507059e+37
    %v1408 = vand.u32 %v1141, 2147483648
    %v1409 = vor.u32 1.1754944e-38, %v1408
    %v1410 = vsel %vm1407, %v1409, %v1405
    %v1411 = vmul.f32 1.0, %v1410
    %v1412 = vrcp.pop %v1142
    %v1413 = vmul.f32 %v1142, %v1412
    %v1414 = vsub.f32 1.0, %v1413
    %v1415 = vmul.f32 %v1412, %v1414
    %v1416 = vadd.f32 %v1412, %v1415
    %vm1417 = vweird.f32 %v1142
    %vm1418 = vweird.f32 %v1412
    %vm1419 = vmor %vm1417, %vm1418
    %v1420 = vsel %vm1419, %v1412, %v1416
    %v1421 = vand.u32 2147483647, %v1142
    %vm1422 = vcmp.eq.f32.partialorder %v1421, 8.507059e+37
    %v1423 = vand.u32 %v1142, 2147483648
    %v1424 = vor.u32 1.1754944e-38, %v1423
    %v1425 = vsel %vm1422, %v1424, %v1420
    %v1426 = vmul.f32 1.0, %v1425
    %v1427 = vrcp.pop %v1143
    %v1428 = vmul.f32 %v1143, %v1427
    %v1429 = vsub.f32 1.0, %v1428
    %v1430 = vmul.f32 %v1427, %v1429
    %v1431 = vadd.f32 %v1427, %v1430
    %vm1432 = vweird.f32 %v1143
    %vm1433 = vweird.f32 %v1427
    %vm1434 = vmor %vm1432, %vm1433
    %v1435 = vsel %vm1434, %v1427, %v1431
    %v1436 = vand.u32 2147483647, %v1143
    %vm1437 = vcmp.eq.f32.partialorder %v1436, 8.507059e+37
    %v1438 = vand.u32 %v1143, 2147483648
    %v1439 = vor.u32 1.1754944e-38, %v1438
    %v1440 = vsel %vm1437, %v1439, %v1435
    %v1441 = vmul.f32 1.0, %v1440
    %v1442 = vrcp.pop %v1144
    %v1443 = vmul.f32 %v1144, %v1442
    %v1444 = vsub.f32 1.0, %v1443
    %v1445 = vmul.f32 %v1442, %v1444
    %v1446 = vadd.f32 %v1442, %v1445
    %vm1447 = vweird.f32 %v1144
    %vm1448 = vweird.f32 %v1442
    %vm1449 = vmor %vm1447, %vm1448
    %v1450 = vsel %vm1449, %v1442, %v1446
    %v1451 = vand.u32 2147483647, %v1144
    %vm1452 = vcmp.eq.f32.partialorder %v1451, 8.507059e+37
    %v1453 = vand.u32 %v1144, 2147483648
    %v1454 = vor.u32 1.1754944e-38, %v1453
    %v1455 = vsel %vm1452, %v1454, %v1450
    %v1456 = vmul.f32 1.0, %v1455
    %v1457 = vrcp.pop %v1145
    %v1458 = vmul.f32 %v1145, %v1457
    %v1459 = vsub.f32 1.0, %v1458
    %v1460 = vmul.f32 %v1457, %v1459
    %v1461 = vadd.f32 %v1457, %v1460
    %vm1462 = vweird.f32 %v1145
    %vm1463 = vweird.f32 %v1457
    %vm1464 = vmor %vm1462, %vm1463
    %v1465 = vsel %vm1464, %v1457, %v1461
    %v1466 = vand.u32 2147483647, %v1145
    %vm1467 = vcmp.eq.f32.partialorder %v1466, 8.507059e+37
    %v1468 = vand.u32 %v1145, 2147483648
    %v1469 = vor.u32 1.1754944e-38, %v1468
    %v1470 = vsel %vm1467, %v1469, %v1465
    %v1471 = vmul.f32 1.0, %v1470
    %v1472 = vrcp.pop %v1146
    %v1473 = vmul.f32 %v1146, %v1472
    %v1474 = vsub.f32 1.0, %v1473
    %v1475 = vmul.f32 %v1472, %v1474
    %v1476 = vadd.f32 %v1472, %v1475
    %vm1477 = vweird.f32 %v1146
    %vm1478 = vweird.f32 %v1472
    %vm1479 = vmor %vm1477, %vm1478
    %v1480 = vsel %vm1479, %v1472, %v1476
    %v1481 = vand.u32 2147483647, %v1146
    %vm1482 = vcmp.eq.f32.partialorder %v1481, 8.507059e+37
    %v1483 = vand.u32 %v1146, 2147483648
    %v1484 = vor.u32 1.1754944e-38, %v1483
    %v1485 = vsel %vm1482, %v1484, %v1480
    %v1486 = vmul.f32 1.0, %v1485
    %v1487 = vrcp.pop %v1147
    %v1488 = vmul.f32 %v1147, %v1487
    %v1489 = vsub.f32 1.0, %v1488
    %v1490 = vmul.f32 %v1487, %v1489
    %v1491 = vadd.f32 %v1487, %v1490
    %vm1492 = vweird.f32 %v1147
    %vm1493 = vweird.f32 %v1487
    %vm1494 = vmor %vm1492, %vm1493
    %v1495 = vsel %vm1494, %v1487, %v1491
    %v1496 = vand.u32 2147483647, %v1147
    %vm1497 = vcmp.eq.f32.partialorder %v1496, 8.507059e+37
    %v1498 = vand.u32 %v1147, 2147483648
    %v1499 = vor.u32 1.1754944e-38, %v1498
    %v1500 = vsel %vm1497, %v1499, %v1495
    %v1501 = vmul.f32 1.0, %v1500
    %v1502 = vrcp.pop %v1148
    %v1503 = vmul.f32 %v1148, %v1502
    %v1504 = vsub.f32 1.0, %v1503
    %v1505 = vmul.f32 %v1502, %v1504
    %v1506 = vadd.f32 %v1502, %v1505
    %vm1507 = vweird.f32 %v1148
    %vm1508 = vweird.f32 %v1502
    %vm1509 = vmor %vm1507, %vm1508
    %v1510 = vsel %vm1509, %v1502, %v1506
    %v1511 = vand.u32 2147483647, %v1148
    %vm1512 = vcmp.eq.f32.partialorder %v1511, 8.507059e+37
    %v1513 = vand.u32 %v1148, 2147483648
    %v1514 = vor.u32 1.1754944e-38, %v1513
    %v1515 = vsel %vm1512, %v1514, %v1510
    %v1516 = vmul.f32 1.0, %v1515
    %v1517 = vrcp.pop %v1149
    %v1518 = vmul.f32 %v1149, %v1517
    %v1519 = vsub.f32 1.0, %v1518
    %v1520 = vmul.f32 %v1517, %v1519
    %v1521 = vadd.f32 %v1517, %v1520
    %vm1522 = vweird.f32 %v1149
    %vm1523 = vweird.f32 %v1517
    %vm1524 = vmor %vm1522, %vm1523
    %v1525 = vsel %vm1524, %v1517, %v1521
    %v1526 = vand.u32 2147483647, %v1149
    %vm1527 = vcmp.eq.f32.partialorder %v1526, 8.507059e+37
    %v1528 = vand.u32 %v1149, 2147483648
    %v1529 = vor.u32 1.1754944e-38, %v1528
    %v1530 = vsel %vm1527, %v1529, %v1525
    %v1531 = vmul.f32 1.0, %v1530
    %v1532 = vrcp.pop %v1150
    %v1533 = vmul.f32 %v1150, %v1532
    %v1534 = vsub.f32 1.0, %v1533
    %v1535 = vmul.f32 %v1532, %v1534
    %v1536 = vadd.f32 %v1532, %v1535
    %vm1537 = vweird.f32 %v1150
    %vm1538 = vweird.f32 %v1532
    %vm1539 = vmor %vm1537, %vm1538
    %v1540 = vsel %vm1539, %v1532, %v1536
    %v1541 = vand.u32 2147483647, %v1150
    %vm1542 = vcmp.eq.f32.partialorder %v1541, 8.507059e+37
    %v1543 = vand.u32 %v1150, 2147483648
    %v1544 = vor.u32 1.1754944e-38, %v1543
    %v1545 = vsel %vm1542, %v1544, %v1540
    %v1546 = vmul.f32 1.0, %v1545
    %v1547 = vrcp.pop %v1151
    %v1548 = vmul.f32 %v1151, %v1547
    %v1549 = vsub.f32 1.0, %v1548
    %v1550 = vmul.f32 %v1547, %v1549
    %v1551 = vadd.f32 %v1547, %v1550
    %vm1552 = vweird.f32 %v1151
    %vm1553 = vweird.f32 %v1547
    %vm1554 = vmor %vm1552, %vm1553
    %v1555 = vsel %vm1554, %v1547, %v1551
    %v1556 = vand.u32 2147483647, %v1151
    %vm1557 = vcmp.eq.f32.partialorder %v1556, 8.507059e+37
    %v1558 = vand.u32 %v1151, 2147483648
    %v1559 = vor.u32 1.1754944e-38, %v1558
    %v1560 = vsel %vm1557, %v1559, %v1555
    %v1561 = vmul.f32 1.0, %v1560
    %v1562 = vrcp.pop %v1152
    %v1563 = vmul.f32 %v1152, %v1562
    %v1564 = vsub.f32 1.0, %v1563
    %v1565 = vmul.f32 %v1562, %v1564
    %v1566 = vadd.f32 %v1562, %v1565
    %vm1567 = vweird.f32 %v1152
    %vm1568 = vweird.f32 %v1562
    %vm1569 = vmor %vm1567, %vm1568
    %v1570 = vsel %vm1569, %v1562, %v1566
    %v1571 = vand.u32 2147483647, %v1152
    %vm1572 = vcmp.eq.f32.partialorder %v1571, 8.507059e+37
    %v1573 = vand.u32 %v1152, 2147483648
    %v1574 = vor.u32 1.1754944e-38, %v1573
    %v1575 = vsel %vm1572, %v1574, %v1570
    %v1576 = vmul.f32 1.0, %v1575
    %v1577 = vrcp.pop %v1153
    %v1578 = vmul.f32 %v1153, %v1577
    %v1579 = vsub.f32 1.0, %v1578
    %v1580 = vmul.f32 %v1577, %v1579
    %v1581 = vadd.f32 %v1577, %v1580
    %vm1582 = vweird.f32 %v1153
    %vm1583 = vweird.f32 %v1577
    %vm1584 = vmor %vm1582, %vm1583
    %v1585 = vsel %vm1584, %v1577, %v1581
    %v1586 = vand.u32 2147483647, %v1153
    %vm1587 = vcmp.eq.f32.partialorder %v1586, 8.507059e+37
    %v1588 = vand.u32 %v1153, 2147483648
    %v1589 = vor.u32 1.1754944e-38, %v1588
    %v1590 = vsel %vm1587, %v1589, %v1585
    %v1591 = vmul.f32 1.0, %v1590
    %v1592 = vrcp.pop %v1154
    %v1593 = vmul.f32 %v1154, %v1592
    %v1594 = vsub.f32 1.0, %v1593
    %v1595 = vmul.f32 %v1592, %v1594
    %v1596 = vadd.f32 %v1592, %v1595
    %vm1597 = vweird.f32 %v1154
    %vm1598 = vweird.f32 %v1592
    %vm1599 = vmor %vm1597, %vm1598
    %v1600 = vsel %vm1599, %v1592, %v1596
    %v1601 = vand.u32 2147483647, %v1154
    %vm1602 = vcmp.eq.f32.partialorder %v1601, 8.507059e+37
    %v1603 = vand.u32 %v1154, 2147483648
    %v1604 = vor.u32 1.1754944e-38, %v1603
    %v1605 = vsel %vm1602, %v1604, %v1600
    %v1606 = vmul.f32 1.0, %v1605
    %v1607 = vrcp.pop %v1155
    %v1608 = vmul.f32 %v1155, %v1607
    %v1609 = vsub.f32 1.0, %v1608
    %v1610 = vmul.f32 %v1607, %v1609
    %v1611 = vadd.f32 %v1607, %v1610
    %vm1612 = vweird.f32 %v1155
    %vm1613 = vweird.f32 %v1607
    %vm1614 = vmor %vm1612, %vm1613
    %v1615 = vsel %vm1614, %v1607, %v1611
    %v1616 = vand.u32 2147483647, %v1155
    %vm1617 = vcmp.eq.f32.partialorder %v1616, 8.507059e+37
    %v1618 = vand.u32 %v1155, 2147483648
    %v1619 = vor.u32 1.1754944e-38, %v1618
    %v1620 = vsel %vm1617, %v1619, %v1615
    %v1621 = vmul.f32 1.0, %v1620
    %v1622 = vrcp.pop %v1156
    %v1623 = vmul.f32 %v1156, %v1622
    %v1624 = vsub.f32 1.0, %v1623
    %v1625 = vmul.f32 %v1622, %v1624
    %v1626 = vadd.f32 %v1622, %v1625
    %vm1627 = vweird.f32 %v1156
    %vm1628 = vweird.f32 %v1622
    %vm1629 = vmor %vm1627, %vm1628
    %v1630 = vsel %vm1629, %v1622, %v1626
    %v1631 = vand.u32 2147483647, %v1156
    %vm1632 = vcmp.eq.f32.partialorder %v1631, 8.507059e+37
    %v1633 = vand.u32 %v1156, 2147483648
    %v1634 = vor.u32 1.1754944e-38, %v1633
    %v1635 = vsel %vm1632, %v1634, %v1630
    %v1636 = vmul.f32 1.0, %v1635
    %v1637 = vmul.f32 %v883, %v1171
    %v1638 = vmul.f32 %v924, %v1186
    %v1639 = vmul.f32 %v965, %v1201
    %v1640 = vmul.f32 %v1006, %v1216
    %v1641 = vmul.f32 %v886, %v1231
    %v1642 = vmul.f32 %v927, %v1246
    %v1643 = vmul.f32 %v968, %v1261
    %v1644 = vmul.f32 %v1009, %v1276
    %v1645 = vmul.f32 %v889, %v1291
    %v1646 = vmul.f32 %v930, %v1306
    %v1647 = vmul.f32 %v971, %v1321
    %v1648 = vmul.f32 %v1012, %v1336
    %v1649 = vmul.f32 %v892, %v1351
    %v1650 = vmul.f32 %v933, %v1366
    %v1651 = vmul.f32 %v974, %v1381
    %v1652 = vmul.f32 %v1015, %v1396
    %v1653 = vmul.f32 %v895, %v1411
    %v1654 = vmul.f32 %v936, %v1426
    %v1655 = vmul.f32 %v977, %v1441
    %v1656 = vmul.f32 %v1018, %v1456
    %v1657 = vmul.f32 %v898, %v1471
    %v1658 = vmul.f32 %v939, %v1486
    %v1659 = vmul.f32 %v980, %v1501
    %v1660 = vmul.f32 %v1021, %v1516
    %v1661 = vmul.f32 %v901, %v1531
    %v1662 = vmul.f32 %v942, %v1546
    %v1663 = vmul.f32 %v983, %v1561
    %v1664 = vmul.f32 %v1024, %v1576
    %v1665 = vmul.f32 %v904, %v1591
    %v1666 = vmul.f32 %v945, %v1606
    %v1667 = vmul.f32 %v986, %v1621
    %v1668 = vmul.f32 %v1027, %v1636
    %s1669 = scalar_lea.vmem %s4, 64
    %v1670 = vld [vmem:[%s1669] sm:$0xff]
    %v1671 = vld [vmem:[%s1669 + $0x8] sm:$0xff]
    %v1672 = vld [vmem:[%s1669 + $0x10] sm:$0xff]
    %v1673 = vld [vmem:[%s1669 + $0x18] sm:$0xff]
    %v1674 = vld [vmem:[%s1669 + $0x20] sm:$0xff]
    %v1675 = vld [vmem:[%s1669 + $0x28] sm:$0xff]
    %v1676 = vld [vmem:[%s1669 + $0x30] sm:$0xff]
    %v1677 = vld [vmem:[%s1669 + $0x38] sm:$0xff]
    %1678 = vset.pattern.permute.xlu0 1
    %1679 = vperm.xlu0 %1678, %v792
    %v1680 = vpop.permute.xlu0 %1679
    %1682 = vset.pattern.permute.xlu0 1
    %1683 = vperm.xlu0 %1682, %v793
    %v1684 = vpop.permute.xlu0 %1683
    %1686 = vset.pattern.permute.xlu0 1
    %1687 = vperm.xlu0 %1686, %v794
    %v1688 = vpop.permute.xlu0 %1687
    %1690 = vset.pattern.permute.xlu0 1
    %1691 = vperm.xlu0 %1690, %v795
    %v1692 = vpop.permute.xlu0 %1691
    %1694 = vset.pattern.permute.xlu0 1
    %1695 = vperm.xlu0 %1694, %v796
    %v1696 = vpop.permute.xlu0 %1695
    %1698 = vset.pattern.permute.xlu0 1
    %1699 = vperm.xlu0 %1698, %v797
    %v1700 = vpop.permute.xlu0 %1699
    %1702 = vset.pattern.permute.xlu0 1
    %1703 = vperm.xlu0 %1702, %v798
    %v1704 = vpop.permute.xlu0 %1703
    %1706 = vset.pattern.permute.xlu0 1
    %1707 = vperm.xlu0 %1706, %v799
    %v1708 = vpop.permute.xlu0 %1707
    %v1711 = vsel %vm840, %v1670, 0
    %v1714 = vsel %vm840, %v1671, 0
    %v1717 = vsel %vm840, %v1672, 0
    %v1720 = vsel %vm840, %v1673, 0
    %v1723 = vsel %vm840, %v1674, 0
    %v1726 = vsel %vm840, %v1675, 0
    %v1729 = vsel %vm840, %v1676, 0
    %v1732 = vsel %vm840, %v1677, 0
    %1734 = vmatpush.msra.mxu0 0.0
    %1735 = vmatpush.msra.mxu0 0.0
    %1736 = vmatpush.msra.mxu0 0.0
    %1737 = vmatpush.msra.mxu0 0.0
    %1738 = vmatpush.msra.mxu0 0.0
    %1739 = vmatpush.msra.mxu0 0.0
    %1740 = vmatpush.msra.mxu0 0.0
    %1741 = vmatpush.msra.mxu0 0.0
    %1742 = vmatpush.msra.mxu0 %v1665
    %1743 = vmatpush.msra.mxu0 %v1661
    %1744 = vmatpush.msra.mxu0 %v1657
    %1745 = vmatpush.msra.mxu0 %v1653
    %1746 = vmatpush.msra.mxu0 %v1649
    %1747 = vmatpush.msra.mxu0 %v1645
    %1748 = vmatpush.msra.mxu0 %v1641
    %1749 = vmatpush.msra.mxu0 %v1637
    %1750 = vmatmul.f32.gmra.mxu0 %v1711
    %v1751 = vpop.f32.mrf.mxu0
    %v1752 = vadd.f32 %v1680, %v1751
    %1753 = vmatmul.f32.gmra.mxu0 %v1714
    %v1754 = vpop.f32.mrf.mxu0
    %v1755 = vadd.f32 %v1684, %v1754
    %1756 = vmatmul.f32.gmra.mxu0 %v1717
    %v1757 = vpop.f32.mrf.mxu0
    %v1758 = vadd.f32 %v1688, %v1757
    %1759 = vmatmul.f32.gmra.mxu0 %v1720
    %v1760 = vpop.f32.mrf.mxu0
    %v1761 = vadd.f32 %v1692, %v1760
    %1762 = vmatmul.f32.gmra.mxu0 %v1723
    %v1763 = vpop.f32.mrf.mxu0
    %v1764 = vadd.f32 %v1696, %v1763
    %1765 = vmatmul.f32.gmra.mxu0 %v1726
    %v1766 = vpop.f32.mrf.mxu0
    %v1767 = vadd.f32 %v1700, %v1766
    %1768 = vmatmul.f32.gmra.mxu0 %v1729
    %v1769 = vpop.f32.mrf.mxu0
    %v1770 = vadd.f32 %v1704, %v1769
    %1771 = vmatmul.f32.gmra.mxu0 %v1732
    %v1772 = vpop.f32.mrf.mxu0
    %v1773 = vadd.f32 %v1708, %v1772
    %1774 = vdwg.mxu0
    %1775 = vmatpush.msra.mxu0 0.0
    %1776 = vmatpush.msra.mxu0 0.0
    %1777 = vmatpush.msra.mxu0 0.0
    %1778 = vmatpush.msra.mxu0 0.0
    %1779 = vmatpush.msra.mxu0 0.0
    %1780 = vmatpush.msra.mxu0 0.0
    %1781 = vmatpush.msra.mxu0 0.0
    %1782 = vmatpush.msra.mxu0 0.0
    %1783 = vmatpush.msra.mxu0 %v1666
    %1784 = vmatpush.msra.mxu0 %v1662
    %1785 = vmatpush.msra.mxu0 %v1658
    %1786 = vmatpush.msra.mxu0 %v1654
    %1787 = vmatpush.msra.mxu0 %v1650
    %1788 = vmatpush.msra.mxu0 %v1646
    %1789 = vmatpush.msra.mxu0 %v1642
    %1790 = vmatpush.msra.mxu0 %v1638
    %1791 = vmatmul.f32.gmra.mxu0 %v1711
    %v1792 = vpop.f32.mrf.mxu0
    %v1793 = vadd.f32 %v1680, %v1792
    %1794 = vmatmul.f32.gmra.mxu0 %v1714
    %v1795 = vpop.f32.mrf.mxu0
    %v1796 = vadd.f32 %v1684, %v1795
    %1797 = vmatmul.f32.gmra.mxu0 %v1717
    %v1798 = vpop.f32.mrf.mxu0
    %v1799 = vadd.f32 %v1688, %v1798
    %1800 = vmatmul.f32.gmra.mxu0 %v1720
    %v1801 = vpop.f32.mrf.mxu0
    %v1802 = vadd.f32 %v1692, %v1801
    %1803 = vmatmul.f32.gmra.mxu0 %v1723
    %v1804 = vpop.f32.mrf.mxu0
    %v1805 = vadd.f32 %v1696, %v1804
    %1806 = vmatmul.f32.gmra.mxu0 %v1726
    %v1807 = vpop.f32.mrf.mxu0
    %v1808 = vadd.f32 %v1700, %v1807
    %1809 = vmatmul.f32.gmra.mxu0 %v1729
    %v1810 = vpop.f32.mrf.mxu0
    %v1811 = vadd.f32 %v1704, %v1810
    %1812 = vmatmul.f32.gmra.mxu0 %v1732
    %v1813 = vpop.f32.mrf.mxu0
    %v1814 = vadd.f32 %v1708, %v1813
    %1815 = vdwg.mxu0
    %1816 = vmatpush.msra.mxu0 0.0
    %1817 = vmatpush.msra.mxu0 0.0
    %1818 = vmatpush.msra.mxu0 0.0
    %1819 = vmatpush.msra.mxu0 0.0
    %1820 = vmatpush.msra.mxu0 0.0
    %1821 = vmatpush.msra.mxu0 0.0
    %1822 = vmatpush.msra.mxu0 0.0
    %1823 = vmatpush.msra.mxu0 0.0
    %1824 = vmatpush.msra.mxu0 %v1667
    %1825 = vmatpush.msra.mxu0 %v1663
    %1826 = vmatpush.msra.mxu0 %v1659
    %1827 = vmatpush.msra.mxu0 %v1655
    %1828 = vmatpush.msra.mxu0 %v1651
    %1829 = vmatpush.msra.mxu0 %v1647
    %1830 = vmatpush.msra.mxu0 %v1643
    %1831 = vmatpush.msra.mxu0 %v1639
    %1832 = vmatmul.f32.gmra.mxu0 %v1711
    %v1833 = vpop.f32.mrf.mxu0
    %v1834 = vadd.f32 %v1680, %v1833
    %1835 = vmatmul.f32.gmra.mxu0 %v1714
    %v1836 = vpop.f32.mrf.mxu0
    %v1837 = vadd.f32 %v1684, %v1836
    %1838 = vmatmul.f32.gmra.mxu0 %v1717
    %v1839 = vpop.f32.mrf.mxu0
    %v1840 = vadd.f32 %v1688, %v1839
    %1841 = vmatmul.f32.gmra.mxu0 %v1720
    %v1842 = vpop.f32.mrf.mxu0
    %v1843 = vadd.f32 %v1692, %v1842
    %1844 = vmatmul.f32.gmra.mxu0 %v1723
    %v1845 = vpop.f32.mrf.mxu0
    %v1846 = vadd.f32 %v1696, %v1845
    %1847 = vmatmul.f32.gmra.mxu0 %v1726
    %v1848 = vpop.f32.mrf.mxu0
    %v1849 = vadd.f32 %v1700, %v1848
    %1850 = vmatmul.f32.gmra.mxu0 %v1729
    %v1851 = vpop.f32.mrf.mxu0
    %v1852 = vadd.f32 %v1704, %v1851
    %1853 = vmatmul.f32.gmra.mxu0 %v1732
    %v1854 = vpop.f32.mrf.mxu0
    %v1855 = vadd.f32 %v1708, %v1854
    %1856 = vdwg.mxu0
    %1857 = vmatpush.msra.mxu0 0.0
    %1858 = vmatpush.msra.mxu0 0.0
    %1859 = vmatpush.msra.mxu0 0.0
    %1860 = vmatpush.msra.mxu0 0.0
    %1861 = vmatpush.msra.mxu0 0.0
    %1862 = vmatpush.msra.mxu0 0.0
    %1863 = vmatpush.msra.mxu0 0.0
    %1864 = vmatpush.msra.mxu0 0.0
    %1865 = vmatpush.msra.mxu0 %v1668
    %1866 = vmatpush.msra.mxu0 %v1664
    %1867 = vmatpush.msra.mxu0 %v1660
    %1868 = vmatpush.msra.mxu0 %v1656
    %1869 = vmatpush.msra.mxu0 %v1652
    %1870 = vmatpush.msra.mxu0 %v1648
    %1871 = vmatpush.msra.mxu0 %v1644
    %1872 = vmatpush.msra.mxu0 %v1640
    %1873 = vmatmul.f32.gmra.mxu0 %v1711
    %v1874 = vpop.f32.mrf.mxu0
    %v1875 = vadd.f32 %v1680, %v1874
    %1876 = vmatmul.f32.gmra.mxu0 %v1714
    %v1877 = vpop.f32.mrf.mxu0
    %v1878 = vadd.f32 %v1684, %v1877
    %1879 = vmatmul.f32.gmra.mxu0 %v1717
    %v1880 = vpop.f32.mrf.mxu0
    %v1881 = vadd.f32 %v1688, %v1880
    %1882 = vmatmul.f32.gmra.mxu0 %v1720
    %v1883 = vpop.f32.mrf.mxu0
    %v1884 = vadd.f32 %v1692, %v1883
    %1885 = vmatmul.f32.gmra.mxu0 %v1723
    %v1886 = vpop.f32.mrf.mxu0
    %v1887 = vadd.f32 %v1696, %v1886
    %1888 = vmatmul.f32.gmra.mxu0 %v1726
    %v1889 = vpop.f32.mrf.mxu0
    %v1890 = vadd.f32 %v1700, %v1889
    %1891 = vmatmul.f32.gmra.mxu0 %v1729
    %v1892 = vpop.f32.mrf.mxu0
    %v1893 = vadd.f32 %v1704, %v1892
    %1894 = vmatmul.f32.gmra.mxu0 %v1732
    %v1895 = vpop.f32.mrf.mxu0
    %v1896 = vadd.f32 %v1708, %v1895
    %1897 = vdwg.mxu0
    %v1898 = vxor.u32 %v1752, 2147483648
    %v1899 = vxor.u32 %v1793, 2147483648
    %v1900 = vxor.u32 %v1834, 2147483648
    %v1901 = vxor.u32 %v1875, 2147483648
    %v1902 = vxor.u32 %v1755, 2147483648
    %v1903 = vxor.u32 %v1796, 2147483648
    %v1904 = vxor.u32 %v1837, 2147483648
    %v1905 = vxor.u32 %v1878, 2147483648
    %v1906 = vxor.u32 %v1758, 2147483648
    %v1907 = vxor.u32 %v1799, 2147483648
    %v1908 = vxor.u32 %v1840, 2147483648
    %v1909 = vxor.u32 %v1881, 2147483648
    %v1910 = vxor.u32 %v1761, 2147483648
    %v1911 = vxor.u32 %v1802, 2147483648
    %v1912 = vxor.u32 %v1843, 2147483648
    %v1913 = vxor.u32 %v1884, 2147483648
    %v1914 = vxor.u32 %v1764, 2147483648
    %v1915 = vxor.u32 %v1805, 2147483648
    %v1916 = vxor.u32 %v1846, 2147483648
    %v1917 = vxor.u32 %v1887, 2147483648
    %v1918 = vxor.u32 %v1767, 2147483648
    %v1919 = vxor.u32 %v1808, 2147483648
    %v1920 = vxor.u32 %v1849, 2147483648
    %v1921 = vxor.u32 %v1890, 2147483648
    %v1922 = vxor.u32 %v1770, 2147483648
    %v1923 = vxor.u32 %v1811, 2147483648
    %v1924 = vxor.u32 %v1852, 2147483648
    %v1925 = vxor.u32 %v1893, 2147483648
    %v1926 = vxor.u32 %v1773, 2147483648
    %v1927 = vxor.u32 %v1814, 2147483648
    %v1928 = vxor.u32 %v1855, 2147483648
    %v1929 = vxor.u32 %v1896, 2147483648
    %v1930 = vmul.f32 %v1898, 1.442695
    %v1931 = vpow.pop %v1930
    %v1932 = vmul.f32 %v1899, 1.442695
    %v1933 = vpow.pop %v1932
    %v1934 = vmul.f32 %v1900, 1.442695
    %v1935 = vpow.pop %v1934
    %v1936 = vmul.f32 %v1901, 1.442695
    %v1937 = vpow.pop %v1936
    %v1938 = vmul.f32 %v1902, 1.442695
    %v1939 = vpow.pop %v1938
    %v1940 = vmul.f32 %v1903, 1.442695
    %v1941 = vpow.pop %v1940
    %v1942 = vmul.f32 %v1904, 1.442695
    %v1943 = vpow.pop %v1942
    %v1944 = vmul.f32 %v1905, 1.442695
    %v1945 = vpow.pop %v1944
    %v1946 = vmul.f32 %v1906, 1.442695
    %v1947 = vpow.pop %v1946
    %v1948 = vmul.f32 %v1907, 1.442695
    %v1949 = vpow.pop %v1948
    %v1950 = vmul.f32 %v1908, 1.442695
    %v1951 = vpow.pop %v1950
    %v1952 = vmul.f32 %v1909, 1.442695
    %v1953 = vpow.pop %v1952
    %v1954 = vmul.f32 %v1910, 1.442695
    %v1955 = vpow.pop %v1954
    %v1956 = vmul.f32 %v1911, 1.442695
    %v1957 = vpow.pop %v1956
    %v1958 = vmul.f32 %v1912, 1.442695
    %v1959 = vpow.pop %v1958
    %v1960 = vmul.f32 %v1913, 1.442695
    %v1961 = vpow.pop %v1960
    %v1962 = vmul.f32 %v1914, 1.442695
    %v1963 = vpow.pop %v1962
    %v1964 = vmul.f32 %v1915, 1.442695
    %v1965 = vpow.pop %v1964
    %v1966 = vmul.f32 %v1916, 1.442695
    %v1967 = vpow.pop %v1966
    %v1968 = vmul.f32 %v1917, 1.442695
    %v1969 = vpow.pop %v1968
    %v1970 = vmul.f32 %v1918, 1.442695
    %v1971 = vpow.pop %v1970
    %v1972 = vmul.f32 %v1919, 1.442695
    %v1973 = vpow.pop %v1972
    %v1974 = vmul.f32 %v1920, 1.442695
    %v1975 = vpow.pop %v1974
    %v1976 = vmul.f32 %v1921, 1.442695
    %v1977 = vpow.pop %v1976
    %v1978 = vmul.f32 %v1922, 1.442695
    %v1979 = vpow.pop %v1978
    %v1980 = vmul.f32 %v1923, 1.442695
    %v1981 = vpow.pop %v1980
    %v1982 = vmul.f32 %v1924, 1.442695
    %v1983 = vpow.pop %v1982
    %v1984 = vmul.f32 %v1925, 1.442695
    %v1985 = vpow.pop %v1984
    %v1986 = vmul.f32 %v1926, 1.442695
    %v1987 = vpow.pop %v1986
    %v1988 = vmul.f32 %v1927, 1.442695
    %v1989 = vpow.pop %v1988
    %v1990 = vmul.f32 %v1928, 1.442695
    %v1991 = vpow.pop %v1990
    %v1992 = vmul.f32 %v1929, 1.442695
    %v1993 = vpow.pop %v1992
    %v1994 = vadd.f32 %v1931, 1.0
    %v1995 = vadd.f32 %v1933, 1.0
    %v1996 = vadd.f32 %v1935, 1.0
    %v1997 = vadd.f32 %v1937, 1.0
    %v1998 = vadd.f32 %v1939, 1.0
    %v1999 = vadd.f32 %v1941, 1.0
    %v2000 = vadd.f32 %v1943, 1.0
    %v2001 = vadd.f32 %v1945, 1.0
    %v2002 = vadd.f32 %v1947, 1.0
    %v2003 = vadd.f32 %v1949, 1.0
    %v2004 = vadd.f32 %v1951, 1.0
    %v2005 = vadd.f32 %v1953, 1.0
    %v2006 = vadd.f32 %v1955, 1.0
    %v2007 = vadd.f32 %v1957, 1.0
    %v2008 = vadd.f32 %v1959, 1.0
    %v2009 = vadd.f32 %v1961, 1.0
    %v2010 = vadd.f32 %v1963, 1.0
    %v2011 = vadd.f32 %v1965, 1.0
    %v2012 = vadd.f32 %v1967, 1.0
    %v2013 = vadd.f32 %v1969, 1.0
    %v2014 = vadd.f32 %v1971, 1.0
    %v2015 = vadd.f32 %v1973, 1.0
    %v2016 = vadd.f32 %v1975, 1.0
    %v2017 = vadd.f32 %v1977, 1.0
    %v2018 = vadd.f32 %v1979, 1.0
    %v2019 = vadd.f32 %v1981, 1.0
    %v2020 = vadd.f32 %v1983, 1.0
    %v2021 = vadd.f32 %v1985, 1.0
    %v2022 = vadd.f32 %v1987, 1.0
    %v2023 = vadd.f32 %v1989, 1.0
    %v2024 = vadd.f32 %v1991, 1.0
    %v2025 = vadd.f32 %v1993, 1.0
    %v2026 = vrcp.pop %v1994
    %v2027 = vmul.f32 %v1994, %v2026
    %v2028 = vsub.f32 1.0, %v2027
    %v2029 = vmul.f32 %v2026, %v2028
    %v2030 = vadd.f32 %v2026, %v2029
    %vm2031 = vweird.f32 %v1994
    %vm2032 = vweird.f32 %v2026
    %vm2033 = vmor %vm2031, %vm2032
    %v2034 = vsel %vm2033, %v2026, %v2030
    %v2035 = vand.u32 2147483647, %v1994
    %vm2036 = vcmp.eq.f32.partialorder %v2035, 8.507059e+37
    %v2037 = vand.u32 %v1994, 2147483648
    %v2038 = vor.u32 1.1754944e-38, %v2037
    %v2039 = vsel %vm2036, %v2038, %v2034
    %v2040 = vmul.f32 1.0, %v2039
    %v2041 = vrcp.pop %v1995
    %v2042 = vmul.f32 %v1995, %v2041
    %v2043 = vsub.f32 1.0, %v2042
    %v2044 = vmul.f32 %v2041, %v2043
    %v2045 = vadd.f32 %v2041, %v2044
    %vm2046 = vweird.f32 %v1995
    %vm2047 = vweird.f32 %v2041
    %vm2048 = vmor %vm2046, %vm2047
    %v2049 = vsel %vm2048, %v2041, %v2045
    %v2050 = vand.u32 2147483647, %v1995
    %vm2051 = vcmp.eq.f32.partialorder %v2050, 8.507059e+37
    %v2052 = vand.u32 %v1995, 2147483648
    %v2053 = vor.u32 1.1754944e-38, %v2052
    %v2054 = vsel %vm2051, %v2053, %v2049
    %v2055 = vmul.f32 1.0, %v2054
    %v2056 = vrcp.pop %v1996
    %v2057 = vmul.f32 %v1996, %v2056
    %v2058 = vsub.f32 1.0, %v2057
    %v2059 = vmul.f32 %v2056, %v2058
    %v2060 = vadd.f32 %v2056, %v2059
    %vm2061 = vweird.f32 %v1996
    %vm2062 = vweird.f32 %v2056
    %vm2063 = vmor %vm2061, %vm2062
    %v2064 = vsel %vm2063, %v2056, %v2060
    %v2065 = vand.u32 2147483647, %v1996
    %vm2066 = vcmp.eq.f32.partialorder %v2065, 8.507059e+37
    %v2067 = vand.u32 %v1996, 2147483648
    %v2068 = vor.u32 1.1754944e-38, %v2067
    %v2069 = vsel %vm2066, %v2068, %v2064
    %v2070 = vmul.f32 1.0, %v2069
    %v2071 = vrcp.pop %v1997
    %v2072 = vmul.f32 %v1997, %v2071
    %v2073 = vsub.f32 1.0, %v2072
    %v2074 = vmul.f32 %v2071, %v2073
    %v2075 = vadd.f32 %v2071, %v2074
    %vm2076 = vweird.f32 %v1997
    %vm2077 = vweird.f32 %v2071
    %vm2078 = vmor %vm2076, %vm2077
    %v2079 = vsel %vm2078, %v2071, %v2075
    %v2080 = vand.u32 2147483647, %v1997
    %vm2081 = vcmp.eq.f32.partialorder %v2080, 8.507059e+37
    %v2082 = vand.u32 %v1997, 2147483648
    %v2083 = vor.u32 1.1754944e-38, %v2082
    %v2084 = vsel %vm2081, %v2083, %v2079
    %v2085 = vmul.f32 1.0, %v2084
    %v2086 = vrcp.pop %v1998
    %v2087 = vmul.f32 %v1998, %v2086
    %v2088 = vsub.f32 1.0, %v2087
    %v2089 = vmul.f32 %v2086, %v2088
    %v2090 = vadd.f32 %v2086, %v2089
    %vm2091 = vweird.f32 %v1998
    %vm2092 = vweird.f32 %v2086
    %vm2093 = vmor %vm2091, %vm2092
    %v2094 = vsel %vm2093, %v2086, %v2090
    %v2095 = vand.u32 2147483647, %v1998
    %vm2096 = vcmp.eq.f32.partialorder %v2095, 8.507059e+37
    %v2097 = vand.u32 %v1998, 2147483648
    %v2098 = vor.u32 1.1754944e-38, %v2097
    %v2099 = vsel %vm2096, %v2098, %v2094
    %v2100 = vmul.f32 1.0, %v2099
    %v2101 = vrcp.pop %v1999
    %v2102 = vmul.f32 %v1999, %v2101
    %v2103 = vsub.f32 1.0, %v2102
    %v2104 = vmul.f32 %v2101, %v2103
    %v2105 = vadd.f32 %v2101, %v2104
    %vm2106 = vweird.f32 %v1999
    %vm2107 = vweird.f32 %v2101
    %vm2108 = vmor %vm2106, %vm2107
    %v2109 = vsel %vm2108, %v2101, %v2105
    %v2110 = vand.u32 2147483647, %v1999
    %vm2111 = vcmp.eq.f32.partialorder %v2110, 8.507059e+37
    %v2112 = vand.u32 %v1999, 2147483648
    %v2113 = vor.u32 1.1754944e-38, %v2112
    %v2114 = vsel %vm2111, %v2113, %v2109
    %v2115 = vmul.f32 1.0, %v2114
    %v2116 = vrcp.pop %v2000
    %v2117 = vmul.f32 %v2000, %v2116
    %v2118 = vsub.f32 1.0, %v2117
    %v2119 = vmul.f32 %v2116, %v2118
    %v2120 = vadd.f32 %v2116, %v2119
    %vm2121 = vweird.f32 %v2000
    %vm2122 = vweird.f32 %v2116
    %vm2123 = vmor %vm2121, %vm2122
    %v2124 = vsel %vm2123, %v2116, %v2120
    %v2125 = vand.u32 2147483647, %v2000
    %vm2126 = vcmp.eq.f32.partialorder %v2125, 8.507059e+37
    %v2127 = vand.u32 %v2000, 2147483648
    %v2128 = vor.u32 1.1754944e-38, %v2127
    %v2129 = vsel %vm2126, %v2128, %v2124
    %v2130 = vmul.f32 1.0, %v2129
    %v2131 = vrcp.pop %v2001
    %v2132 = vmul.f32 %v2001, %v2131
    %v2133 = vsub.f32 1.0, %v2132
    %v2134 = vmul.f32 %v2131, %v2133
    %v2135 = vadd.f32 %v2131, %v2134
    %vm2136 = vweird.f32 %v2001
    %vm2137 = vweird.f32 %v2131
    %vm2138 = vmor %vm2136, %vm2137
    %v2139 = vsel %vm2138, %v2131, %v2135
    %v2140 = vand.u32 2147483647, %v2001
    %vm2141 = vcmp.eq.f32.partialorder %v2140, 8.507059e+37
    %v2142 = vand.u32 %v2001, 2147483648
    %v2143 = vor.u32 1.1754944e-38, %v2142
    %v2144 = vsel %vm2141, %v2143, %v2139
    %v2145 = vmul.f32 1.0, %v2144
    %v2146 = vrcp.pop %v2002
    %v2147 = vmul.f32 %v2002, %v2146
    %v2148 = vsub.f32 1.0, %v2147
    %v2149 = vmul.f32 %v2146, %v2148
    %v2150 = vadd.f32 %v2146, %v2149
    %vm2151 = vweird.f32 %v2002
    %vm2152 = vweird.f32 %v2146
    %vm2153 = vmor %vm2151, %vm2152
    %v2154 = vsel %vm2153, %v2146, %v2150
    %v2155 = vand.u32 2147483647, %v2002
    %vm2156 = vcmp.eq.f32.partialorder %v2155, 8.507059e+37
    %v2157 = vand.u32 %v2002, 2147483648
    %v2158 = vor.u32 1.1754944e-38, %v2157
    %v2159 = vsel %vm2156, %v2158, %v2154
    %v2160 = vmul.f32 1.0, %v2159
    %v2161 = vrcp.pop %v2003
    %v2162 = vmul.f32 %v2003, %v2161
    %v2163 = vsub.f32 1.0, %v2162
    %v2164 = vmul.f32 %v2161, %v2163
    %v2165 = vadd.f32 %v2161, %v2164
    %vm2166 = vweird.f32 %v2003
    %vm2167 = vweird.f32 %v2161
    %vm2168 = vmor %vm2166, %vm2167
    %v2169 = vsel %vm2168, %v2161, %v2165
    %v2170 = vand.u32 2147483647, %v2003
    %vm2171 = vcmp.eq.f32.partialorder %v2170, 8.507059e+37
    %v2172 = vand.u32 %v2003, 2147483648
    %v2173 = vor.u32 1.1754944e-38, %v2172
    %v2174 = vsel %vm2171, %v2173, %v2169
    %v2175 = vmul.f32 1.0, %v2174
    %v2176 = vrcp.pop %v2004
    %v2177 = vmul.f32 %v2004, %v2176
    %v2178 = vsub.f32 1.0, %v2177
    %v2179 = vmul.f32 %v2176, %v2178
    %v2180 = vadd.f32 %v2176, %v2179
    %vm2181 = vweird.f32 %v2004
    %vm2182 = vweird.f32 %v2176
    %vm2183 = vmor %vm2181, %vm2182
    %v2184 = vsel %vm2183, %v2176, %v2180
    %v2185 = vand.u32 2147483647, %v2004
    %vm2186 = vcmp.eq.f32.partialorder %v2185, 8.507059e+37
    %v2187 = vand.u32 %v2004, 2147483648
    %v2188 = vor.u32 1.1754944e-38, %v2187
    %v2189 = vsel %vm2186, %v2188, %v2184
    %v2190 = vmul.f32 1.0, %v2189
    %v2191 = vrcp.pop %v2005
    %v2192 = vmul.f32 %v2005, %v2191
    %v2193 = vsub.f32 1.0, %v2192
    %v2194 = vmul.f32 %v2191, %v2193
    %v2195 = vadd.f32 %v2191, %v2194
    %vm2196 = vweird.f32 %v2005
    %vm2197 = vweird.f32 %v2191
    %vm2198 = vmor %vm2196, %vm2197
    %v2199 = vsel %vm2198, %v2191, %v2195
    %v2200 = vand.u32 2147483647, %v2005
    %vm2201 = vcmp.eq.f32.partialorder %v2200, 8.507059e+37
    %v2202 = vand.u32 %v2005, 2147483648
    %v2203 = vor.u32 1.1754944e-38, %v2202
    %v2204 = vsel %vm2201, %v2203, %v2199
    %v2205 = vmul.f32 1.0, %v2204
    %v2206 = vrcp.pop %v2006
    %v2207 = vmul.f32 %v2006, %v2206
    %v2208 = vsub.f32 1.0, %v2207
    %v2209 = vmul.f32 %v2206, %v2208
    %v2210 = vadd.f32 %v2206, %v2209
    %vm2211 = vweird.f32 %v2006
    %vm2212 = vweird.f32 %v2206
    %vm2213 = vmor %vm2211, %vm2212
    %v2214 = vsel %vm2213, %v2206, %v2210
    %v2215 = vand.u32 2147483647, %v2006
    %vm2216 = vcmp.eq.f32.partialorder %v2215, 8.507059e+37
    %v2217 = vand.u32 %v2006, 2147483648
    %v2218 = vor.u32 1.1754944e-38, %v2217
    %v2219 = vsel %vm2216, %v2218, %v2214
    %v2220 = vmul.f32 1.0, %v2219
    %v2221 = vrcp.pop %v2007
    %v2222 = vmul.f32 %v2007, %v2221
    %v2223 = vsub.f32 1.0, %v2222
    %v2224 = vmul.f32 %v2221, %v2223
    %v2225 = vadd.f32 %v2221, %v2224
    %vm2226 = vweird.f32 %v2007
    %vm2227 = vweird.f32 %v2221
    %vm2228 = vmor %vm2226, %vm2227
    %v2229 = vsel %vm2228, %v2221, %v2225
    %v2230 = vand.u32 2147483647, %v2007
    %vm2231 = vcmp.eq.f32.partialorder %v2230, 8.507059e+37
    %v2232 = vand.u32 %v2007, 2147483648
    %v2233 = vor.u32 1.1754944e-38, %v2232
    %v2234 = vsel %vm2231, %v2233, %v2229
    %v2235 = vmul.f32 1.0, %v2234
    %v2236 = vrcp.pop %v2008
    %v2237 = vmul.f32 %v2008, %v2236
    %v2238 = vsub.f32 1.0, %v2237
    %v2239 = vmul.f32 %v2236, %v2238
    %v2240 = vadd.f32 %v2236, %v2239
    %vm2241 = vweird.f32 %v2008
    %vm2242 = vweird.f32 %v2236
    %vm2243 = vmor %vm2241, %vm2242
    %v2244 = vsel %vm2243, %v2236, %v2240
    %v2245 = vand.u32 2147483647, %v2008
    %vm2246 = vcmp.eq.f32.partialorder %v2245, 8.507059e+37
    %v2247 = vand.u32 %v2008, 2147483648
    %v2248 = vor.u32 1.1754944e-38, %v2247
    %v2249 = vsel %vm2246, %v2248, %v2244
    %v2250 = vmul.f32 1.0, %v2249
    %v2251 = vrcp.pop %v2009
    %v2252 = vmul.f32 %v2009, %v2251
    %v2253 = vsub.f32 1.0, %v2252
    %v2254 = vmul.f32 %v2251, %v2253
    %v2255 = vadd.f32 %v2251, %v2254
    %vm2256 = vweird.f32 %v2009
    %vm2257 = vweird.f32 %v2251
    %vm2258 = vmor %vm2256, %vm2257
    %v2259 = vsel %vm2258, %v2251, %v2255
    %v2260 = vand.u32 2147483647, %v2009
    %vm2261 = vcmp.eq.f32.partialorder %v2260, 8.507059e+37
    %v2262 = vand.u32 %v2009, 2147483648
    %v2263 = vor.u32 1.1754944e-38, %v2262
    %v2264 = vsel %vm2261, %v2263, %v2259
    %v2265 = vmul.f32 1.0, %v2264
    %v2266 = vrcp.pop %v2010
    %v2267 = vmul.f32 %v2010, %v2266
    %v2268 = vsub.f32 1.0, %v2267
    %v2269 = vmul.f32 %v2266, %v2268
    %v2270 = vadd.f32 %v2266, %v2269
    %vm2271 = vweird.f32 %v2010
    %vm2272 = vweird.f32 %v2266
    %vm2273 = vmor %vm2271, %vm2272
    %v2274 = vsel %vm2273, %v2266, %v2270
    %v2275 = vand.u32 2147483647, %v2010
    %vm2276 = vcmp.eq.f32.partialorder %v2275, 8.507059e+37
    %v2277 = vand.u32 %v2010, 2147483648
    %v2278 = vor.u32 1.1754944e-38, %v2277
    %v2279 = vsel %vm2276, %v2278, %v2274
    %v2280 = vmul.f32 1.0, %v2279
    %v2281 = vrcp.pop %v2011
    %v2282 = vmul.f32 %v2011, %v2281
    %v2283 = vsub.f32 1.0, %v2282
    %v2284 = vmul.f32 %v2281, %v2283
    %v2285 = vadd.f32 %v2281, %v2284
    %vm2286 = vweird.f32 %v2011
    %vm2287 = vweird.f32 %v2281
    %vm2288 = vmor %vm2286, %vm2287
    %v2289 = vsel %vm2288, %v2281, %v2285
    %v2290 = vand.u32 2147483647, %v2011
    %vm2291 = vcmp.eq.f32.partialorder %v2290, 8.507059e+37
    %v2292 = vand.u32 %v2011, 2147483648
    %v2293 = vor.u32 1.1754944e-38, %v2292
    %v2294 = vsel %vm2291, %v2293, %v2289
    %v2295 = vmul.f32 1.0, %v2294
    %v2296 = vrcp.pop %v2012
    %v2297 = vmul.f32 %v2012, %v2296
    %v2298 = vsub.f32 1.0, %v2297
    %v2299 = vmul.f32 %v2296, %v2298
    %v2300 = vadd.f32 %v2296, %v2299
    %vm2301 = vweird.f32 %v2012
    %vm2302 = vweird.f32 %v2296
    %vm2303 = vmor %vm2301, %vm2302
    %v2304 = vsel %vm2303, %v2296, %v2300
    %v2305 = vand.u32 2147483647, %v2012
    %vm2306 = vcmp.eq.f32.partialorder %v2305, 8.507059e+37
    %v2307 = vand.u32 %v2012, 2147483648
    %v2308 = vor.u32 1.1754944e-38, %v2307
    %v2309 = vsel %vm2306, %v2308, %v2304
    %v2310 = vmul.f32 1.0, %v2309
    %v2311 = vrcp.pop %v2013
    %v2312 = vmul.f32 %v2013, %v2311
    %v2313 = vsub.f32 1.0, %v2312
    %v2314 = vmul.f32 %v2311, %v2313
    %v2315 = vadd.f32 %v2311, %v2314
    %vm2316 = vweird.f32 %v2013
    %vm2317 = vweird.f32 %v2311
    %vm2318 = vmor %vm2316, %vm2317
    %v2319 = vsel %vm2318, %v2311, %v2315
    %v2320 = vand.u32 2147483647, %v2013
    %vm2321 = vcmp.eq.f32.partialorder %v2320, 8.507059e+37
    %v2322 = vand.u32 %v2013, 2147483648
    %v2323 = vor.u32 1.1754944e-38, %v2322
    %v2324 = vsel %vm2321, %v2323, %v2319
    %v2325 = vmul.f32 1.0, %v2324
    %v2326 = vrcp.pop %v2014
    %v2327 = vmul.f32 %v2014, %v2326
    %v2328 = vsub.f32 1.0, %v2327
    %v2329 = vmul.f32 %v2326, %v2328
    %v2330 = vadd.f32 %v2326, %v2329
    %vm2331 = vweird.f32 %v2014
    %vm2332 = vweird.f32 %v2326
    %vm2333 = vmor %vm2331, %vm2332
    %v2334 = vsel %vm2333, %v2326, %v2330
    %v2335 = vand.u32 2147483647, %v2014
    %vm2336 = vcmp.eq.f32.partialorder %v2335, 8.507059e+37
    %v2337 = vand.u32 %v2014, 2147483648
    %v2338 = vor.u32 1.1754944e-38, %v2337
    %v2339 = vsel %vm2336, %v2338, %v2334
    %v2340 = vmul.f32 1.0, %v2339
    %v2341 = vrcp.pop %v2015
    %v2342 = vmul.f32 %v2015, %v2341
    %v2343 = vsub.f32 1.0, %v2342
    %v2344 = vmul.f32 %v2341, %v2343
    %v2345 = vadd.f32 %v2341, %v2344
    %vm2346 = vweird.f32 %v2015
    %vm2347 = vweird.f32 %v2341
    %vm2348 = vmor %vm2346, %vm2347
    %v2349 = vsel %vm2348, %v2341, %v2345
    %v2350 = vand.u32 2147483647, %v2015
    %vm2351 = vcmp.eq.f32.partialorder %v2350, 8.507059e+37
    %v2352 = vand.u32 %v2015, 2147483648
    %v2353 = vor.u32 1.1754944e-38, %v2352
    %v2354 = vsel %vm2351, %v2353, %v2349
    %v2355 = vmul.f32 1.0, %v2354
    %v2356 = vrcp.pop %v2016
    %v2357 = vmul.f32 %v2016, %v2356
    %v2358 = vsub.f32 1.0, %v2357
    %v2359 = vmul.f32 %v2356, %v2358
    %v2360 = vadd.f32 %v2356, %v2359
    %vm2361 = vweird.f32 %v2016
    %vm2362 = vweird.f32 %v2356
    %vm2363 = vmor %vm2361, %vm2362
    %v2364 = vsel %vm2363, %v2356, %v2360
    %v2365 = vand.u32 2147483647, %v2016
    %vm2366 = vcmp.eq.f32.partialorder %v2365, 8.507059e+37
    %v2367 = vand.u32 %v2016, 2147483648
    %v2368 = vor.u32 1.1754944e-38, %v2367
    %v2369 = vsel %vm2366, %v2368, %v2364
    %v2370 = vmul.f32 1.0, %v2369
    %v2371 = vrcp.pop %v2017
    %v2372 = vmul.f32 %v2017, %v2371
    %v2373 = vsub.f32 1.0, %v2372
    %v2374 = vmul.f32 %v2371, %v2373
    %v2375 = vadd.f32 %v2371, %v2374
    %vm2376 = vweird.f32 %v2017
    %vm2377 = vweird.f32 %v2371
    %vm2378 = vmor %vm2376, %vm2377
    %v2379 = vsel %vm2378, %v2371, %v2375
    %v2380 = vand.u32 2147483647, %v2017
    %vm2381 = vcmp.eq.f32.partialorder %v2380, 8.507059e+37
    %v2382 = vand.u32 %v2017, 2147483648
    %v2383 = vor.u32 1.1754944e-38, %v2382
    %v2384 = vsel %vm2381, %v2383, %v2379
    %v2385 = vmul.f32 1.0, %v2384
    %v2386 = vrcp.pop %v2018
    %v2387 = vmul.f32 %v2018, %v2386
    %v2388 = vsub.f32 1.0, %v2387
    %v2389 = vmul.f32 %v2386, %v2388
    %v2390 = vadd.f32 %v2386, %v2389
    %vm2391 = vweird.f32 %v2018
    %vm2392 = vweird.f32 %v2386
    %vm2393 = vmor %vm2391, %vm2392
    %v2394 = vsel %vm2393, %v2386, %v2390
    %v2395 = vand.u32 2147483647, %v2018
    %vm2396 = vcmp.eq.f32.partialorder %v2395, 8.507059e+37
    %v2397 = vand.u32 %v2018, 2147483648
    %v2398 = vor.u32 1.1754944e-38, %v2397
    %v2399 = vsel %vm2396, %v2398, %v2394
    %v2400 = vmul.f32 1.0, %v2399
    %v2401 = vrcp.pop %v2019
    %v2402 = vmul.f32 %v2019, %v2401
    %v2403 = vsub.f32 1.0, %v2402
    %v2404 = vmul.f32 %v2401, %v2403
    %v2405 = vadd.f32 %v2401, %v2404
    %vm2406 = vweird.f32 %v2019
    %vm2407 = vweird.f32 %v2401
    %vm2408 = vmor %vm2406, %vm2407
    %v2409 = vsel %vm2408, %v2401, %v2405
    %v2410 = vand.u32 2147483647, %v2019
    %vm2411 = vcmp.eq.f32.partialorder %v2410, 8.507059e+37
    %v2412 = vand.u32 %v2019, 2147483648
    %v2413 = vor.u32 1.1754944e-38, %v2412
    %v2414 = vsel %vm2411, %v2413, %v2409
    %v2415 = vmul.f32 1.0, %v2414
    %v2416 = vrcp.pop %v2020
    %v2417 = vmul.f32 %v2020, %v2416
    %v2418 = vsub.f32 1.0, %v2417
    %v2419 = vmul.f32 %v2416, %v2418
    %v2420 = vadd.f32 %v2416, %v2419
    %vm2421 = vweird.f32 %v2020
    %vm2422 = vweird.f32 %v2416
    %vm2423 = vmor %vm2421, %vm2422
    %v2424 = vsel %vm2423, %v2416, %v2420
    %v2425 = vand.u32 2147483647, %v2020
    %vm2426 = vcmp.eq.f32.partialorder %v2425, 8.507059e+37
    %v2427 = vand.u32 %v2020, 2147483648
    %v2428 = vor.u32 1.1754944e-38, %v2427
    %v2429 = vsel %vm2426, %v2428, %v2424
    %v2430 = vmul.f32 1.0, %v2429
    %v2431 = vrcp.pop %v2021
    %v2432 = vmul.f32 %v2021, %v2431
    %v2433 = vsub.f32 1.0, %v2432
    %v2434 = vmul.f32 %v2431, %v2433
    %v2435 = vadd.f32 %v2431, %v2434
    %vm2436 = vweird.f32 %v2021
    %vm2437 = vweird.f32 %v2431
    %vm2438 = vmor %vm2436, %vm2437
    %v2439 = vsel %vm2438, %v2431, %v2435
    %v2440 = vand.u32 2147483647, %v2021
    %vm2441 = vcmp.eq.f32.partialorder %v2440, 8.507059e+37
    %v2442 = vand.u32 %v2021, 2147483648
    %v2443 = vor.u32 1.1754944e-38, %v2442
    %v2444 = vsel %vm2441, %v2443, %v2439
    %v2445 = vmul.f32 1.0, %v2444
    %v2446 = vrcp.pop %v2022
    %v2447 = vmul.f32 %v2022, %v2446
    %v2448 = vsub.f32 1.0, %v2447
    %v2449 = vmul.f32 %v2446, %v2448
    %v2450 = vadd.f32 %v2446, %v2449
    %vm2451 = vweird.f32 %v2022
    %vm2452 = vweird.f32 %v2446
    %vm2453 = vmor %vm2451, %vm2452
    %v2454 = vsel %vm2453, %v2446, %v2450
    %v2455 = vand.u32 2147483647, %v2022
    %vm2456 = vcmp.eq.f32.partialorder %v2455, 8.507059e+37
    %v2457 = vand.u32 %v2022, 2147483648
    %v2458 = vor.u32 1.1754944e-38, %v2457
    %v2459 = vsel %vm2456, %v2458, %v2454
    %v2460 = vmul.f32 1.0, %v2459
    %v2461 = vrcp.pop %v2023
    %v2462 = vmul.f32 %v2023, %v2461
    %v2463 = vsub.f32 1.0, %v2462
    %v2464 = vmul.f32 %v2461, %v2463
    %v2465 = vadd.f32 %v2461, %v2464
    %vm2466 = vweird.f32 %v2023
    %vm2467 = vweird.f32 %v2461
    %vm2468 = vmor %vm2466, %vm2467
    %v2469 = vsel %vm2468, %v2461, %v2465
    %v2470 = vand.u32 2147483647, %v2023
    %vm2471 = vcmp.eq.f32.partialorder %v2470, 8.507059e+37
    %v2472 = vand.u32 %v2023, 2147483648
    %v2473 = vor.u32 1.1754944e-38, %v2472
    %v2474 = vsel %vm2471, %v2473, %v2469
    %v2475 = vmul.f32 1.0, %v2474
    %v2476 = vrcp.pop %v2024
    %v2477 = vmul.f32 %v2024, %v2476
    %v2478 = vsub.f32 1.0, %v2477
    %v2479 = vmul.f32 %v2476, %v2478
    %v2480 = vadd.f32 %v2476, %v2479
    %vm2481 = vweird.f32 %v2024
    %vm2482 = vweird.f32 %v2476
    %vm2483 = vmor %vm2481, %vm2482
    %v2484 = vsel %vm2483, %v2476, %v2480
    %v2485 = vand.u32 2147483647, %v2024
    %vm2486 = vcmp.eq.f32.partialorder %v2485, 8.507059e+37
    %v2487 = vand.u32 %v2024, 2147483648
    %v2488 = vor.u32 1.1754944e-38, %v2487
    %v2489 = vsel %vm2486, %v2488, %v2484
    %v2490 = vmul.f32 1.0, %v2489
    %v2491 = vrcp.pop %v2025
    %v2492 = vmul.f32 %v2025, %v2491
    %v2493 = vsub.f32 1.0, %v2492
    %v2494 = vmul.f32 %v2491, %v2493
    %v2495 = vadd.f32 %v2491, %v2494
    %vm2496 = vweird.f32 %v2025
    %vm2497 = vweird.f32 %v2491
    %vm2498 = vmor %vm2496, %vm2497
    %v2499 = vsel %vm2498, %v2491, %v2495
    %v2500 = vand.u32 2147483647, %v2025
    %vm2501 = vcmp.eq.f32.partialorder %v2500, 8.507059e+37
    %v2502 = vand.u32 %v2025, 2147483648
    %v2503 = vor.u32 1.1754944e-38, %v2502
    %v2504 = vsel %vm2501, %v2503, %v2499
    %v2505 = vmul.f32 1.0, %v2504
    %v2506 = vmul.f32 %v1752, %v2040
    %v2507 = vmul.f32 %v1793, %v2055
    %v2508 = vmul.f32 %v1834, %v2070
    %v2509 = vmul.f32 %v1875, %v2085
    %v2510 = vmul.f32 %v1755, %v2100
    %v2511 = vmul.f32 %v1796, %v2115
    %v2512 = vmul.f32 %v1837, %v2130
    %v2513 = vmul.f32 %v1878, %v2145
    %v2514 = vmul.f32 %v1758, %v2160
    %v2515 = vmul.f32 %v1799, %v2175
    %v2516 = vmul.f32 %v1840, %v2190
    %v2517 = vmul.f32 %v1881, %v2205
    %v2518 = vmul.f32 %v1761, %v2220
    %v2519 = vmul.f32 %v1802, %v2235
    %v2520 = vmul.f32 %v1843, %v2250
    %v2521 = vmul.f32 %v1884, %v2265
    %v2522 = vmul.f32 %v1764, %v2280
    %v2523 = vmul.f32 %v1805, %v2295
    %v2524 = vmul.f32 %v1846, %v2310
    %v2525 = vmul.f32 %v1887, %v2325
    %v2526 = vmul.f32 %v1767, %v2340
    %v2527 = vmul.f32 %v1808, %v2355
    %v2528 = vmul.f32 %v1849, %v2370
    %v2529 = vmul.f32 %v1890, %v2385
    %v2530 = vmul.f32 %v1770, %v2400
    %v2531 = vmul.f32 %v1811, %v2415
    %v2532 = vmul.f32 %v1852, %v2430
    %v2533 = vmul.f32 %v1893, %v2445
    %v2534 = vmul.f32 %v1773, %v2460
    %v2535 = vmul.f32 %v1814, %v2475
    %v2536 = vmul.f32 %v1855, %v2490
    %v2537 = vmul.f32 %v1896, %v2505
    %s2538 = scalar_lea.vmem %s4, 128
    %v2539 = vld [vmem:[%s2538] sm:$0xff]
    %v2540 = vld [vmem:[%s2538 + $0x8] sm:$0xff]
    %v2541 = vld [vmem:[%s2538 + $0x10] sm:$0xff]
    %v2542 = vld [vmem:[%s2538 + $0x18] sm:$0xff]
    %v2543 = vld [vmem:[%s2538 + $0x20] sm:$0xff]
    %v2544 = vld [vmem:[%s2538 + $0x28] sm:$0xff]
    %v2545 = vld [vmem:[%s2538 + $0x30] sm:$0xff]
    %v2546 = vld [vmem:[%s2538 + $0x38] sm:$0xff]
    %2547 = vset.pattern.permute.xlu0 2
    %2548 = vperm.xlu0 %2547, %v792
    %v2549 = vpop.permute.xlu0 %2548
    %2551 = vset.pattern.permute.xlu0 2
    %2552 = vperm.xlu0 %2551, %v793
    %v2553 = vpop.permute.xlu0 %2552
    %2555 = vset.pattern.permute.xlu0 2
    %2556 = vperm.xlu0 %2555, %v794
    %v2557 = vpop.permute.xlu0 %2556
    %2559 = vset.pattern.permute.xlu0 2
    %2560 = vperm.xlu0 %2559, %v795
    %v2561 = vpop.permute.xlu0 %2560
    %2563 = vset.pattern.permute.xlu0 2
    %2564 = vperm.xlu0 %2563, %v796
    %v2565 = vpop.permute.xlu0 %2564
    %2567 = vset.pattern.permute.xlu0 2
    %2568 = vperm.xlu0 %2567, %v797
    %v2569 = vpop.permute.xlu0 %2568
    %2571 = vset.pattern.permute.xlu0 2
    %2572 = vperm.xlu0 %2571, %v798
    %v2573 = vpop.permute.xlu0 %2572
    %2575 = vset.pattern.permute.xlu0 2
    %2576 = vperm.xlu0 %2575, %v799
    %v2577 = vpop.permute.xlu0 %2576
    %v2580 = vsel %vm840, %v2539, 0
    %v2583 = vsel %vm840, %v2540, 0
    %v2586 = vsel %vm840, %v2541, 0
    %v2589 = vsel %vm840, %v2542, 0
    %v2592 = vsel %vm840, %v2543, 0
    %v2595 = vsel %vm840, %v2544, 0
    %v2598 = vsel %vm840, %v2545, 0
    %v2601 = vsel %vm840, %v2546, 0
    %2603 = vmatpush.msra.mxu0 0.0
    %2604 = vmatpush.msra.mxu0 0.0
    %2605 = vmatpush.msra.mxu0 0.0
    %2606 = vmatpush.msra.mxu0 0.0
    %2607 = vmatpush.msra.mxu0 0.0
    %2608 = vmatpush.msra.mxu0 0.0
    %2609 = vmatpush.msra.mxu0 0.0
    %2610 = vmatpush.msra.mxu0 0.0
    %2611 = vmatpush.msra.mxu0 %v2534
    %2612 = vmatpush.msra.mxu0 %v2530
    %2613 = vmatpush.msra.mxu0 %v2526
    %2614 = vmatpush.msra.mxu0 %v2522
    %2615 = vmatpush.msra.mxu0 %v2518
    %2616 = vmatpush.msra.mxu0 %v2514
    %2617 = vmatpush.msra.mxu0 %v2510
    %2618 = vmatpush.msra.mxu0 %v2506
    %2619 = vmatmul.f32.gmra.mxu0 %v2580
    %v2620 = vpop.f32.mrf.mxu0
    %v2621 = vadd.f32 %v2549, %v2620
    %2622 = vmatmul.f32.gmra.mxu0 %v2583
    %v2623 = vpop.f32.mrf.mxu0
    %v2624 = vadd.f32 %v2553, %v2623
    %2625 = vmatmul.f32.gmra.mxu0 %v2586
    %v2626 = vpop.f32.mrf.mxu0
    %v2627 = vadd.f32 %v2557, %v2626
    %2628 = vmatmul.f32.gmra.mxu0 %v2589
    %v2629 = vpop.f32.mrf.mxu0
    %v2630 = vadd.f32 %v2561, %v2629
    %2631 = vmatmul.f32.gmra.mxu0 %v2592
    %v2632 = vpop.f32.mrf.mxu0
    %v2633 = vadd.f32 %v2565, %v2632
    %2634 = vmatmul.f32.gmra.mxu0 %v2595
    %v2635 = vpop.f32.mrf.mxu0
    %v2636 = vadd.f32 %v2569, %v2635
    %2637 = vmatmul.f32.gmra.mxu0 %v2598
    %v2638 = vpop.f32.mrf.mxu0
    %v2639 = vadd.f32 %v2573, %v2638
    %2640 = vmatmul.f32.gmra.mxu0 %v2601
    %v2641 = vpop.f32.mrf.mxu0
    %v2642 = vadd.f32 %v2577, %v2641
    %2643 = vdwg.mxu0
    %2644 = vmatpush.msra.mxu0 0.0
    %2645 = vmatpush.msra.mxu0 0.0
    %2646 = vmatpush.msra.mxu0 0.0
    %2647 = vmatpush.msra.mxu0 0.0
    %2648 = vmatpush.msra.mxu0 0.0
    %2649 = vmatpush.msra.mxu0 0.0
    %2650 = vmatpush.msra.mxu0 0.0
    %2651 = vmatpush.msra.mxu0 0.0
    %2652 = vmatpush.msra.mxu0 %v2535
    %2653 = vmatpush.msra.mxu0 %v2531
    %2654 = vmatpush.msra.mxu0 %v2527
    %2655 = vmatpush.msra.mxu0 %v2523
    %2656 = vmatpush.msra.mxu0 %v2519
    %2657 = vmatpush.msra.mxu0 %v2515
    %2658 = vmatpush.msra.mxu0 %v2511
    %2659 = vmatpush.msra.mxu0 %v2507
    %2660 = vmatmul.f32.gmra.mxu0 %v2580
    %v2661 = vpop.f32.mrf.mxu0
    %v2662 = vadd.f32 %v2549, %v2661
    %2663 = vmatmul.f32.gmra.mxu0 %v2583
    %v2664 = vpop.f32.mrf.mxu0
    %v2665 = vadd.f32 %v2553, %v2664
    %2666 = vmatmul.f32.gmra.mxu0 %v2586
    %v2667 = vpop.f32.mrf.mxu0
    %v2668 = vadd.f32 %v2557, %v2667
    %2669 = vmatmul.f32.gmra.mxu0 %v2589
    %v2670 = vpop.f32.mrf.mxu0
    %v2671 = vadd.f32 %v2561, %v2670
    %2672 = vmatmul.f32.gmra.mxu0 %v2592
    %v2673 = vpop.f32.mrf.mxu0
    %v2674 = vadd.f32 %v2565, %v2673
    %2675 = vmatmul.f32.gmra.mxu0 %v2595
    %v2676 = vpop.f32.mrf.mxu0
    %v2677 = vadd.f32 %v2569, %v2676
    %2678 = vmatmul.f32.gmra.mxu0 %v2598
    %v2679 = vpop.f32.mrf.mxu0
    %v2680 = vadd.f32 %v2573, %v2679
    %2681 = vmatmul.f32.gmra.mxu0 %v2601
    %v2682 = vpop.f32.mrf.mxu0
    %v2683 = vadd.f32 %v2577, %v2682
    %2684 = vdwg.mxu0
    %2685 = vmatpush.msra.mxu0 0.0
    %2686 = vmatpush.msra.mxu0 0.0
    %2687 = vmatpush.msra.mxu0 0.0
    %2688 = vmatpush.msra.mxu0 0.0
    %2689 = vmatpush.msra.mxu0 0.0
    %2690 = vmatpush.msra.mxu0 0.0
    %2691 = vmatpush.msra.mxu0 0.0
    %2692 = vmatpush.msra.mxu0 0.0
    %2693 = vmatpush.msra.mxu0 %v2536
    %2694 = vmatpush.msra.mxu0 %v2532
    %2695 = vmatpush.msra.mxu0 %v2528
    %2696 = vmatpush.msra.mxu0 %v2524
    %2697 = vmatpush.msra.mxu0 %v2520
    %2698 = vmatpush.msra.mxu0 %v2516
    %2699 = vmatpush.msra.mxu0 %v2512
    %2700 = vmatpush.msra.mxu0 %v2508
    %2701 = vmatmul.f32.gmra.mxu0 %v2580
    %v2702 = vpop.f32.mrf.mxu0
    %v2703 = vadd.f32 %v2549, %v2702
    %2704 = vmatmul.f32.gmra.mxu0 %v2583
    %v2705 = vpop.f32.mrf.mxu0
    %v2706 = vadd.f32 %v2553, %v2705
    %2707 = vmatmul.f32.gmra.mxu0 %v2586
    %v2708 = vpop.f32.mrf.mxu0
    %v2709 = vadd.f32 %v2557, %v2708
    %2710 = vmatmul.f32.gmra.mxu0 %v2589
    %v2711 = vpop.f32.mrf.mxu0
    %v2712 = vadd.f32 %v2561, %v2711
    %2713 = vmatmul.f32.gmra.mxu0 %v2592
    %v2714 = vpop.f32.mrf.mxu0
    %v2715 = vadd.f32 %v2565, %v2714
    %2716 = vmatmul.f32.gmra.mxu0 %v2595
    %v2717 = vpop.f32.mrf.mxu0
    %v2718 = vadd.f32 %v2569, %v2717
    %2719 = vmatmul.f32.gmra.mxu0 %v2598
    %v2720 = vpop.f32.mrf.mxu0
    %v2721 = vadd.f32 %v2573, %v2720
    %2722 = vmatmul.f32.gmra.mxu0 %v2601
    %v2723 = vpop.f32.mrf.mxu0
    %v2724 = vadd.f32 %v2577, %v2723
    %2725 = vdwg.mxu0
    %2726 = vmatpush.msra.mxu0 0.0
    %2727 = vmatpush.msra.mxu0 0.0
    %2728 = vmatpush.msra.mxu0 0.0
    %2729 = vmatpush.msra.mxu0 0.0
    %2730 = vmatpush.msra.mxu0 0.0
    %2731 = vmatpush.msra.mxu0 0.0
    %2732 = vmatpush.msra.mxu0 0.0
    %2733 = vmatpush.msra.mxu0 0.0
    %2734 = vmatpush.msra.mxu0 %v2537
    %2735 = vmatpush.msra.mxu0 %v2533
    %2736 = vmatpush.msra.mxu0 %v2529
    %2737 = vmatpush.msra.mxu0 %v2525
    %2738 = vmatpush.msra.mxu0 %v2521
    %2739 = vmatpush.msra.mxu0 %v2517
    %2740 = vmatpush.msra.mxu0 %v2513
    %2741 = vmatpush.msra.mxu0 %v2509
    %2742 = vmatmul.f32.gmra.mxu0 %v2580
    %v2743 = vpop.f32.mrf.mxu0
    %v2744 = vadd.f32 %v2549, %v2743
    %2745 = vmatmul.f32.gmra.mxu0 %v2583
    %v2746 = vpop.f32.mrf.mxu0
    %v2747 = vadd.f32 %v2553, %v2746
    %2748 = vmatmul.f32.gmra.mxu0 %v2586
    %v2749 = vpop.f32.mrf.mxu0
    %v2750 = vadd.f32 %v2557, %v2749
    %2751 = vmatmul.f32.gmra.mxu0 %v2589
    %v2752 = vpop.f32.mrf.mxu0
    %v2753 = vadd.f32 %v2561, %v2752
    %2754 = vmatmul.f32.gmra.mxu0 %v2592
    %v2755 = vpop.f32.mrf.mxu0
    %v2756 = vadd.f32 %v2565, %v2755
    %2757 = vmatmul.f32.gmra.mxu0 %v2595
    %v2758 = vpop.f32.mrf.mxu0
    %v2759 = vadd.f32 %v2569, %v2758
    %2760 = vmatmul.f32.gmra.mxu0 %v2598
    %v2761 = vpop.f32.mrf.mxu0
    %v2762 = vadd.f32 %v2573, %v2761
    %2763 = vmatmul.f32.gmra.mxu0 %v2601
    %v2764 = vpop.f32.mrf.mxu0
    %v2765 = vadd.f32 %v2577, %v2764
    %2766 = vdwg.mxu0
    %v2767 = vxor.u32 %v2621, 2147483648
    %v2768 = vxor.u32 %v2662, 2147483648
    %v2769 = vxor.u32 %v2703, 2147483648
    %v2770 = vxor.u32 %v2744, 2147483648
    %v2771 = vxor.u32 %v2624, 2147483648
    %v2772 = vxor.u32 %v2665, 2147483648
    %v2773 = vxor.u32 %v2706, 2147483648
    %v2774 = vxor.u32 %v2747, 2147483648
    %v2775 = vxor.u32 %v2627, 2147483648
    %v2776 = vxor.u32 %v2668, 2147483648
    %v2777 = vxor.u32 %v2709, 2147483648
    %v2778 = vxor.u32 %v2750, 2147483648
    %v2779 = vxor.u32 %v2630, 2147483648
    %v2780 = vxor.u32 %v2671, 2147483648
    %v2781 = vxor.u32 %v2712, 2147483648
    %v2782 = vxor.u32 %v2753, 2147483648
    %v2783 = vxor.u32 %v2633, 2147483648
    %v2784 = vxor.u32 %v2674, 2147483648
    %v2785 = vxor.u32 %v2715, 2147483648
    %v2786 = vxor.u32 %v2756, 2147483648
    %v2787 = vxor.u32 %v2636, 2147483648
    %v2788 = vxor.u32 %v2677, 2147483648
    %v2789 = vxor.u32 %v2718, 2147483648
    %v2790 = vxor.u32 %v2759, 2147483648
    %v2791 = vxor.u32 %v2639, 2147483648
    %v2792 = vxor.u32 %v2680, 2147483648
    %v2793 = vxor.u32 %v2721, 2147483648
    %v2794 = vxor.u32 %v2762, 2147483648
    %v2795 = vxor.u32 %v2642, 2147483648
    %v2796 = vxor.u32 %v2683, 2147483648
    %v2797 = vxor.u32 %v2724, 2147483648
    %v2798 = vxor.u32 %v2765, 2147483648
    %v2799 = vmul.f32 %v2767, 1.442695
    %v2800 = vpow.pop %v2799
    %v2801 = vmul.f32 %v2768, 1.442695
    %v2802 = vpow.pop %v2801
    %v2803 = vmul.f32 %v2769, 1.442695
    %v2804 = vpow.pop %v2803
    %v2805 = vmul.f32 %v2770, 1.442695
    %v2806 = vpow.pop %v2805
    %v2807 = vmul.f32 %v2771, 1.442695
    %v2808 = vpow.pop %v2807
    %v2809 = vmul.f32 %v2772, 1.442695
    %v2810 = vpow.pop %v2809
    %v2811 = vmul.f32 %v2773, 1.442695
    %v2812 = vpow.pop %v2811
    %v2813 = vmul.f32 %v2774, 1.442695
    %v2814 = vpow.pop %v2813
    %v2815 = vmul.f32 %v2775, 1.442695
    %v2816 = vpow.pop %v2815
    %v2817 = vmul.f32 %v2776, 1.442695
    %v2818 = vpow.pop %v2817
    %v2819 = vmul.f32 %v2777, 1.442695
    %v2820 = vpow.pop %v2819
    %v2821 = vmul.f32 %v2778, 1.442695
    %v2822 = vpow.pop %v2821
    %v2823 = vmul.f32 %v2779, 1.442695
    %v2824 = vpow.pop %v2823
    %v2825 = vmul.f32 %v2780, 1.442695
    %v2826 = vpow.pop %v2825
    %v2827 = vmul.f32 %v2781, 1.442695
    %v2828 = vpow.pop %v2827
    %v2829 = vmul.f32 %v2782, 1.442695
    %v2830 = vpow.pop %v2829
    %v2831 = vmul.f32 %v2783, 1.442695
    %v2832 = vpow.pop %v2831
    %v2833 = vmul.f32 %v2784, 1.442695
    %v2834 = vpow.pop %v2833
    %v2835 = vmul.f32 %v2785, 1.442695
    %v2836 = vpow.pop %v2835
    %v2837 = vmul.f32 %v2786, 1.442695
    %v2838 = vpow.pop %v2837
    %v2839 = vmul.f32 %v2787, 1.442695
    %v2840 = vpow.pop %v2839
    %v2841 = vmul.f32 %v2788, 1.442695
    %v2842 = vpow.pop %v2841
    %v2843 = vmul.f32 %v2789, 1.442695
    %v2844 = vpow.pop %v2843
    %v2845 = vmul.f32 %v2790, 1.442695
    %v2846 = vpow.pop %v2845
    %v2847 = vmul.f32 %v2791, 1.442695
    %v2848 = vpow.pop %v2847
    %v2849 = vmul.f32 %v2792, 1.442695
    %v2850 = vpow.pop %v2849
    %v2851 = vmul.f32 %v2793, 1.442695
    %v2852 = vpow.pop %v2851
    %v2853 = vmul.f32 %v2794, 1.442695
    %v2854 = vpow.pop %v2853
    %v2855 = vmul.f32 %v2795, 1.442695
    %v2856 = vpow.pop %v2855
    %v2857 = vmul.f32 %v2796, 1.442695
    %v2858 = vpow.pop %v2857
    %v2859 = vmul.f32 %v2797, 1.442695
    %v2860 = vpow.pop %v2859
    %v2861 = vmul.f32 %v2798, 1.442695
    %v2862 = vpow.pop %v2861
    %v2863 = vadd.f32 %v2800, 1.0
    %v2864 = vadd.f32 %v2802, 1.0
    %v2865 = vadd.f32 %v2804, 1.0
    %v2866 = vadd.f32 %v2806, 1.0
    %v2867 = vadd.f32 %v2808, 1.0
    %v2868 = vadd.f32 %v2810, 1.0
    %v2869 = vadd.f32 %v2812, 1.0
    %v2870 = vadd.f32 %v2814, 1.0
    %v2871 = vadd.f32 %v2816, 1.0
    %v2872 = vadd.f32 %v2818, 1.0
    %v2873 = vadd.f32 %v2820, 1.0
    %v2874 = vadd.f32 %v2822, 1.0
    %v2875 = vadd.f32 %v2824, 1.0
    %v2876 = vadd.f32 %v2826, 1.0
    %v2877 = vadd.f32 %v2828, 1.0
    %v2878 = vadd.f32 %v2830, 1.0
    %v2879 = vadd.f32 %v2832, 1.0
    %v2880 = vadd.f32 %v2834, 1.0
    %v2881 = vadd.f32 %v2836, 1.0
    %v2882 = vadd.f32 %v2838, 1.0
    %v2883 = vadd.f32 %v2840, 1.0
    %v2884 = vadd.f32 %v2842, 1.0
    %v2885 = vadd.f32 %v2844, 1.0
    %v2886 = vadd.f32 %v2846, 1.0
    %v2887 = vadd.f32 %v2848, 1.0
    %v2888 = vadd.f32 %v2850, 1.0
    %v2889 = vadd.f32 %v2852, 1.0
    %v2890 = vadd.f32 %v2854, 1.0
    %v2891 = vadd.f32 %v2856, 1.0
    %v2892 = vadd.f32 %v2858, 1.0
    %v2893 = vadd.f32 %v2860, 1.0
    %v2894 = vadd.f32 %v2862, 1.0
    %v2895 = vrcp.pop %v2863
    %v2896 = vmul.f32 %v2863, %v2895
    %v2897 = vsub.f32 1.0, %v2896
    %v2898 = vmul.f32 %v2895, %v2897
    %v2899 = vadd.f32 %v2895, %v2898
    %vm2900 = vweird.f32 %v2863
    %vm2901 = vweird.f32 %v2895
    %vm2902 = vmor %vm2900, %vm2901
    %v2903 = vsel %vm2902, %v2895, %v2899
    %v2904 = vand.u32 2147483647, %v2863
    %vm2905 = vcmp.eq.f32.partialorder %v2904, 8.507059e+37
    %v2906 = vand.u32 %v2863, 2147483648
    %v2907 = vor.u32 1.1754944e-38, %v2906
    %v2908 = vsel %vm2905, %v2907, %v2903
    %v2909 = vmul.f32 1.0, %v2908
    %v2910 = vrcp.pop %v2864
    %v2911 = vmul.f32 %v2864, %v2910
    %v2912 = vsub.f32 1.0, %v2911
    %v2913 = vmul.f32 %v2910, %v2912
    %v2914 = vadd.f32 %v2910, %v2913
    %vm2915 = vweird.f32 %v2864
    %vm2916 = vweird.f32 %v2910
    %vm2917 = vmor %vm2915, %vm2916
    %v2918 = vsel %vm2917, %v2910, %v2914
    %v2919 = vand.u32 2147483647, %v2864
    %vm2920 = vcmp.eq.f32.partialorder %v2919, 8.507059e+37
    %v2921 = vand.u32 %v2864, 2147483648
    %v2922 = vor.u32 1.1754944e-38, %v2921
    %v2923 = vsel %vm2920, %v2922, %v2918
    %v2924 = vmul.f32 1.0, %v2923
    %v2925 = vrcp.pop %v2865
    %v2926 = vmul.f32 %v2865, %v2925
    %v2927 = vsub.f32 1.0, %v2926
    %v2928 = vmul.f32 %v2925, %v2927
    %v2929 = vadd.f32 %v2925, %v2928
    %vm2930 = vweird.f32 %v2865
    %vm2931 = vweird.f32 %v2925
    %vm2932 = vmor %vm2930, %vm2931
    %v2933 = vsel %vm2932, %v2925, %v2929
    %v2934 = vand.u32 2147483647, %v2865
    %vm2935 = vcmp.eq.f32.partialorder %v2934, 8.507059e+37
    %v2936 = vand.u32 %v2865, 2147483648
    %v2937 = vor.u32 1.1754944e-38, %v2936
    %v2938 = vsel %vm2935, %v2937, %v2933
    %v2939 = vmul.f32 1.0, %v2938
    %v2940 = vrcp.pop %v2866
    %v2941 = vmul.f32 %v2866, %v2940
    %v2942 = vsub.f32 1.0, %v2941
    %v2943 = vmul.f32 %v2940, %v2942
    %v2944 = vadd.f32 %v2940, %v2943
    %vm2945 = vweird.f32 %v2866
    %vm2946 = vweird.f32 %v2940
    %vm2947 = vmor %vm2945, %vm2946
    %v2948 = vsel %vm2947, %v2940, %v2944
    %v2949 = vand.u32 2147483647, %v2866
    %vm2950 = vcmp.eq.f32.partialorder %v2949, 8.507059e+37
    %v2951 = vand.u32 %v2866, 2147483648
    %v2952 = vor.u32 1.1754944e-38, %v2951
    %v2953 = vsel %vm2950, %v2952, %v2948
    %v2954 = vmul.f32 1.0, %v2953
    %v2955 = vrcp.pop %v2867
    %v2956 = vmul.f32 %v2867, %v2955
    %v2957 = vsub.f32 1.0, %v2956
    %v2958 = vmul.f32 %v2955, %v2957
    %v2959 = vadd.f32 %v2955, %v2958
    %vm2960 = vweird.f32 %v2867
    %vm2961 = vweird.f32 %v2955
    %vm2962 = vmor %vm2960, %vm2961
    %v2963 = vsel %vm2962, %v2955, %v2959
    %v2964 = vand.u32 2147483647, %v2867
    %vm2965 = vcmp.eq.f32.partialorder %v2964, 8.507059e+37
    %v2966 = vand.u32 %v2867, 2147483648
    %v2967 = vor.u32 1.1754944e-38, %v2966
    %v2968 = vsel %vm2965, %v2967, %v2963
    %v2969 = vmul.f32 1.0, %v2968
    %v2970 = vrcp.pop %v2868
    %v2971 = vmul.f32 %v2868, %v2970
    %v2972 = vsub.f32 1.0, %v2971
    %v2973 = vmul.f32 %v2970, %v2972
    %v2974 = vadd.f32 %v2970, %v2973
    %vm2975 = vweird.f32 %v2868
    %vm2976 = vweird.f32 %v2970
    %vm2977 = vmor %vm2975, %vm2976
    %v2978 = vsel %vm2977, %v2970, %v2974
    %v2979 = vand.u32 2147483647, %v2868
    %vm2980 = vcmp.eq.f32.partialorder %v2979, 8.507059e+37
    %v2981 = vand.u32 %v2868, 2147483648
    %v2982 = vor.u32 1.1754944e-38, %v2981
    %v2983 = vsel %vm2980, %v2982, %v2978
    %v2984 = vmul.f32 1.0, %v2983
    %v2985 = vrcp.pop %v2869
    %v2986 = vmul.f32 %v2869, %v2985
    %v2987 = vsub.f32 1.0, %v2986
    %v2988 = vmul.f32 %v2985, %v2987
    %v2989 = vadd.f32 %v2985, %v2988
    %vm2990 = vweird.f32 %v2869
    %vm2991 = vweird.f32 %v2985
    %vm2992 = vmor %vm2990, %vm2991
    %v2993 = vsel %vm2992, %v2985, %v2989
    %v2994 = vand.u32 2147483647, %v2869
    %vm2995 = vcmp.eq.f32.partialorder %v2994, 8.507059e+37
    %v2996 = vand.u32 %v2869, 2147483648
    %v2997 = vor.u32 1.1754944e-38, %v2996
    %v2998 = vsel %vm2995, %v2997, %v2993
    %v2999 = vmul.f32 1.0, %v2998
    %v3000 = vrcp.pop %v2870
    %v3001 = vmul.f32 %v2870, %v3000
    %v3002 = vsub.f32 1.0, %v3001
    %v3003 = vmul.f32 %v3000, %v3002
    %v3004 = vadd.f32 %v3000, %v3003
    %vm3005 = vweird.f32 %v2870
    %vm3006 = vweird.f32 %v3000
    %vm3007 = vmor %vm3005, %vm3006
    %v3008 = vsel %vm3007, %v3000, %v3004
    %v3009 = vand.u32 2147483647, %v2870
    %vm3010 = vcmp.eq.f32.partialorder %v3009, 8.507059e+37
    %v3011 = vand.u32 %v2870, 2147483648
    %v3012 = vor.u32 1.1754944e-38, %v3011
    %v3013 = vsel %vm3010, %v3012, %v3008
    %v3014 = vmul.f32 1.0, %v3013
    %v3015 = vrcp.pop %v2871
    %v3016 = vmul.f32 %v2871, %v3015
    %v3017 = vsub.f32 1.0, %v3016
    %v3018 = vmul.f32 %v3015, %v3017
    %v3019 = vadd.f32 %v3015, %v3018
    %vm3020 = vweird.f32 %v2871
    %vm3021 = vweird.f32 %v3015
    %vm3022 = vmor %vm3020, %vm3021
    %v3023 = vsel %vm3022, %v3015, %v3019
    %v3024 = vand.u32 2147483647, %v2871
    %vm3025 = vcmp.eq.f32.partialorder %v3024, 8.507059e+37
    %v3026 = vand.u32 %v2871, 2147483648
    %v3027 = vor.u32 1.1754944e-38, %v3026
    %v3028 = vsel %vm3025, %v3027, %v3023
    %v3029 = vmul.f32 1.0, %v3028
    %v3030 = vrcp.pop %v2872
    %v3031 = vmul.f32 %v2872, %v3030
    %v3032 = vsub.f32 1.0, %v3031
    %v3033 = vmul.f32 %v3030, %v3032
    %v3034 = vadd.f32 %v3030, %v3033
    %vm3035 = vweird.f32 %v2872
    %vm3036 = vweird.f32 %v3030
    %vm3037 = vmor %vm3035, %vm3036
    %v3038 = vsel %vm3037, %v3030, %v3034
    %v3039 = vand.u32 2147483647, %v2872
    %vm3040 = vcmp.eq.f32.partialorder %v3039, 8.507059e+37
    %v3041 = vand.u32 %v2872, 2147483648
    %v3042 = vor.u32 1.1754944e-38, %v3041
    %v3043 = vsel %vm3040, %v3042, %v3038
    %v3044 = vmul.f32 1.0, %v3043
    %v3045 = vrcp.pop %v2873
    %v3046 = vmul.f32 %v2873, %v3045
    %v3047 = vsub.f32 1.0, %v3046
    %v3048 = vmul.f32 %v3045, %v3047
    %v3049 = vadd.f32 %v3045, %v3048
    %vm3050 = vweird.f32 %v2873
    %vm3051 = vweird.f32 %v3045
    %vm3052 = vmor %vm3050, %vm3051
    %v3053 = vsel %vm3052, %v3045, %v3049
    %v3054 = vand.u32 2147483647, %v2873
    %vm3055 = vcmp.eq.f32.partialorder %v3054, 8.507059e+37
    %v3056 = vand.u32 %v2873, 2147483648
    %v3057 = vor.u32 1.1754944e-38, %v3056
    %v3058 = vsel %vm3055, %v3057, %v3053
    %v3059 = vmul.f32 1.0, %v3058
    %v3060 = vrcp.pop %v2874
    %v3061 = vmul.f32 %v2874, %v3060
    %v3062 = vsub.f32 1.0, %v3061
    %v3063 = vmul.f32 %v3060, %v3062
    %v3064 = vadd.f32 %v3060, %v3063
    %vm3065 = vweird.f32 %v2874
    %vm3066 = vweird.f32 %v3060
    %vm3067 = vmor %vm3065, %vm3066
    %v3068 = vsel %vm3067, %v3060, %v3064
    %v3069 = vand.u32 2147483647, %v2874
    %vm3070 = vcmp.eq.f32.partialorder %v3069, 8.507059e+37
    %v3071 = vand.u32 %v2874, 2147483648
    %v3072 = vor.u32 1.1754944e-38, %v3071
    %v3073 = vsel %vm3070, %v3072, %v3068
    %v3074 = vmul.f32 1.0, %v3073
    %v3075 = vrcp.pop %v2875
    %v3076 = vmul.f32 %v2875, %v3075
    %v3077 = vsub.f32 1.0, %v3076
    %v3078 = vmul.f32 %v3075, %v3077
    %v3079 = vadd.f32 %v3075, %v3078
    %vm3080 = vweird.f32 %v2875
    %vm3081 = vweird.f32 %v3075
    %vm3082 = vmor %vm3080, %vm3081
    %v3083 = vsel %vm3082, %v3075, %v3079
    %v3084 = vand.u32 2147483647, %v2875
    %vm3085 = vcmp.eq.f32.partialorder %v3084, 8.507059e+37
    %v3086 = vand.u32 %v2875, 2147483648
    %v3087 = vor.u32 1.1754944e-38, %v3086
    %v3088 = vsel %vm3085, %v3087, %v3083
    %v3089 = vmul.f32 1.0, %v3088
    %v3090 = vrcp.pop %v2876
    %v3091 = vmul.f32 %v2876, %v3090
    %v3092 = vsub.f32 1.0, %v3091
    %v3093 = vmul.f32 %v3090, %v3092
    %v3094 = vadd.f32 %v3090, %v3093
    %vm3095 = vweird.f32 %v2876
    %vm3096 = vweird.f32 %v3090
    %vm3097 = vmor %vm3095, %vm3096
    %v3098 = vsel %vm3097, %v3090, %v3094
    %v3099 = vand.u32 2147483647, %v2876
    %vm3100 = vcmp.eq.f32.partialorder %v3099, 8.507059e+37
    %v3101 = vand.u32 %v2876, 2147483648
    %v3102 = vor.u32 1.1754944e-38, %v3101
    %v3103 = vsel %vm3100, %v3102, %v3098
    %v3104 = vmul.f32 1.0, %v3103
    %v3105 = vrcp.pop %v2877
    %v3106 = vmul.f32 %v2877, %v3105
    %v3107 = vsub.f32 1.0, %v3106
    %v3108 = vmul.f32 %v3105, %v3107
    %v3109 = vadd.f32 %v3105, %v3108
    %vm3110 = vweird.f32 %v2877
    %vm3111 = vweird.f32 %v3105
    %vm3112 = vmor %vm3110, %vm3111
    %v3113 = vsel %vm3112, %v3105, %v3109
    %v3114 = vand.u32 2147483647, %v2877
    %vm3115 = vcmp.eq.f32.partialorder %v3114, 8.507059e+37
    %v3116 = vand.u32 %v2877, 2147483648
    %v3117 = vor.u32 1.1754944e-38, %v3116
    %v3118 = vsel %vm3115, %v3117, %v3113
    %v3119 = vmul.f32 1.0, %v3118
    %v3120 = vrcp.pop %v2878
    %v3121 = vmul.f32 %v2878, %v3120
    %v3122 = vsub.f32 1.0, %v3121
    %v3123 = vmul.f32 %v3120, %v3122
    %v3124 = vadd.f32 %v3120, %v3123
    %vm3125 = vweird.f32 %v2878
    %vm3126 = vweird.f32 %v3120
    %vm3127 = vmor %vm3125, %vm3126
    %v3128 = vsel %vm3127, %v3120, %v3124
    %v3129 = vand.u32 2147483647, %v2878
    %vm3130 = vcmp.eq.f32.partialorder %v3129, 8.507059e+37
    %v3131 = vand.u32 %v2878, 2147483648
    %v3132 = vor.u32 1.1754944e-38, %v3131
    %v3133 = vsel %vm3130, %v3132, %v3128
    %v3134 = vmul.f32 1.0, %v3133
    %v3135 = vrcp.pop %v2879
    %v3136 = vmul.f32 %v2879, %v3135
    %v3137 = vsub.f32 1.0, %v3136
    %v3138 = vmul.f32 %v3135, %v3137
    %v3139 = vadd.f32 %v3135, %v3138
    %vm3140 = vweird.f32 %v2879
    %vm3141 = vweird.f32 %v3135
    %vm3142 = vmor %vm3140, %vm3141
    %v3143 = vsel %vm3142, %v3135, %v3139
    %v3144 = vand.u32 2147483647, %v2879
    %vm3145 = vcmp.eq.f32.partialorder %v3144, 8.507059e+37
    %v3146 = vand.u32 %v2879, 2147483648
    %v3147 = vor.u32 1.1754944e-38, %v3146
    %v3148 = vsel %vm3145, %v3147, %v3143
    %v3149 = vmul.f32 1.0, %v3148
    %v3150 = vrcp.pop %v2880
    %v3151 = vmul.f32 %v2880, %v3150
    %v3152 = vsub.f32 1.0, %v3151
    %v3153 = vmul.f32 %v3150, %v3152
    %v3154 = vadd.f32 %v3150, %v3153
    %vm3155 = vweird.f32 %v2880
    %vm3156 = vweird.f32 %v3150
    %vm3157 = vmor %vm3155, %vm3156
    %v3158 = vsel %vm3157, %v3150, %v3154
    %v3159 = vand.u32 2147483647, %v2880
    %vm3160 = vcmp.eq.f32.partialorder %v3159, 8.507059e+37
    %v3161 = vand.u32 %v2880, 2147483648
    %v3162 = vor.u32 1.1754944e-38, %v3161
    %v3163 = vsel %vm3160, %v3162, %v3158
    %v3164 = vmul.f32 1.0, %v3163
    %v3165 = vrcp.pop %v2881
    %v3166 = vmul.f32 %v2881, %v3165
    %v3167 = vsub.f32 1.0, %v3166
    %v3168 = vmul.f32 %v3165, %v3167
    %v3169 = vadd.f32 %v3165, %v3168
    %vm3170 = vweird.f32 %v2881
    %vm3171 = vweird.f32 %v3165
    %vm3172 = vmor %vm3170, %vm3171
    %v3173 = vsel %vm3172, %v3165, %v3169
    %v3174 = vand.u32 2147483647, %v2881
    %vm3175 = vcmp.eq.f32.partialorder %v3174, 8.507059e+37
    %v3176 = vand.u32 %v2881, 2147483648
    %v3177 = vor.u32 1.1754944e-38, %v3176
    %v3178 = vsel %vm3175, %v3177, %v3173
    %v3179 = vmul.f32 1.0, %v3178
    %v3180 = vrcp.pop %v2882
    %v3181 = vmul.f32 %v2882, %v3180
    %v3182 = vsub.f32 1.0, %v3181
    %v3183 = vmul.f32 %v3180, %v3182
    %v3184 = vadd.f32 %v3180, %v3183
    %vm3185 = vweird.f32 %v2882
    %vm3186 = vweird.f32 %v3180
    %vm3187 = vmor %vm3185, %vm3186
    %v3188 = vsel %vm3187, %v3180, %v3184
    %v3189 = vand.u32 2147483647, %v2882
    %vm3190 = vcmp.eq.f32.partialorder %v3189, 8.507059e+37
    %v3191 = vand.u32 %v2882, 2147483648
    %v3192 = vor.u32 1.1754944e-38, %v3191
    %v3193 = vsel %vm3190, %v3192, %v3188
    %v3194 = vmul.f32 1.0, %v3193
    %v3195 = vrcp.pop %v2883
    %v3196 = vmul.f32 %v2883, %v3195
    %v3197 = vsub.f32 1.0, %v3196
    %v3198 = vmul.f32 %v3195, %v3197
    %v3199 = vadd.f32 %v3195, %v3198
    %vm3200 = vweird.f32 %v2883
    %vm3201 = vweird.f32 %v3195
    %vm3202 = vmor %vm3200, %vm3201
    %v3203 = vsel %vm3202, %v3195, %v3199
    %v3204 = vand.u32 2147483647, %v2883
    %vm3205 = vcmp.eq.f32.partialorder %v3204, 8.507059e+37
    %v3206 = vand.u32 %v2883, 2147483648
    %v3207 = vor.u32 1.1754944e-38, %v3206
    %v3208 = vsel %vm3205, %v3207, %v3203
    %v3209 = vmul.f32 1.0, %v3208
    %v3210 = vrcp.pop %v2884
    %v3211 = vmul.f32 %v2884, %v3210
    %v3212 = vsub.f32 1.0, %v3211
    %v3213 = vmul.f32 %v3210, %v3212
    %v3214 = vadd.f32 %v3210, %v3213
    %vm3215 = vweird.f32 %v2884
    %vm3216 = vweird.f32 %v3210
    %vm3217 = vmor %vm3215, %vm3216
    %v3218 = vsel %vm3217, %v3210, %v3214
    %v3219 = vand.u32 2147483647, %v2884
    %vm3220 = vcmp.eq.f32.partialorder %v3219, 8.507059e+37
    %v3221 = vand.u32 %v2884, 2147483648
    %v3222 = vor.u32 1.1754944e-38, %v3221
    %v3223 = vsel %vm3220, %v3222, %v3218
    %v3224 = vmul.f32 1.0, %v3223
    %v3225 = vrcp.pop %v2885
    %v3226 = vmul.f32 %v2885, %v3225
    %v3227 = vsub.f32 1.0, %v3226
    %v3228 = vmul.f32 %v3225, %v3227
    %v3229 = vadd.f32 %v3225, %v3228
    %vm3230 = vweird.f32 %v2885
    %vm3231 = vweird.f32 %v3225
    %vm3232 = vmor %vm3230, %vm3231
    %v3233 = vsel %vm3232, %v3225, %v3229
    %v3234 = vand.u32 2147483647, %v2885
    %vm3235 = vcmp.eq.f32.partialorder %v3234, 8.507059e+37
    %v3236 = vand.u32 %v2885, 2147483648
    %v3237 = vor.u32 1.1754944e-38, %v3236
    %v3238 = vsel %vm3235, %v3237, %v3233
    %v3239 = vmul.f32 1.0, %v3238
    %v3240 = vrcp.pop %v2886
    %v3241 = vmul.f32 %v2886, %v3240
    %v3242 = vsub.f32 1.0, %v3241
    %v3243 = vmul.f32 %v3240, %v3242
    %v3244 = vadd.f32 %v3240, %v3243
    %vm3245 = vweird.f32 %v2886
    %vm3246 = vweird.f32 %v3240
    %vm3247 = vmor %vm3245, %vm3246
    %v3248 = vsel %vm3247, %v3240, %v3244
    %v3249 = vand.u32 2147483647, %v2886
    %vm3250 = vcmp.eq.f32.partialorder %v3249, 8.507059e+37
    %v3251 = vand.u32 %v2886, 2147483648
    %v3252 = vor.u32 1.1754944e-38, %v3251
    %v3253 = vsel %vm3250, %v3252, %v3248
    %v3254 = vmul.f32 1.0, %v3253
    %v3255 = vrcp.pop %v2887
    %v3256 = vmul.f32 %v2887, %v3255
    %v3257 = vsub.f32 1.0, %v3256
    %v3258 = vmul.f32 %v3255, %v3257
    %v3259 = vadd.f32 %v3255, %v3258
    %vm3260 = vweird.f32 %v2887
    %vm3261 = vweird.f32 %v3255
    %vm3262 = vmor %vm3260, %vm3261
    %v3263 = vsel %vm3262, %v3255, %v3259
    %v3264 = vand.u32 2147483647, %v2887
    %vm3265 = vcmp.eq.f32.partialorder %v3264, 8.507059e+37
    %v3266 = vand.u32 %v2887, 2147483648
    %v3267 = vor.u32 1.1754944e-38, %v3266
    %v3268 = vsel %vm3265, %v3267, %v3263
    %v3269 = vmul.f32 1.0, %v3268
    %v3270 = vrcp.pop %v2888
    %v3271 = vmul.f32 %v2888, %v3270
    %v3272 = vsub.f32 1.0, %v3271
    %v3273 = vmul.f32 %v3270, %v3272
    %v3274 = vadd.f32 %v3270, %v3273
    %vm3275 = vweird.f32 %v2888
    %vm3276 = vweird.f32 %v3270
    %vm3277 = vmor %vm3275, %vm3276
    %v3278 = vsel %vm3277, %v3270, %v3274
    %v3279 = vand.u32 2147483647, %v2888
    %vm3280 = vcmp.eq.f32.partialorder %v3279, 8.507059e+37
    %v3281 = vand.u32 %v2888, 2147483648
    %v3282 = vor.u32 1.1754944e-38, %v3281
    %v3283 = vsel %vm3280, %v3282, %v3278
    %v3284 = vmul.f32 1.0, %v3283
    %v3285 = vrcp.pop %v2889
    %v3286 = vmul.f32 %v2889, %v3285
    %v3287 = vsub.f32 1.0, %v3286
    %v3288 = vmul.f32 %v3285, %v3287
    %v3289 = vadd.f32 %v3285, %v3288
    %vm3290 = vweird.f32 %v2889
    %vm3291 = vweird.f32 %v3285
    %vm3292 = vmor %vm3290, %vm3291
    %v3293 = vsel %vm3292, %v3285, %v3289
    %v3294 = vand.u32 2147483647, %v2889
    %vm3295 = vcmp.eq.f32.partialorder %v3294, 8.507059e+37
    %v3296 = vand.u32 %v2889, 2147483648
    %v3297 = vor.u32 1.1754944e-38, %v3296
    %v3298 = vsel %vm3295, %v3297, %v3293
    %v3299 = vmul.f32 1.0, %v3298
    %v3300 = vrcp.pop %v2890
    %v3301 = vmul.f32 %v2890, %v3300
    %v3302 = vsub.f32 1.0, %v3301
    %v3303 = vmul.f32 %v3300, %v3302
    %v3304 = vadd.f32 %v3300, %v3303
    %vm3305 = vweird.f32 %v2890
    %vm3306 = vweird.f32 %v3300
    %vm3307 = vmor %vm3305, %vm3306
    %v3308 = vsel %vm3307, %v3300, %v3304
    %v3309 = vand.u32 2147483647, %v2890
    %vm3310 = vcmp.eq.f32.partialorder %v3309, 8.507059e+37
    %v3311 = vand.u32 %v2890, 2147483648
    %v3312 = vor.u32 1.1754944e-38, %v3311
    %v3313 = vsel %vm3310, %v3312, %v3308
    %v3314 = vmul.f32 1.0, %v3313
    %v3315 = vrcp.pop %v2891
    %v3316 = vmul.f32 %v2891, %v3315
    %v3317 = vsub.f32 1.0, %v3316
    %v3318 = vmul.f32 %v3315, %v3317
    %v3319 = vadd.f32 %v3315, %v3318
    %vm3320 = vweird.f32 %v2891
    %vm3321 = vweird.f32 %v3315
    %vm3322 = vmor %vm3320, %vm3321
    %v3323 = vsel %vm3322, %v3315, %v3319
    %v3324 = vand.u32 2147483647, %v2891
    %vm3325 = vcmp.eq.f32.partialorder %v3324, 8.507059e+37
    %v3326 = vand.u32 %v2891, 2147483648
    %v3327 = vor.u32 1.1754944e-38, %v3326
    %v3328 = vsel %vm3325, %v3327, %v3323
    %v3329 = vmul.f32 1.0, %v3328
    %v3330 = vrcp.pop %v2892
    %v3331 = vmul.f32 %v2892, %v3330
    %v3332 = vsub.f32 1.0, %v3331
    %v3333 = vmul.f32 %v3330, %v3332
    %v3334 = vadd.f32 %v3330, %v3333
    %vm3335 = vweird.f32 %v2892
    %vm3336 = vweird.f32 %v3330
    %vm3337 = vmor %vm3335, %vm3336
    %v3338 = vsel %vm3337, %v3330, %v3334
    %v3339 = vand.u32 2147483647, %v2892
    %vm3340 = vcmp.eq.f32.partialorder %v3339, 8.507059e+37
    %v3341 = vand.u32 %v2892, 2147483648
    %v3342 = vor.u32 1.1754944e-38, %v3341
    %v3343 = vsel %vm3340, %v3342, %v3338
    %v3344 = vmul.f32 1.0, %v3343
    %v3345 = vrcp.pop %v2893
    %v3346 = vmul.f32 %v2893, %v3345
    %v3347 = vsub.f32 1.0, %v3346
    %v3348 = vmul.f32 %v3345, %v3347
    %v3349 = vadd.f32 %v3345, %v3348
    %vm3350 = vweird.f32 %v2893
    %vm3351 = vweird.f32 %v3345
    %vm3352 = vmor %vm3350, %vm3351
    %v3353 = vsel %vm3352, %v3345, %v3349
    %v3354 = vand.u32 2147483647, %v2893
    %vm3355 = vcmp.eq.f32.partialorder %v3354, 8.507059e+37
    %v3356 = vand.u32 %v2893, 2147483648
    %v3357 = vor.u32 1.1754944e-38, %v3356
    %v3358 = vsel %vm3355, %v3357, %v3353
    %v3359 = vmul.f32 1.0, %v3358
    %v3360 = vrcp.pop %v2894
    %v3361 = vmul.f32 %v2894, %v3360
    %v3362 = vsub.f32 1.0, %v3361
    %v3363 = vmul.f32 %v3360, %v3362
    %v3364 = vadd.f32 %v3360, %v3363
    %vm3365 = vweird.f32 %v2894
    %vm3366 = vweird.f32 %v3360
    %vm3367 = vmor %vm3365, %vm3366
    %v3368 = vsel %vm3367, %v3360, %v3364
    %v3369 = vand.u32 2147483647, %v2894
    %vm3370 = vcmp.eq.f32.partialorder %v3369, 8.507059e+37
    %v3371 = vand.u32 %v2894, 2147483648
    %v3372 = vor.u32 1.1754944e-38, %v3371
    %v3373 = vsel %vm3370, %v3372, %v3368
    %v3374 = vmul.f32 1.0, %v3373
    %v3375 = vmul.f32 %v2621, %v2909
    %v3376 = vmul.f32 %v2662, %v2924
    %v3377 = vmul.f32 %v2703, %v2939
    %v3378 = vmul.f32 %v2744, %v2954
    %v3379 = vmul.f32 %v2624, %v2969
    %v3380 = vmul.f32 %v2665, %v2984
    %v3381 = vmul.f32 %v2706, %v2999
    %v3382 = vmul.f32 %v2747, %v3014
    %v3383 = vmul.f32 %v2627, %v3029
    %v3384 = vmul.f32 %v2668, %v3044
    %v3385 = vmul.f32 %v2709, %v3059
    %v3386 = vmul.f32 %v2750, %v3074
    %v3387 = vmul.f32 %v2630, %v3089
    %v3388 = vmul.f32 %v2671, %v3104
    %v3389 = vmul.f32 %v2712, %v3119
    %v3390 = vmul.f32 %v2753, %v3134
    %v3391 = vmul.f32 %v2633, %v3149
    %v3392 = vmul.f32 %v2674, %v3164
    %v3393 = vmul.f32 %v2715, %v3179
    %v3394 = vmul.f32 %v2756, %v3194
    %v3395 = vmul.f32 %v2636, %v3209
    %v3396 = vmul.f32 %v2677, %v3224
    %v3397 = vmul.f32 %v2718, %v3239
    %v3398 = vmul.f32 %v2759, %v3254
    %v3399 = vmul.f32 %v2639, %v3269
    %v3400 = vmul.f32 %v2680, %v3284
    %v3401 = vmul.f32 %v2721, %v3299
    %v3402 = vmul.f32 %v2762, %v3314
    %v3403 = vmul.f32 %v2642, %v3329
    %v3404 = vmul.f32 %v2683, %v3344
    %v3405 = vmul.f32 %v2724, %v3359
    %v3406 = vmul.f32 %v2765, %v3374
    %s3407 = scalar_lea.vmem %s4, 192
    %v3408 = vld [vmem:[%s3407] sm:$0xff]
    %3409 = vset.pattern.permute.xlu0 3
    %3410 = vperm.xlu0 %3409, %v51
    %v3411 = vpop.permute.xlu0 %3410
    %v3414 = vsel %vm840, %v3408, 0
    %3416 = vmatpush.msra.mxu0 0.0
    %3417 = vmatpush.msra.mxu0 0.0
    %3418 = vmatpush.msra.mxu0 0.0
    %3419 = vmatpush.msra.mxu0 0.0
    %3420 = vmatpush.msra.mxu0 0.0
    %3421 = vmatpush.msra.mxu0 0.0
    %3422 = vmatpush.msra.mxu0 0.0
    %3423 = vmatpush.msra.mxu0 0.0
    %3424 = vmatpush.msra.mxu0 %v3403
    %3425 = vmatpush.msra.mxu0 %v3399
    %3426 = vmatpush.msra.mxu0 %v3395
    %3427 = vmatpush.msra.mxu0 %v3391
    %3428 = vmatpush.msra.mxu0 %v3387
    %3429 = vmatpush.msra.mxu0 %v3383
    %3430 = vmatpush.msra.mxu0 %v3379
    %3431 = vmatpush.msra.mxu0 %v3375
    %3432 = vmatmul.f32.gmra.mxu0 %v3414
    %v3433 = vpop.f32.mrf.mxu0
    %v3434 = vadd.f32 %v3411, %v3433
    %3435 = vdwg.mxu0
    %3436 = vmatpush.msra.mxu0 0.0
    %3437 = vmatpush.msra.mxu0 0.0
    %3438 = vmatpush.msra.mxu0 0.0
    %3439 = vmatpush.msra.mxu0 0.0
    %3440 = vmatpush.msra.mxu0 0.0
    %3441 = vmatpush.msra.mxu0 0.0
    %3442 = vmatpush.msra.mxu0 0.0
    %3443 = vmatpush.msra.mxu0 0.0
    %3444 = vmatpush.msra.mxu0 %v3404
    %3445 = vmatpush.msra.mxu0 %v3400
    %3446 = vmatpush.msra.mxu0 %v3396
    %3447 = vmatpush.msra.mxu0 %v3392
    %3448 = vmatpush.msra.mxu0 %v3388
    %3449 = vmatpush.msra.mxu0 %v3384
    %3450 = vmatpush.msra.mxu0 %v3380
    %3451 = vmatpush.msra.mxu0 %v3376
    %3452 = vmatmul.f32.gmra.mxu0 %v3414
    %v3453 = vpop.f32.mrf.mxu0
    %v3454 = vadd.f32 %v3411, %v3453
    %3455 = vdwg.mxu0
    %3456 = vmatpush.msra.mxu0 0.0
    %3457 = vmatpush.msra.mxu0 0.0
    %3458 = vmatpush.msra.mxu0 0.0
    %3459 = vmatpush.msra.mxu0 0.0
    %3460 = vmatpush.msra.mxu0 0.0
    %3461 = vmatpush.msra.mxu0 0.0
    %3462 = vmatpush.msra.mxu0 0.0
    %3463 = vmatpush.msra.mxu0 0.0
    %3464 = vmatpush.msra.mxu0 %v3405
    %3465 = vmatpush.msra.mxu0 %v3401
    %3466 = vmatpush.msra.mxu0 %v3397
    %3467 = vmatpush.msra.mxu0 %v3393
    %3468 = vmatpush.msra.mxu0 %v3389
    %3469 = vmatpush.msra.mxu0 %v3385
    %3470 = vmatpush.msra.mxu0 %v3381
    %3471 = vmatpush.msra.mxu0 %v3377
    %3472 = vmatmul.f32.gmra.mxu0 %v3414
    %v3473 = vpop.f32.mrf.mxu0
    %v3474 = vadd.f32 %v3411, %v3473
    %3475 = vdwg.mxu0
    %3476 = vmatpush.msra.mxu0 0.0
    %3477 = vmatpush.msra.mxu0 0.0
    %3478 = vmatpush.msra.mxu0 0.0
    %3479 = vmatpush.msra.mxu0 0.0
    %3480 = vmatpush.msra.mxu0 0.0
    %3481 = vmatpush.msra.mxu0 0.0
    %3482 = vmatpush.msra.mxu0 0.0
    %3483 = vmatpush.msra.mxu0 0.0
    %3484 = vmatpush.msra.mxu0 %v3406
    %3485 = vmatpush.msra.mxu0 %v3402
    %3486 = vmatpush.msra.mxu0 %v3398
    %3487 = vmatpush.msra.mxu0 %v3394
    %3488 = vmatpush.msra.mxu0 %v3390
    %3489 = vmatpush.msra.mxu0 %v3386
    %3490 = vmatpush.msra.mxu0 %v3382
    %3491 = vmatpush.msra.mxu0 %v3378
    %3492 = vmatmul.f32.gmra.mxu0 %v3414
    %v3493 = vpop.f32.mrf.mxu0
    %v3494 = vadd.f32 %v3411, %v3493
    %3495 = vdwg.mxu0
    %v3496 = vmul.f32 %v46, %v46
    %v3497 = vmul.f32 %v48, %v48
    %v3498 = vsub.f32 %v3496, %v3497
    %v3499 = vmul.f32 %v48, %v46
    %v3500 = vadd.f32 %v3499, %v3499
    %v3501 = vmul.f32 %v3498, %v46
    %v3502 = vmul.f32 %v3500, %v48
    %v3503 = vsub.f32 %v3501, %v3502
    %v3504 = vmul.f32 %v3500, %v46
    %v3505 = vmul.f32 %v3498, %v48
    %v3506 = vadd.f32 %v3504, %v3505
    %v3507 = vmul.f32 %v3503, %v46
    %v3508 = vmul.f32 %v3506, %v48
    %v3509 = vsub.f32 %v3507, %v3508
    %v3510 = vmul.f32 %v3506, %v46
    %v3511 = vmul.f32 %v3503, %v48
    %v3512 = vadd.f32 %v3510, %v3511
    %v3513 = vmul.f32 %v3509, %v46
    %v3514 = vmul.f32 %v3512, %v48
    %v3515 = vsub.f32 %v3513, %v3514
    %v3516 = vmul.f32 %v3512, %v46
    %v3517 = vmul.f32 %v3509, %v48
    %v3518 = vadd.f32 %v3516, %v3517
    %v3520 = vperm.slane %v46, 0
    %v3521 = vperm.slane %v46, 1
    %v3522 = vperm.slane %v46, 2
    %v3523 = vperm.slane %v46, 3
    %v3529 = vperm.slane %v3498, 0
    %v3530 = vperm.slane %v3498, 1
    %v3531 = vperm.slane %v3498, 2
    %v3532 = vperm.slane %v3498, 3
    %v3538 = vperm.slane %v3503, 0
    %v3539 = vperm.slane %v3503, 1
    %v3540 = vperm.slane %v3503, 2
    %v3541 = vperm.slane %v3503, 3
    %v3547 = vperm.slane %v3509, 0
    %v3548 = vperm.slane %v3509, 1
    %v3549 = vperm.slane %v3509, 2
    %v3550 = vperm.slane %v3509, 3
    %v3556 = vperm.slane %v3515, 0
    %v3557 = vperm.slane %v3515, 1
    %v3558 = vperm.slane %v3515, 2
    %v3559 = vperm.slane %v3515, 3
    %vm3564 = vcmask 1040384
    %v3565 = vsel %vm3564, 1.0, %v3520
    %v3566 = vsel %vm3564, 1.0, %v3521
    %v3567 = vsel %vm3564, 1.0, %v3522
    %v3568 = vsel %vm3564, 1.0, %v3523
    %vm3569 = vcmask 1041408
    %v3570 = vsel %vm3569, %v3565, %v3529
    %v3571 = vsel %vm3569, %v3566, %v3530
    %v3572 = vsel %vm3569, %v3567, %v3531
    %v3573 = vsel %vm3569, %v3568, %v3532
    %vm3574 = vcmask 1042432
    %v3575 = vsel %vm3574, %v3570, %v3538
    %v3576 = vsel %vm3574, %v3571, %v3539
    %v3577 = vsel %vm3574, %v3572, %v3540
    %v3578 = vsel %vm3574, %v3573, %v3541
    %vm3579 = vcmask 1043456
    %v3580 = vsel %vm3579, %v3575, %v3547
    %v3581 = vsel %vm3579, %v3576, %v3548
    %v3582 = vsel %vm3579, %v3577, %v3549
    %v3583 = vsel %vm3579, %v3578, %v3550
    %vm3584 = vcmask 1044480
    %v3585 = vsel %vm3584, %v3580, %v3556
    %v3586 = vsel %vm3584, %v3581, %v3557
    %v3587 = vsel %vm3584, %v3582, %v3558
    %v3588 = vsel %vm3584, %v3583, %v3559
    %vm3589 = vcmask 1045504
    %v3590 = vsel %vm3589, %v3585, 0.0
    %v3591 = vsel %vm3589, %v3586, 0.0
    %v3592 = vsel %vm3589, %v3587, 0.0
    %v3593 = vsel %vm3589, %v3588, 0.0
    %vm3594 = vcmask 1046528
    %v3595 = vsel %vm3594, %v3590, 0.0
    %v3596 = vsel %vm3594, %v3591, 0.0
    %v3597 = vsel %vm3594, %v3592, 0.0
    %v3598 = vsel %vm3594, %v3593, 0.0
    %v3600 = vperm.slane %v48, 0
    %v3601 = vperm.slane %v48, 1
    %v3602 = vperm.slane %v48, 2
    %v3603 = vperm.slane %v48, 3
    %v3609 = vperm.slane %v3500, 0
    %v3610 = vperm.slane %v3500, 1
    %v3611 = vperm.slane %v3500, 2
    %v3612 = vperm.slane %v3500, 3
    %v3618 = vperm.slane %v3506, 0
    %v3619 = vperm.slane %v3506, 1
    %v3620 = vperm.slane %v3506, 2
    %v3621 = vperm.slane %v3506, 3
    %v3627 = vperm.slane %v3512, 0
    %v3628 = vperm.slane %v3512, 1
    %v3629 = vperm.slane %v3512, 2
    %v3630 = vperm.slane %v3512, 3
    %v3636 = vperm.slane %v3518, 0
    %v3637 = vperm.slane %v3518, 1
    %v3638 = vperm.slane %v3518, 2
    %v3639 = vperm.slane %v3518, 3
    %v3644 = vsel %vm3564, 0.0, %v3600
    %v3645 = vsel %vm3564, 0.0, %v3601
    %v3646 = vsel %vm3564, 0.0, %v3602
    %v3647 = vsel %vm3564, 0.0, %v3603
    %v3648 = vsel %vm3569, %v3644, %v3609
    %v3649 = vsel %vm3569, %v3645, %v3610
    %v3650 = vsel %vm3569, %v3646, %v3611
    %v3651 = vsel %vm3569, %v3647, %v3612
    %v3652 = vsel %vm3574, %v3648, %v3618
    %v3653 = vsel %vm3574, %v3649, %v3619
    %v3654 = vsel %vm3574, %v3650, %v3620
    %v3655 = vsel %vm3574, %v3651, %v3621
    %v3656 = vsel %vm3579, %v3652, %v3627
    %v3657 = vsel %vm3579, %v3653, %v3628
    %v3658 = vsel %vm3579, %v3654, %v3629
    %v3659 = vsel %vm3579, %v3655, %v3630
    %v3660 = vsel %vm3584, %v3656, %v3636
    %v3661 = vsel %vm3584, %v3657, %v3637
    %v3662 = vsel %vm3584, %v3658, %v3638
    %v3663 = vsel %vm3584, %v3659, %v3639
    %v3664 = vsel %vm3589, %v3660, 0.0
    %v3665 = vsel %vm3589, %v3661, 0.0
    %v3666 = vsel %vm3589, %v3662, 0.0
    %v3667 = vsel %vm3589, %v3663, 0.0
    %v3668 = vsel %vm3594, %v3664, 0.0
    %v3669 = vsel %vm3594, %v3665, 0.0
    %v3670 = vsel %vm3594, %v3666, 0.0
    %v3671 = vsel %vm3594, %v3667, 0.0
    %v3672 = vmul.f32 %v3434, %v3595
    %v3673 = vmul.f32 %v3454, %v3596
    %v3674 = vmul.f32 %v3474, %v3597
    %v3675 = vmul.f32 %v3494, %v3598
    %v3676 = vmul.f32 %v3434, %v3668
    %v3677 = vmul.f32 %v3454, %v3669
    %v3678 = vmul.f32 %v3474, %v3670
    %v3679 = vmul.f32 %v3494, %v3671
    %v3680 = vld [vmem:[%s6] sm:$0xff]
    %v3681 = vld [vmem:[%s6 + $0x8] sm:$0xff]
    %v3682 = vld [vmem:[%s6 + $0x10] sm:$0xff]
    %v3683 = vld [vmem:[%s6 + $0x18] sm:$0xff]
    %v3684 = vld [vmem:[%s7] sm:$0xff]
    %v3685 = vld [vmem:[%s7 + $0x8] sm:$0xff]
    %v3686 = vld [vmem:[%s7 + $0x10] sm:$0xff]
    %v3687 = vld [vmem:[%s7 + $0x18] sm:$0xff]
    %3689 = vset.pattern.permute.xlu0 0
    %3690 = vperm.xlu0 %3689, %v3684
    %v3691 = vpop.permute.xlu0 %3690
    %3694 = vset.pattern.permute.xlu0 0
    %3695 = vperm.xlu0 %3694, %v3685
    %v3696 = vpop.permute.xlu0 %3695
    %3699 = vset.pattern.permute.xlu0 0
    %3700 = vperm.xlu0 %3699, %v3686
    %v3701 = vpop.permute.xlu0 %3700
    %3704 = vset.pattern.permute.xlu0 0
    %3705 = vperm.xlu0 %3704, %v3687
    %v3706 = vpop.permute.xlu0 %3705
    %vm3708 = vcmask 130048
    %v3710 = vsel %vm3708, %v3680, 0
    %v3713 = vsel %vm3708, %v3681, 0
    %v3716 = vsel %vm3708, %v3682, 0
    %v3719 = vsel %vm3708, %v3683, 0
    %3721 = vmatpush.msra.mxu0 0.0
    %3722 = vmatpush.msra.mxu0 0.0
    %3723 = vmatpush.msra.mxu0 0.0
    %3724 = vmatpush.msra.mxu0 0.0
    %3725 = vmatpush.msra.mxu0 0.0
    %3726 = vmatpush.msra.mxu0 0.0
    %3727 = vmatpush.msra.mxu0 0.0
    %3728 = vmatpush.msra.mxu0 0.0
    %3729 = vmatpush.msra.mxu0 0.0
    %3730 = vmatpush.msra.mxu0 0.0
    %3731 = vmatpush.msra.mxu0 0.0
    %3732 = vmatpush.msra.mxu0 0.0
    %3733 = vmatpush.msra.mxu0 0.0
    %3734 = vmatpush.msra.mxu0 0.0
    %3735 = vmatpush.msra.mxu0 %v3676
    %3736 = vmatpush.msra.mxu0 %v3672
    %3737 = vmatmul.f32.gmra.mxu0 %v3710
    %v3738 = vpop.f32.mrf.mxu0
    %v3739 = vadd.f32 %v3691, %v3738
    %3740 = vmatmul.f32.gmra.mxu0 %v3713
    %v3741 = vpop.f32.mrf.mxu0
    %v3742 = vadd.f32 %v3696, %v3741
    %3743 = vmatmul.f32.gmra.mxu0 %v3716
    %v3744 = vpop.f32.mrf.mxu0
    %v3745 = vadd.f32 %v3701, %v3744
    %3746 = vmatmul.f32.gmra.mxu0 %v3719
    %v3747 = vpop.f32.mrf.mxu0
    %v3748 = vadd.f32 %v3706, %v3747
    %3749 = vdwg.mxu0
    %3750 = vmatpush.msra.mxu0 0.0
    %3751 = vmatpush.msra.mxu0 0.0
    %3752 = vmatpush.msra.mxu0 0.0
    %3753 = vmatpush.msra.mxu0 0.0
    %3754 = vmatpush.msra.mxu0 0.0
    %3755 = vmatpush.msra.mxu0 0.0
    %3756 = vmatpush.msra.mxu0 0.0
    %3757 = vmatpush.msra.mxu0 0.0
    %3758 = vmatpush.msra.mxu0 0.0
    %3759 = vmatpush.msra.mxu0 0.0
    %3760 = vmatpush.msra.mxu0 0.0
    %3761 = vmatpush.msra.mxu0 0.0
    %3762 = vmatpush.msra.mxu0 0.0
    %3763 = vmatpush.msra.mxu0 0.0
    %3764 = vmatpush.msra.mxu0 %v3677
    %3765 = vmatpush.msra.mxu0 %v3673
    %3766 = vmatmul.f32.gmra.mxu0 %v3710
    %v3767 = vpop.f32.mrf.mxu0
    %v3768 = vadd.f32 %v3691, %v3767
    %3769 = vmatmul.f32.gmra.mxu0 %v3713
    %v3770 = vpop.f32.mrf.mxu0
    %v3771 = vadd.f32 %v3696, %v3770
    %3772 = vmatmul.f32.gmra.mxu0 %v3716
    %v3773 = vpop.f32.mrf.mxu0
    %v3774 = vadd.f32 %v3701, %v3773
    %3775 = vmatmul.f32.gmra.mxu0 %v3719
    %v3776 = vpop.f32.mrf.mxu0
    %v3777 = vadd.f32 %v3706, %v3776
    %3778 = vdwg.mxu0
    %3779 = vmatpush.msra.mxu0 0.0
    %3780 = vmatpush.msra.mxu0 0.0
    %3781 = vmatpush.msra.mxu0 0.0
    %3782 = vmatpush.msra.mxu0 0.0
    %3783 = vmatpush.msra.mxu0 0.0
    %3784 = vmatpush.msra.mxu0 0.0
    %3785 = vmatpush.msra.mxu0 0.0
    %3786 = vmatpush.msra.mxu0 0.0
    %3787 = vmatpush.msra.mxu0 0.0
    %3788 = vmatpush.msra.mxu0 0.0
    %3789 = vmatpush.msra.mxu0 0.0
    %3790 = vmatpush.msra.mxu0 0.0
    %3791 = vmatpush.msra.mxu0 0.0
    %3792 = vmatpush.msra.mxu0 0.0
    %3793 = vmatpush.msra.mxu0 %v3678
    %3794 = vmatpush.msra.mxu0 %v3674
    %3795 = vmatmul.f32.gmra.mxu0 %v3710
    %v3796 = vpop.f32.mrf.mxu0
    %v3797 = vadd.f32 %v3691, %v3796
    %3798 = vmatmul.f32.gmra.mxu0 %v3713
    %v3799 = vpop.f32.mrf.mxu0
    %v3800 = vadd.f32 %v3696, %v3799
    %3801 = vmatmul.f32.gmra.mxu0 %v3716
    %v3802 = vpop.f32.mrf.mxu0
    %v3803 = vadd.f32 %v3701, %v3802
    %3804 = vmatmul.f32.gmra.mxu0 %v3719
    %v3805 = vpop.f32.mrf.mxu0
    %v3806 = vadd.f32 %v3706, %v3805
    %3807 = vdwg.mxu0
    %3808 = vmatpush.msra.mxu0 0.0
    %3809 = vmatpush.msra.mxu0 0.0
    %3810 = vmatpush.msra.mxu0 0.0
    %3811 = vmatpush.msra.mxu0 0.0
    %3812 = vmatpush.msra.mxu0 0.0
    %3813 = vmatpush.msra.mxu0 0.0
    %3814 = vmatpush.msra.mxu0 0.0
    %3815 = vmatpush.msra.mxu0 0.0
    %3816 = vmatpush.msra.mxu0 0.0
    %3817 = vmatpush.msra.mxu0 0.0
    %3818 = vmatpush.msra.mxu0 0.0
    %3819 = vmatpush.msra.mxu0 0.0
    %3820 = vmatpush.msra.mxu0 0.0
    %3821 = vmatpush.msra.mxu0 0.0
    %3822 = vmatpush.msra.mxu0 %v3679
    %3823 = vmatpush.msra.mxu0 %v3675
    %3824 = vmatmul.f32.gmra.mxu0 %v3710
    %v3825 = vpop.f32.mrf.mxu0
    %v3826 = vadd.f32 %v3691, %v3825
    %3827 = vmatmul.f32.gmra.mxu0 %v3713
    %v3828 = vpop.f32.mrf.mxu0
    %v3829 = vadd.f32 %v3696, %v3828
    %3830 = vmatmul.f32.gmra.mxu0 %v3716
    %v3831 = vpop.f32.mrf.mxu0
    %v3832 = vadd.f32 %v3701, %v3831
    %3833 = vmatmul.f32.gmra.mxu0 %v3719
    %v3834 = vpop.f32.mrf.mxu0
    %v3835 = vadd.f32 %v3706, %v3834
    %3836 = vdwg.mxu0
    %v3838 = vperm.slane %v50, 0
    %v3839 = vperm.slane %v50, 1
    %v3840 = vperm.slane %v50, 2
    %v3841 = vperm.slane %v50, 3
    %v3846 = vmul.f32 %v3739, %v3838
    %v3847 = vmul.f32 %v3768, %v3839
    %v3848 = vmul.f32 %v3797, %v3840
    %v3849 = vmul.f32 %v3826, %v3841
    %v3850 = vmul.f32 %v3742, %v3838
    %v3851 = vmul.f32 %v3771, %v3839
    %v3852 = vmul.f32 %v3800, %v3840
    %v3853 = vmul.f32 %v3829, %v3841
    %v3854 = vmul.f32 %v3745, %v3838
    %v3855 = vmul.f32 %v3774, %v3839
    %v3856 = vmul.f32 %v3803, %v3840
    %v3857 = vmul.f32 %v3832, %v3841
    %v3858 = vmul.f32 %v3748, %v3838
    %v3859 = vmul.f32 %v3777, %v3839
    %v3860 = vmul.f32 %v3806, %v3840
    %v3861 = vmul.f32 %v3835, %v3841
    %v3862 = vld [vmem:[%s2] sm:$0xff]
    %v3863 = vld [vmem:[%s2 + $0x8] sm:$0xff]
    %v3864 = vld [vmem:[%s2 + $0x10] sm:$0xff]
    %v3865 = vld [vmem:[%s2 + $0x18] sm:$0xff]
    %v3866 = vld [vmem:[%s2 + $0x20] sm:$0xff]
    %v3867 = vld [vmem:[%s2 + $0x28] sm:$0xff]
    %v3868 = vld [vmem:[%s2 + $0x30] sm:$0xff]
    %v3869 = vld [vmem:[%s2 + $0x38] sm:$0xff]
    %v3870 = vld [vmem:[%s2 + $0x40] sm:$0xff]
    %v3871 = vld [vmem:[%s2 + $0x48] sm:$0xff]
    %v3872 = vld [vmem:[%s2 + $0x50] sm:$0xff]
    %v3873 = vld [vmem:[%s2 + $0x58] sm:$0xff]
    %v3874 = vld [vmem:[%s2 + $0x60] sm:$0xff]
    %v3875 = vld [vmem:[%s2 + $0x68] sm:$0xff]
    %v3876 = vld [vmem:[%s2 + $0x70] sm:$0xff]
    %v3877 = vld [vmem:[%s2 + $0x78] sm:$0xff]
    %v3878 = vld [vmem:[%s2 + $0x80] sm:$0xff]
    %v3879 = vld [vmem:[%s2 + $0x88] sm:$0xff]
    %v3880 = vld [vmem:[%s2 + $0x90] sm:$0xff]
    %v3881 = vld [vmem:[%s2 + $0x98] sm:$0xff]
    %v3882 = vld [vmem:[%s2 + $0xa0] sm:$0xff]
    %v3883 = vld [vmem:[%s2 + $0xa8] sm:$0xff]
    %v3884 = vld [vmem:[%s2 + $0xb0] sm:$0xff]
    %v3885 = vld [vmem:[%s2 + $0xb8] sm:$0xff]
    %v3886 = vld [vmem:[%s2 + $0xc0] sm:$0xff]
    %v3887 = vld [vmem:[%s2 + $0xc8] sm:$0xff]
    %v3888 = vld [vmem:[%s2 + $0xd0] sm:$0xff]
    %v3889 = vld [vmem:[%s2 + $0xd8] sm:$0xff]
    %v3890 = vld [vmem:[%s2 + $0xe0] sm:$0xff]
    %v3891 = vld [vmem:[%s2 + $0xe8] sm:$0xff]
    %v3892 = vld [vmem:[%s2 + $0xf0] sm:$0xff]
    %v3893 = vld [vmem:[%s2 + $0xf8] sm:$0xff]
    %v3894 = vld [vmem:[%s2 + $0x100] sm:$0xff]
    %v3895 = vld [vmem:[%s2 + $0x108] sm:$0xff]
    %v3896 = vld [vmem:[%s2 + $0x110] sm:$0xff]
    %v3897 = vld [vmem:[%s2 + $0x118] sm:$0xff]
    %v3898 = vld [vmem:[%s2 + $0x120] sm:$0xff]
    %v3899 = vld [vmem:[%s2 + $0x128] sm:$0xff]
    %v3900 = vld [vmem:[%s2 + $0x130] sm:$0xff]
    %v3901 = vld [vmem:[%s2 + $0x138] sm:$0xff]
    %v3902 = vld [vmem:[%s2 + $0x140] sm:$0xff]
    %v3903 = vld [vmem:[%s2 + $0x148] sm:$0xff]
    %v3904 = vld [vmem:[%s2 + $0x150] sm:$0xff]
    %v3905 = vld [vmem:[%s2 + $0x158] sm:$0xff]
    %v3906 = vld [vmem:[%s2 + $0x160] sm:$0xff]
    %v3907 = vld [vmem:[%s2 + $0x168] sm:$0xff]
    %v3908 = vld [vmem:[%s2 + $0x170] sm:$0xff]
    %v3909 = vld [vmem:[%s2 + $0x178] sm:$0xff]
    %v3910 = vld [vmem:[%s2 + $0x180] sm:$0xff]
    %v3911 = vld [vmem:[%s2 + $0x188] sm:$0xff]
    %v3912 = vld [vmem:[%s2 + $0x190] sm:$0xff]
    %v3913 = vld [vmem:[%s2 + $0x198] sm:$0xff]
    %v3914 = vld [vmem:[%s2 + $0x1a0] sm:$0xff]
    %v3915 = vld [vmem:[%s2 + $0x1a8] sm:$0xff]
    %v3916 = vld [vmem:[%s2 + $0x1b0] sm:$0xff]
    %v3917 = vld [vmem:[%s2 + $0x1b8] sm:$0xff]
    %v3918 = vld [vmem:[%s2 + $0x1c0] sm:$0xff]
    %v3919 = vld [vmem:[%s2 + $0x1c8] sm:$0xff]
    %v3920 = vld [vmem:[%s2 + $0x1d0] sm:$0xff]
    %v3921 = vld [vmem:[%s2 + $0x1d8] sm:$0xff]
    %v3922 = vld [vmem:[%s2 + $0x1e0] sm:$0xff]
    %v3923 = vld [vmem:[%s2 + $0x1e8] sm:$0xff]
    %v3924 = vld [vmem:[%s2 + $0x1f0] sm:$0xff]
    %v3925 = vld [vmem:[%s2 + $0x1f8] sm:$0xff]
    %3926 = vmatpush.msra.mxu0 %v3877
    %3927 = vmatpush.msra.mxu0 %v3876
    %3928 = vmatpush.msra.mxu0 %v3875
    %3929 = vmatpush.msra.mxu0 %v3874
    %3930 = vmatpush.msra.mxu0 %v3873
    %3931 = vmatpush.msra.mxu0 %v3872
    %3932 = vmatpush.msra.mxu0 %v3871
    %3933 = vmatpush.msra.mxu0 %v3870
    %3934 = vmatpush.msra.mxu0 %v3869
    %3935 = vmatpush.msra.mxu0 %v3868
    %3936 = vmatpush.msra.mxu0 %v3867
    %3937 = vmatpush.msra.mxu0 %v3866
    %3938 = vmatpush.msra.mxu0 %v3865
    %3939 = vmatpush.msra.mxu0 %v3864
    %3940 = vmatpush.msra.mxu0 %v3863
    %3941 = vmatpush.msra.mxu0 %v3862
    %3942 = vmatmul.f32.gmra.mxu0 %v3739
    %v3943 = vpop.f32.mrf.mxu0
    %v3944 = vadd.f32 0.0, %v3943
    %3945 = vmatmul.f32.gmra.mxu0 %v3742
    %v3946 = vpop.f32.mrf.mxu0
    %v3947 = vadd.f32 0.0, %v3946
    %3948 = vmatmul.f32.gmra.mxu0 %v3745
    %v3949 = vpop.f32.mrf.mxu0
    %v3950 = vadd.f32 0.0, %v3949
    %3951 = vmatmul.f32.gmra.mxu0 %v3748
    %v3952 = vpop.f32.mrf.mxu0
    %v3953 = vadd.f32 0.0, %v3952
    %3954 = vdwg.mxu0
    %3955 = vmatpush.msra.mxu0 %v3893
    %3956 = vmatpush.msra.mxu0 %v3892
    %3957 = vmatpush.msra.mxu0 %v3891
    %3958 = vmatpush.msra.mxu0 %v3890
    %3959 = vmatpush.msra.mxu0 %v3889
    %3960 = vmatpush.msra.mxu0 %v3888
    %3961 = vmatpush.msra.mxu0 %v3887
    %3962 = vmatpush.msra.mxu0 %v3886
    %3963 = vmatpush.msra.mxu0 %v3885
    %3964 = vmatpush.msra.mxu0 %v3884
    %3965 = vmatpush.msra.mxu0 %v3883
    %3966 = vmatpush.msra.mxu0 %v3882
    %3967 = vmatpush.msra.mxu0 %v3881
    %3968 = vmatpush.msra.mxu0 %v3880
    %3969 = vmatpush.msra.mxu0 %v3879
    %3970 = vmatpush.msra.mxu0 %v3878
    %3971 = vmatmul.f32.gmra.mxu0 %v3768
    %v3972 = vpop.f32.mrf.mxu0
    %v3973 = vadd.f32 %v3944, %v3972
    %3974 = vmatmul.f32.gmra.mxu0 %v3771
    %v3975 = vpop.f32.mrf.mxu0
    %v3976 = vadd.f32 %v3947, %v3975
    %3977 = vmatmul.f32.gmra.mxu0 %v3774
    %v3978 = vpop.f32.mrf.mxu0
    %v3979 = vadd.f32 %v3950, %v3978
    %3980 = vmatmul.f32.gmra.mxu0 %v3777
    %v3981 = vpop.f32.mrf.mxu0
    %v3982 = vadd.f32 %v3953, %v3981
    %3983 = vdwg.mxu0
    %3984 = vmatpush.msra.mxu0 %v3909
    %3985 = vmatpush.msra.mxu0 %v3908
    %3986 = vmatpush.msra.mxu0 %v3907
    %3987 = vmatpush.msra.mxu0 %v3906
    %3988 = vmatpush.msra.mxu0 %v3905
    %3989 = vmatpush.msra.mxu0 %v3904
    %3990 = vmatpush.msra.mxu0 %v3903
    %3991 = vmatpush.msra.mxu0 %v3902
    %3992 = vmatpush.msra.mxu0 %v3901
    %3993 = vmatpush.msra.mxu0 %v3900
    %3994 = vmatpush.msra.mxu0 %v3899
    %3995 = vmatpush.msra.mxu0 %v3898
    %3996 = vmatpush.msra.mxu0 %v3897
    %3997 = vmatpush.msra.mxu0 %v3896
    %3998 = vmatpush.msra.mxu0 %v3895
    %3999 = vmatpush.msra.mxu0 %v3894
    %4000 = vmatmul.f32.gmra.mxu0 %v3797
    %v4001 = vpop.f32.mrf.mxu0
    %v4002 = vadd.f32 %v3973, %v4001
    %4003 = vmatmul.f32.gmra.mxu0 %v3800
    %v4004 = vpop.f32.mrf.mxu0
    %v4005 = vadd.f32 %v3976, %v4004
    %4006 = vmatmul.f32.gmra.mxu0 %v3803
    %v4007 = vpop.f32.mrf.mxu0
    %v4008 = vadd.f32 %v3979, %v4007
    %4009 = vmatmul.f32.gmra.mxu0 %v3806
    %v4010 = vpop.f32.mrf.mxu0
    %v4011 = vadd.f32 %v3982, %v4010
    %4012 = vdwg.mxu0
    %4013 = vmatpush.msra.mxu0 %v3925
    %4014 = vmatpush.msra.mxu0 %v3924
    %4015 = vmatpush.msra.mxu0 %v3923
    %4016 = vmatpush.msra.mxu0 %v3922
    %4017 = vmatpush.msra.mxu0 %v3921
    %4018 = vmatpush.msra.mxu0 %v3920
    %4019 = vmatpush.msra.mxu0 %v3919
    %4020 = vmatpush.msra.mxu0 %v3918
    %4021 = vmatpush.msra.mxu0 %v3917
    %4022 = vmatpush.msra.mxu0 %v3916
    %4023 = vmatpush.msra.mxu0 %v3915
    %4024 = vmatpush.msra.mxu0 %v3914
    %4025 = vmatpush.msra.mxu0 %v3913
    %4026 = vmatpush.msra.mxu0 %v3912
    %4027 = vmatpush.msra.mxu0 %v3911
    %4028 = vmatpush.msra.mxu0 %v3910
    %4029 = vmatmul.f32.gmra.mxu0 %v3826
    %v4030 = vpop.f32.mrf.mxu0
    %v4031 = vadd.f32 %v4002, %v4030
    %4032 = vmatmul.f32.gmra.mxu0 %v3829
    %v4033 = vpop.f32.mrf.mxu0
    %v4034 = vadd.f32 %v4005, %v4033
    %4035 = vmatmul.f32.gmra.mxu0 %v3832
    %v4036 = vpop.f32.mrf.mxu0
    %v4037 = vadd.f32 %v4008, %v4036
    %4038 = vmatmul.f32.gmra.mxu0 %v3835
    %v4039 = vpop.f32.mrf.mxu0
    %v4040 = vadd.f32 %v4011, %v4039
    %4041 = vdwg.mxu0
    %v4042 = vld [vmem:[%s8] sm:$0xff]
    %v4043 = vld [vmem:[%s8 + $0x8] sm:$0xff]
    %v4044 = vld [vmem:[%s8 + $0x10] sm:$0xff]
    %v4045 = vld [vmem:[%s8 + $0x18] sm:$0xff]
    %v4046 = vld [vmem:[%s8 + $0x20] sm:$0xff]
    %v4047 = vld [vmem:[%s8 + $0x28] sm:$0xff]
    %v4048 = vld [vmem:[%s8 + $0x30] sm:$0xff]
    %v4049 = vld [vmem:[%s8 + $0x38] sm:$0xff]
    %v4050 = vld [vmem:[%s10] sm:$0xff]
    %v4051 = vld [vmem:[%s10 + $0x8] sm:$0xff]
    %v4052 = vld [vmem:[%s10 + $0x10] sm:$0xff]
    %v4053 = vld [vmem:[%s10 + $0x18] sm:$0xff]
    %v4054 = vld [vmem:[%s10 + $0x20] sm:$0xff]
    %v4055 = vld [vmem:[%s10 + $0x28] sm:$0xff]
    %v4056 = vld [vmem:[%s10 + $0x30] sm:$0xff]
    %v4057 = vld [vmem:[%s10 + $0x38] sm:$0xff]
    %4059 = vset.pattern.permute.xlu0 0
    %4060 = vperm.xlu0 %4059, %v4050
    %v4061 = vpop.permute.xlu0 %4060
    %4064 = vset.pattern.permute.xlu0 0
    %4065 = vperm.xlu0 %4064, %v4051
    %v4066 = vpop.permute.xlu0 %4065
    %4069 = vset.pattern.permute.xlu0 0
    %4070 = vperm.xlu0 %4069, %v4052
    %v4071 = vpop.permute.xlu0 %4070
    %4074 = vset.pattern.permute.xlu0 0
    %4075 = vperm.xlu0 %4074, %v4053
    %v4076 = vpop.permute.xlu0 %4075
    %4079 = vset.pattern.permute.xlu0 0
    %4080 = vperm.xlu0 %4079, %v4054
    %v4081 = vpop.permute.xlu0 %4080
    %4084 = vset.pattern.permute.xlu0 0
    %4085 = vperm.xlu0 %4084, %v4055
    %v4086 = vpop.permute.xlu0 %4085
    %4089 = vset.pattern.permute.xlu0 0
    %4090 = vperm.xlu0 %4089, %v4056
    %v4091 = vpop.permute.xlu0 %4090
    %4094 = vset.pattern.permute.xlu0 0
    %4095 = vperm.xlu0 %4094, %v4057
    %v4096 = vpop.permute.xlu0 %4095
    %vm4098 = vcmask 261120
    %v4100 = vsel %vm4098, %v4042, 0
    %v4103 = vsel %vm4098, %v4043, 0
    %v4106 = vsel %vm4098, %v4044, 0
    %v4109 = vsel %vm4098, %v4045, 0
    %v4112 = vsel %vm4098, %v4046, 0
    %v4115 = vsel %vm4098, %v4047, 0
    %v4118 = vsel %vm4098, %v4048, 0
    %v4121 = vsel %vm4098, %v4049, 0
    %4123 = vmatpush.msra.mxu0 0.0
    %4124 = vmatpush.msra.mxu0 0.0
    %4125 = vmatpush.msra.mxu0 0.0
    %4126 = vmatpush.msra.mxu0 0.0
    %4127 = vmatpush.msra.mxu0 0.0
    %4128 = vmatpush.msra.mxu0 0.0
    %4129 = vmatpush.msra.mxu0 0.0
    %4130 = vmatpush.msra.mxu0 0.0
    %4131 = vmatpush.msra.mxu0 0.0
    %4132 = vmatpush.msra.mxu0 0.0
    %4133 = vmatpush.msra.mxu0 0.0
    %4134 = vmatpush.msra.mxu0 0.0
    %4135 = vmatpush.msra.mxu0 %v4040
    %4136 = vmatpush.msra.mxu0 %v4037
    %4137 = vmatpush.msra.mxu0 %v4034
    %4138 = vmatpush.msra.mxu0 %v4031
    %4139 = vmatmul.f32.gmra.mxu0 %v4100
    %v4140 = vpop.f32.mrf.mxu0
    %v4141 = vadd.f32 %v4061, %v4140
    %4142 = vmatmul.f32.gmra.mxu0 %v4103
    %v4143 = vpop.f32.mrf.mxu0
    %v4144 = vadd.f32 %v4066, %v4143
    %4145 = vmatmul.f32.gmra.mxu0 %v4106
    %v4146 = vpop.f32.mrf.mxu0
    %v4147 = vadd.f32 %v4071, %v4146
    %4148 = vmatmul.f32.gmra.mxu0 %v4109
    %v4149 = vpop.f32.mrf.mxu0
    %v4150 = vadd.f32 %v4076, %v4149
    %4151 = vmatmul.f32.gmra.mxu0 %v4112
    %v4152 = vpop.f32.mrf.mxu0
    %v4153 = vadd.f32 %v4081, %v4152
    %4154 = vmatmul.f32.gmra.mxu0 %v4115
    %v4155 = vpop.f32.mrf.mxu0
    %v4156 = vadd.f32 %v4086, %v4155
    %4157 = vmatmul.f32.gmra.mxu0 %v4118
    %v4158 = vpop.f32.mrf.mxu0
    %v4159 = vadd.f32 %v4091, %v4158
    %4160 = vmatmul.f32.gmra.mxu0 %v4121
    %v4161 = vpop.f32.mrf.mxu0
    %v4162 = vadd.f32 %v4096, %v4161
    %4163 = vdwg.mxu0
    %v4164 = vxor.u32 %v4141, 2147483648
    %v4165 = vxor.u32 %v4144, 2147483648
    %v4166 = vxor.u32 %v4147, 2147483648
    %v4167 = vxor.u32 %v4150, 2147483648
    %v4168 = vxor.u32 %v4153, 2147483648
    %v4169 = vxor.u32 %v4156, 2147483648
    %v4170 = vxor.u32 %v4159, 2147483648
    %v4171 = vxor.u32 %v4162, 2147483648
    %v4172 = vmul.f32 %v4164, 1.442695
    %v4173 = vpow.pop %v4172
    %v4174 = vmul.f32 %v4165, 1.442695
    %v4175 = vpow.pop %v4174
    %v4176 = vmul.f32 %v4166, 1.442695
    %v4177 = vpow.pop %v4176
    %v4178 = vmul.f32 %v4167, 1.442695
    %v4179 = vpow.pop %v4178
    %v4180 = vmul.f32 %v4168, 1.442695
    %v4181 = vpow.pop %v4180
    %v4182 = vmul.f32 %v4169, 1.442695
    %v4183 = vpow.pop %v4182
    %v4184 = vmul.f32 %v4170, 1.442695
    %v4185 = vpow.pop %v4184
    %v4186 = vmul.f32 %v4171, 1.442695
    %v4187 = vpow.pop %v4186
    %v4188 = vadd.f32 %v4173, 1.0
    %v4189 = vadd.f32 %v4175, 1.0
    %v4190 = vadd.f32 %v4177, 1.0
    %v4191 = vadd.f32 %v4179, 1.0
    %v4192 = vadd.f32 %v4181, 1.0
    %v4193 = vadd.f32 %v4183, 1.0
    %v4194 = vadd.f32 %v4185, 1.0
    %v4195 = vadd.f32 %v4187, 1.0
    %v4196 = vrcp.pop %v4188
    %v4197 = vmul.f32 %v4188, %v4196
    %v4198 = vsub.f32 1.0, %v4197
    %v4199 = vmul.f32 %v4196, %v4198
    %v4200 = vadd.f32 %v4196, %v4199
    %vm4201 = vweird.f32 %v4188
    %vm4202 = vweird.f32 %v4196
    %vm4203 = vmor %vm4201, %vm4202
    %v4204 = vsel %vm4203, %v4196, %v4200
    %v4205 = vand.u32 2147483647, %v4188
    %vm4206 = vcmp.eq.f32.partialorder %v4205, 8.507059e+37
    %v4207 = vand.u32 %v4188, 2147483648
    %v4208 = vor.u32 1.1754944e-38, %v4207
    %v4209 = vsel %vm4206, %v4208, %v4204
    %v4210 = vmul.f32 1.0, %v4209
    %v4211 = vrcp.pop %v4189
    %v4212 = vmul.f32 %v4189, %v4211
    %v4213 = vsub.f32 1.0, %v4212
    %v4214 = vmul.f32 %v4211, %v4213
    %v4215 = vadd.f32 %v4211, %v4214
    %vm4216 = vweird.f32 %v4189
    %vm4217 = vweird.f32 %v4211
    %vm4218 = vmor %vm4216, %vm4217
    %v4219 = vsel %vm4218, %v4211, %v4215
    %v4220 = vand.u32 2147483647, %v4189
    %vm4221 = vcmp.eq.f32.partialorder %v4220, 8.507059e+37
    %v4222 = vand.u32 %v4189, 2147483648
    %v4223 = vor.u32 1.1754944e-38, %v4222
    %v4224 = vsel %vm4221, %v4223, %v4219
    %v4225 = vmul.f32 1.0, %v4224
    %v4226 = vrcp.pop %v4190
    %v4227 = vmul.f32 %v4190, %v4226
    %v4228 = vsub.f32 1.0, %v4227
    %v4229 = vmul.f32 %v4226, %v4228
    %v4230 = vadd.f32 %v4226, %v4229
    %vm4231 = vweird.f32 %v4190
    %vm4232 = vweird.f32 %v4226
    %vm4233 = vmor %vm4231, %vm4232
    %v4234 = vsel %vm4233, %v4226, %v4230
    %v4235 = vand.u32 2147483647, %v4190
    %vm4236 = vcmp.eq.f32.partialorder %v4235, 8.507059e+37
    %v4237 = vand.u32 %v4190, 2147483648
    %v4238 = vor.u32 1.1754944e-38, %v4237
    %v4239 = vsel %vm4236, %v4238, %v4234
    %v4240 = vmul.f32 1.0, %v4239
    %v4241 = vrcp.pop %v4191
    %v4242 = vmul.f32 %v4191, %v4241
    %v4243 = vsub.f32 1.0, %v4242
    %v4244 = vmul.f32 %v4241, %v4243
    %v4245 = vadd.f32 %v4241, %v4244
    %vm4246 = vweird.f32 %v4191
    %vm4247 = vweird.f32 %v4241
    %vm4248 = vmor %vm4246, %vm4247
    %v4249 = vsel %vm4248, %v4241, %v4245
    %v4250 = vand.u32 2147483647, %v4191
    %vm4251 = vcmp.eq.f32.partialorder %v4250, 8.507059e+37
    %v4252 = vand.u32 %v4191, 2147483648
    %v4253 = vor.u32 1.1754944e-38, %v4252
    %v4254 = vsel %vm4251, %v4253, %v4249
    %v4255 = vmul.f32 1.0, %v4254
    %v4256 = vrcp.pop %v4192
    %v4257 = vmul.f32 %v4192, %v4256
    %v4258 = vsub.f32 1.0, %v4257
    %v4259 = vmul.f32 %v4256, %v4258
    %v4260 = vadd.f32 %v4256, %v4259
    %vm4261 = vweird.f32 %v4192
    %vm4262 = vweird.f32 %v4256
    %vm4263 = vmor %vm4261, %vm4262
    %v4264 = vsel %vm4263, %v4256, %v4260
    %v4265 = vand.u32 2147483647, %v4192
    %vm4266 = vcmp.eq.f32.partialorder %v4265, 8.507059e+37
    %v4267 = vand.u32 %v4192, 2147483648
    %v4268 = vor.u32 1.1754944e-38, %v4267
    %v4269 = vsel %vm4266, %v4268, %v4264
    %v4270 = vmul.f32 1.0, %v4269
    %v4271 = vrcp.pop %v4193
    %v4272 = vmul.f32 %v4193, %v4271
    %v4273 = vsub.f32 1.0, %v4272
    %v4274 = vmul.f32 %v4271, %v4273
    %v4275 = vadd.f32 %v4271, %v4274
    %vm4276 = vweird.f32 %v4193
    %vm4277 = vweird.f32 %v4271
    %vm4278 = vmor %vm4276, %vm4277
    %v4279 = vsel %vm4278, %v4271, %v4275
    %v4280 = vand.u32 2147483647, %v4193
    %vm4281 = vcmp.eq.f32.partialorder %v4280, 8.507059e+37
    %v4282 = vand.u32 %v4193, 2147483648
    %v4283 = vor.u32 1.1754944e-38, %v4282
    %v4284 = vsel %vm4281, %v4283, %v4279
    %v4285 = vmul.f32 1.0, %v4284
    %v4286 = vrcp.pop %v4194
    %v4287 = vmul.f32 %v4194, %v4286
    %v4288 = vsub.f32 1.0, %v4287
    %v4289 = vmul.f32 %v4286, %v4288
    %v4290 = vadd.f32 %v4286, %v4289
    %vm4291 = vweird.f32 %v4194
    %vm4292 = vweird.f32 %v4286
    %vm4293 = vmor %vm4291, %vm4292
    %v4294 = vsel %vm4293, %v4286, %v4290
    %v4295 = vand.u32 2147483647, %v4194
    %vm4296 = vcmp.eq.f32.partialorder %v4295, 8.507059e+37
    %v4297 = vand.u32 %v4194, 2147483648
    %v4298 = vor.u32 1.1754944e-38, %v4297
    %v4299 = vsel %vm4296, %v4298, %v4294
    %v4300 = vmul.f32 1.0, %v4299
    %v4301 = vrcp.pop %v4195
    %v4302 = vmul.f32 %v4195, %v4301
    %v4303 = vsub.f32 1.0, %v4302
    %v4304 = vmul.f32 %v4301, %v4303
    %v4305 = vadd.f32 %v4301, %v4304
    %vm4306 = vweird.f32 %v4195
    %vm4307 = vweird.f32 %v4301
    %vm4308 = vmor %vm4306, %vm4307
    %v4309 = vsel %vm4308, %v4301, %v4305
    %v4310 = vand.u32 2147483647, %v4195
    %vm4311 = vcmp.eq.f32.partialorder %v4310, 8.507059e+37
    %v4312 = vand.u32 %v4195, 2147483648
    %v4313 = vor.u32 1.1754944e-38, %v4312
    %v4314 = vsel %vm4311, %v4313, %v4309
    %v4315 = vmul.f32 1.0, %v4314
    %v4316 = vmul.f32 %v4141, %v4210
    %v4317 = vmul.f32 %v4144, %v4225
    %v4318 = vmul.f32 %v4147, %v4240
    %v4319 = vmul.f32 %v4150, %v4255
    %v4320 = vmul.f32 %v4153, %v4270
    %v4321 = vmul.f32 %v4156, %v4285
    %v4322 = vmul.f32 %v4159, %v4300
    %v4323 = vmul.f32 %v4162, %v4315
    %v4324 = vld [vmem:[%s3] sm:$0xff]
    %v4325 = vld [vmem:[%s3 + $0x8] sm:$0xff]
    %v4326 = vld [vmem:[%s3 + $0x10] sm:$0xff]
    %v4327 = vld [vmem:[%s3 + $0x18] sm:$0xff]
    %v4328 = vld [vmem:[%s3 + $0x20] sm:$0xff]
    %v4329 = vld [vmem:[%s3 + $0x28] sm:$0xff]
    %v4330 = vld [vmem:[%s3 + $0x30] sm:$0xff]
    %v4331 = vld [vmem:[%s3 + $0x38] sm:$0xff]
    %v4332 = vld [vmem:[%s3 + $0x40] sm:$0xff]
    %v4333 = vld [vmem:[%s3 + $0x48] sm:$0xff]
    %v4334 = vld [vmem:[%s3 + $0x50] sm:$0xff]
    %v4335 = vld [vmem:[%s3 + $0x58] sm:$0xff]
    %v4336 = vld [vmem:[%s3 + $0x60] sm:$0xff]
    %v4337 = vld [vmem:[%s3 + $0x68] sm:$0xff]
    %v4338 = vld [vmem:[%s3 + $0x70] sm:$0xff]
    %v4339 = vld [vmem:[%s3 + $0x78] sm:$0xff]
    %v4341 = vsel %vm4098, %v4316, 0
    %v4344 = vsel %vm4098, %v4317, 0
    %v4347 = vsel %vm4098, %v4318, 0
    %v4350 = vsel %vm4098, %v4319, 0
    %4352 = vmatpush.msra.mxu0 0.0
    %4353 = vmatpush.msra.mxu0 0.0
    %4354 = vmatpush.msra.mxu0 0.0
    %4355 = vmatpush.msra.mxu0 0.0
    %4356 = vmatpush.msra.mxu0 0.0
    %4357 = vmatpush.msra.mxu0 0.0
    %4358 = vmatpush.msra.mxu0 0.0
    %4359 = vmatpush.msra.mxu0 0.0
    %4360 = vmatpush.msra.mxu0 0.0
    %4361 = vmatpush.msra.mxu0 0.0
    %4362 = vmatpush.msra.mxu0 0.0
    %4363 = vmatpush.msra.mxu0 0.0
    %4364 = vmatpush.msra.mxu0 %v4336
    %4365 = vmatpush.msra.mxu0 %v4332
    %4366 = vmatpush.msra.mxu0 %v4328
    %4367 = vmatpush.msra.mxu0 %v4324
    %4368 = vmatmul.f32.gmra.mxu0 %v4341
    %v4369 = vpop.f32.mrf.mxu0
    %v4370 = vadd.f32 0.0, %v4369
    %4371 = vmatmul.f32.gmra.mxu0 %v4344
    %v4372 = vpop.f32.mrf.mxu0
    %v4373 = vadd.f32 0.0, %v4372
    %4374 = vmatmul.f32.gmra.mxu0 %v4347
    %v4375 = vpop.f32.mrf.mxu0
    %v4376 = vadd.f32 0.0, %v4375
    %4377 = vmatmul.f32.gmra.mxu0 %v4350
    %v4378 = vpop.f32.mrf.mxu0
    %v4379 = vadd.f32 0.0, %v4378
    %4380 = vdwg.mxu0
    %4381 = vmatpush.msra.mxu0 0.0
    %4382 = vmatpush.msra.mxu0 0.0
    %4383 = vmatpush.msra.mxu0 0.0
    %4384 = vmatpush.msra.mxu0 0.0
    %4385 = vmatpush.msra.mxu0 0.0
    %4386 = vmatpush.msra.mxu0 0.0
    %4387 = vmatpush.msra.mxu0 0.0
    %4388 = vmatpush.msra.mxu0 0.0
    %4389 = vmatpush.msra.mxu0 0.0
    %4390 = vmatpush.msra.mxu0 0.0
    %4391 = vmatpush.msra.mxu0 0.0
    %4392 = vmatpush.msra.mxu0 0.0
    %4393 = vmatpush.msra.mxu0 %v4337
    %4394 = vmatpush.msra.mxu0 %v4333
    %4395 = vmatpush.msra.mxu0 %v4329
    %4396 = vmatpush.msra.mxu0 %v4325
    %4397 = vmatmul.f32.gmra.mxu0 %v4341
    %v4398 = vpop.f32.mrf.mxu0
    %v4399 = vadd.f32 0.0, %v4398
    %4400 = vmatmul.f32.gmra.mxu0 %v4344
    %v4401 = vpop.f32.mrf.mxu0
    %v4402 = vadd.f32 0.0, %v4401
    %4403 = vmatmul.f32.gmra.mxu0 %v4347
    %v4404 = vpop.f32.mrf.mxu0
    %v4405 = vadd.f32 0.0, %v4404
    %4406 = vmatmul.f32.gmra.mxu0 %v4350
    %v4407 = vpop.f32.mrf.mxu0
    %v4408 = vadd.f32 0.0, %v4407
    %4409 = vdwg.mxu0
    %4410 = vmatpush.msra.mxu0 0.0
    %4411 = vmatpush.msra.mxu0 0.0
    %4412 = vmatpush.msra.mxu0 0.0
    %4413 = vmatpush.msra.mxu0 0.0
    %4414 = vmatpush.msra.mxu0 0.0
    %4415 = vmatpush.msra.mxu0 0.0
    %4416 = vmatpush.msra.mxu0 0.0
    %4417 = vmatpush.msra.mxu0 0.0
    %4418 = vmatpush.msra.mxu0 0.0
    %4419 = vmatpush.msra.mxu0 0.0
    %4420 = vmatpush.msra.mxu0 0.0
    %4421 = vmatpush.msra.mxu0 0.0
    %4422 = vmatpush.msra.mxu0 %v4338
    %4423 = vmatpush.msra.mxu0 %v4334
    %4424 = vmatpush.msra.mxu0 %v4330
    %4425 = vmatpush.msra.mxu0 %v4326
    %4426 = vmatmul.f32.gmra.mxu0 %v4341
    %v4427 = vpop.f32.mrf.mxu0
    %v4428 = vadd.f32 0.0, %v4427
    %4429 = vmatmul.f32.gmra.mxu0 %v4344
    %v4430 = vpop.f32.mrf.mxu0
    %v4431 = vadd.f32 0.0, %v4430
    %4432 = vmatmul.f32.gmra.mxu0 %v4347
    %v4433 = vpop.f32.mrf.mxu0
    %v4434 = vadd.f32 0.0, %v4433
    %4435 = vmatmul.f32.gmra.mxu0 %v4350
    %v4436 = vpop.f32.mrf.mxu0
    %v4437 = vadd.f32 0.0, %v4436
    %4438 = vdwg.mxu0
    %4439 = vmatpush.msra.mxu0 0.0
    %4440 = vmatpush.msra.mxu0 0.0
    %4441 = vmatpush.msra.mxu0 0.0
    %4442 = vmatpush.msra.mxu0 0.0
    %4443 = vmatpush.msra.mxu0 0.0
    %4444 = vmatpush.msra.mxu0 0.0
    %4445 = vmatpush.msra.mxu0 0.0
    %4446 = vmatpush.msra.mxu0 0.0
    %4447 = vmatpush.msra.mxu0 0.0
    %4448 = vmatpush.msra.mxu0 0.0
    %4449 = vmatpush.msra.mxu0 0.0
    %4450 = vmatpush.msra.mxu0 0.0
    %4451 = vmatpush.msra.mxu0 %v4339
    %4452 = vmatpush.msra.mxu0 %v4335
    %4453 = vmatpush.msra.mxu0 %v4331
    %4454 = vmatpush.msra.mxu0 %v4327
    %4455 = vmatmul.f32.gmra.mxu0 %v4341
    %v4456 = vpop.f32.mrf.mxu0
    %v4457 = vadd.f32 0.0, %v4456
    %4458 = vmatmul.f32.gmra.mxu0 %v4344
    %v4459 = vpop.f32.mrf.mxu0
    %v4460 = vadd.f32 0.0, %v4459
    %4461 = vmatmul.f32.gmra.mxu0 %v4347
    %v4462 = vpop.f32.mrf.mxu0
    %v4463 = vadd.f32 0.0, %v4462
    %4464 = vmatmul.f32.gmra.mxu0 %v4350
    %v4465 = vpop.f32.mrf.mxu0
    %v4466 = vadd.f32 0.0, %v4465
    %4467 = vdwg.mxu0
    %v4468 = vmul.f32 %v3846, %v4370
    %v4469 = vmul.f32 %v3847, %v4399
    %v4470 = vmul.f32 %v3848, %v4428
    %v4471 = vmul.f32 %v3849, %v4457
    %v4472 = vmul.f32 %v3850, %v4373
    %v4473 = vmul.f32 %v3851, %v4402
    %v4474 = vmul.f32 %v3852, %v4431
    %v4475 = vmul.f32 %v3853, %v4460
    %v4476 = vmul.f32 %v3854, %v4376
    %v4477 = vmul.f32 %v3855, %v4405
    %v4478 = vmul.f32 %v3856, %v4434
    %v4479 = vmul.f32 %v3857, %v4463
    %v4480 = vmul.f32 %v3858, %v4379
    %v4481 = vmul.f32 %v3859, %v4408
    %v4482 = vmul.f32 %v3860, %v4437
    %v4483 = vmul.f32 %v3861, %v4466
    %s4484 = scalar_lea.vmem %s2, 512
    %v4485 = vld [vmem:[%s4484] sm:$0xff]
    %v4486 = vld [vmem:[%s4484 + $0x8] sm:$0xff]
    %v4487 = vld [vmem:[%s4484 + $0x10] sm:$0xff]
    %v4488 = vld [vmem:[%s4484 + $0x18] sm:$0xff]
    %v4489 = vld [vmem:[%s4484 + $0x20] sm:$0xff]
    %v4490 = vld [vmem:[%s4484 + $0x28] sm:$0xff]
    %v4491 = vld [vmem:[%s4484 + $0x30] sm:$0xff]
    %v4492 = vld [vmem:[%s4484 + $0x38] sm:$0xff]
    %v4493 = vld [vmem:[%s4484 + $0x40] sm:$0xff]
    %v4494 = vld [vmem:[%s4484 + $0x48] sm:$0xff]
    %v4495 = vld [vmem:[%s4484 + $0x50] sm:$0xff]
    %v4496 = vld [vmem:[%s4484 + $0x58] sm:$0xff]
    %v4497 = vld [vmem:[%s4484 + $0x60] sm:$0xff]
    %v4498 = vld [vmem:[%s4484 + $0x68] sm:$0xff]
    %v4499 = vld [vmem:[%s4484 + $0x70] sm:$0xff]
    %v4500 = vld [vmem:[%s4484 + $0x78] sm:$0xff]
    %v4501 = vld [vmem:[%s4484 + $0x80] sm:$0xff]
    %v4502 = vld [vmem:[%s4484 + $0x88] sm:$0xff]
    %v4503 = vld [vmem:[%s4484 + $0x90] sm:$0xff]
    %v4504 = vld [vmem:[%s4484 + $0x98] sm:$0xff]
    %v4505 = vld [vmem:[%s4484 + $0xa0] sm:$0xff]
    %v4506 = vld [vmem:[%s4484 + $0xa8] sm:$0xff]
    %v4507 = vld [vmem:[%s4484 + $0xb0] sm:$0xff]
    %v4508 = vld [vmem:[%s4484 + $0xb8] sm:$0xff]
    %v4509 = vld [vmem:[%s4484 + $0xc0] sm:$0xff]
    %v4510 = vld [vmem:[%s4484 + $0xc8] sm:$0xff]
    %v4511 = vld [vmem:[%s4484 + $0xd0] sm:$0xff]
    %v4512 = vld [vmem:[%s4484 + $0xd8] sm:$0xff]
    %v4513 = vld [vmem:[%s4484 + $0xe0] sm:$0xff]
    %v4514 = vld [vmem:[%s4484 + $0xe8] sm:$0xff]
    %v4515 = vld [vmem:[%s4484 + $0xf0] sm:$0xff]
    %v4516 = vld [vmem:[%s4484 + $0xf8] sm:$0xff]
    %v4517 = vld [vmem:[%s4484 + $0x100] sm:$0xff]
    %v4518 = vld [vmem:[%s4484 + $0x108] sm:$0xff]
    %v4519 = vld [vmem:[%s4484 + $0x110] sm:$0xff]
    %v4520 = vld [vmem:[%s4484 + $0x118] sm:$0xff]
    %v4521 = vld [vmem:[%s4484 + $0x120] sm:$0xff]
    %v4522 = vld [vmem:[%s4484 + $0x128] sm:$0xff]
    %v4523 = vld [vmem:[%s4484 + $0x130] sm:$0xff]
    %v4524 = vld [vmem:[%s4484 + $0x138] sm:$0xff]
    %v4525 = vld [vmem:[%s4484 + $0x140] sm:$0xff]
    %v4526 = vld [vmem:[%s4484 + $0x148] sm:$0xff]
    %v4527 = vld [vmem:[%s4484 + $0x150] sm:$0xff]
    %v4528 = vld [vmem:[%s4484 + $0x158] sm:$0xff]
    %v4529 = vld [vmem:[%s4484 + $0x160] sm:$0xff]
    %v4530 = vld [vmem:[%s4484 + $0x168] sm:$0xff]
    %v4531 = vld [vmem:[%s4484 + $0x170] sm:$0xff]
    %v4532 = vld [vmem:[%s4484 + $0x178] sm:$0xff]
    %v4533 = vld [vmem:[%s4484 + $0x180] sm:$0xff]
    %v4534 = vld [vmem:[%s4484 + $0x188] sm:$0xff]
    %v4535 = vld [vmem:[%s4484 + $0x190] sm:$0xff]
    %v4536 = vld [vmem:[%s4484 + $0x198] sm:$0xff]
    %v4537 = vld [vmem:[%s4484 + $0x1a0] sm:$0xff]
    %v4538 = vld [vmem:[%s4484 + $0x1a8] sm:$0xff]
    %v4539 = vld [vmem:[%s4484 + $0x1b0] sm:$0xff]
    %v4540 = vld [vmem:[%s4484 + $0x1b8] sm:$0xff]
    %v4541 = vld [vmem:[%s4484 + $0x1c0] sm:$0xff]
    %v4542 = vld [vmem:[%s4484 + $0x1c8] sm:$0xff]
    %v4543 = vld [vmem:[%s4484 + $0x1d0] sm:$0xff]
    %v4544 = vld [vmem:[%s4484 + $0x1d8] sm:$0xff]
    %v4545 = vld [vmem:[%s4484 + $0x1e0] sm:$0xff]
    %v4546 = vld [vmem:[%s4484 + $0x1e8] sm:$0xff]
    %v4547 = vld [vmem:[%s4484 + $0x1f0] sm:$0xff]
    %v4548 = vld [vmem:[%s4484 + $0x1f8] sm:$0xff]
    %4549 = vmatpush.msra.mxu0 %v4500
    %4550 = vmatpush.msra.mxu0 %v4499
    %4551 = vmatpush.msra.mxu0 %v4498
    %4552 = vmatpush.msra.mxu0 %v4497
    %4553 = vmatpush.msra.mxu0 %v4496
    %4554 = vmatpush.msra.mxu0 %v4495
    %4555 = vmatpush.msra.mxu0 %v4494
    %4556 = vmatpush.msra.mxu0 %v4493
    %4557 = vmatpush.msra.mxu0 %v4492
    %4558 = vmatpush.msra.mxu0 %v4491
    %4559 = vmatpush.msra.mxu0 %v4490
    %4560 = vmatpush.msra.mxu0 %v4489
    %4561 = vmatpush.msra.mxu0 %v4488
    %4562 = vmatpush.msra.mxu0 %v4487
    %4563 = vmatpush.msra.mxu0 %v4486
    %4564 = vmatpush.msra.mxu0 %v4485
    %4565 = vmatmul.f32.gmra.mxu0 %v4468
    %v4566 = vpop.f32.mrf.mxu0
    %v4567 = vadd.f32 0.0, %v4566
    %4568 = vmatmul.f32.gmra.mxu0 %v4472
    %v4569 = vpop.f32.mrf.mxu0
    %v4570 = vadd.f32 0.0, %v4569
    %4571 = vmatmul.f32.gmra.mxu0 %v4476
    %v4572 = vpop.f32.mrf.mxu0
    %v4573 = vadd.f32 0.0, %v4572
    %4574 = vmatmul.f32.gmra.mxu0 %v4480
    %v4575 = vpop.f32.mrf.mxu0
    %v4576 = vadd.f32 0.0, %v4575
    %4577 = vdwg.mxu0
    %4578 = vmatpush.msra.mxu0 %v4516
    %4579 = vmatpush.msra.mxu0 %v4515
    %4580 = vmatpush.msra.mxu0 %v4514
    %4581 = vmatpush.msra.mxu0 %v4513
    %4582 = vmatpush.msra.mxu0 %v4512
    %4583 = vmatpush.msra.mxu0 %v4511
    %4584 = vmatpush.msra.mxu0 %v4510
    %4585 = vmatpush.msra.mxu0 %v4509
    %4586 = vmatpush.msra.mxu0 %v4508
    %4587 = vmatpush.msra.mxu0 %v4507
    %4588 = vmatpush.msra.mxu0 %v4506
    %4589 = vmatpush.msra.mxu0 %v4505
    %4590 = vmatpush.msra.mxu0 %v4504
    %4591 = vmatpush.msra.mxu0 %v4503
    %4592 = vmatpush.msra.mxu0 %v4502
    %4593 = vmatpush.msra.mxu0 %v4501
    %4594 = vmatmul.f32.gmra.mxu0 %v4469
    %v4595 = vpop.f32.mrf.mxu0
    %v4596 = vadd.f32 %v4567, %v4595
    %4597 = vmatmul.f32.gmra.mxu0 %v4473
    %v4598 = vpop.f32.mrf.mxu0
    %v4599 = vadd.f32 %v4570, %v4598
    %4600 = vmatmul.f32.gmra.mxu0 %v4477
    %v4601 = vpop.f32.mrf.mxu0
    %v4602 = vadd.f32 %v4573, %v4601
    %4603 = vmatmul.f32.gmra.mxu0 %v4481
    %v4604 = vpop.f32.mrf.mxu0
    %v4605 = vadd.f32 %v4576, %v4604
    %4606 = vdwg.mxu0
    %4607 = vmatpush.msra.mxu0 %v4532
    %4608 = vmatpush.msra.mxu0 %v4531
    %4609 = vmatpush.msra.mxu0 %v4530
    %4610 = vmatpush.msra.mxu0 %v4529
    %4611 = vmatpush.msra.mxu0 %v4528
    %4612 = vmatpush.msra.mxu0 %v4527
    %4613 = vmatpush.msra.mxu0 %v4526
    %4614 = vmatpush.msra.mxu0 %v4525
    %4615 = vmatpush.msra.mxu0 %v4524
    %4616 = vmatpush.msra.mxu0 %v4523
    %4617 = vmatpush.msra.mxu0 %v4522
    %4618 = vmatpush.msra.mxu0 %v4521
    %4619 = vmatpush.msra.mxu0 %v4520
    %4620 = vmatpush.msra.mxu0 %v4519
    %4621 = vmatpush.msra.mxu0 %v4518
    %4622 = vmatpush.msra.mxu0 %v4517
    %4623 = vmatmul.f32.gmra.mxu0 %v4470
    %v4624 = vpop.f32.mrf.mxu0
    %v4625 = vadd.f32 %v4596, %v4624
    %4626 = vmatmul.f32.gmra.mxu0 %v4474
    %v4627 = vpop.f32.mrf.mxu0
    %v4628 = vadd.f32 %v4599, %v4627
    %4629 = vmatmul.f32.gmra.mxu0 %v4478
    %v4630 = vpop.f32.mrf.mxu0
    %v4631 = vadd.f32 %v4602, %v4630
    %4632 = vmatmul.f32.gmra.mxu0 %v4482
    %v4633 = vpop.f32.mrf.mxu0
    %v4634 = vadd.f32 %v4605, %v4633
    %4635 = vdwg.mxu0
    %4636 = vmatpush.msra.mxu0 %v4548
    %4637 = vmatpush.msra.mxu0 %v4547
    %4638 = vmatpush.msra.mxu0 %v4546
    %4639 = vmatpush.msra.mxu0 %v4545
    %4640 = vmatpush.msra.mxu0 %v4544
    %4641 = vmatpush.msra.mxu0 %v4543
    %4642 = vmatpush.msra.mxu0 %v4542
    %4643 = vmatpush.msra.mxu0 %v4541
    %4644 = vmatpush.msra.mxu0 %v4540
    %4645 = vmatpush.msra.mxu0 %v4539
    %4646 = vmatpush.msra.mxu0 %v4538
    %4647 = vmatpush.msra.mxu0 %v4537
    %4648 = vmatpush.msra.mxu0 %v4536
    %4649 = vmatpush.msra.mxu0 %v4535
    %4650 = vmatpush.msra.mxu0 %v4534
    %4651 = vmatpush.msra.mxu0 %v4533
    %4652 = vmatmul.f32.gmra.mxu0 %v4471
    %v4653 = vpop.f32.mrf.mxu0
    %v4654 = vadd.f32 %v4625, %v4653
    %4655 = vmatmul.f32.gmra.mxu0 %v4475
    %v4656 = vpop.f32.mrf.mxu0
    %v4657 = vadd.f32 %v4628, %v4656
    %4658 = vmatmul.f32.gmra.mxu0 %v4479
    %v4659 = vpop.f32.mrf.mxu0
    %v4660 = vadd.f32 %v4631, %v4659
    %4661 = vmatmul.f32.gmra.mxu0 %v4483
    %v4662 = vpop.f32.mrf.mxu0
    %v4663 = vadd.f32 %v4634, %v4662
    %4664 = vdwg.mxu0
    %v4665 = vld [vmem:[%s9] sm:$0xff]
    %v4666 = vld [vmem:[%s9 + $0x8] sm:$0xff]
    %v4667 = vld [vmem:[%s9 + $0x10] sm:$0xff]
    %v4668 = vld [vmem:[%s9 + $0x18] sm:$0xff]
    %v4669 = vld [vmem:[%s10] sm:$0xff]
    %v4670 = vld [vmem:[%s10 + $0x8] sm:$0xff]
    %v4671 = vld [vmem:[%s10 + $0x10] sm:$0xff]
    %v4672 = vld [vmem:[%s10 + $0x18] sm:$0xff]
    %4674 = vset.pattern.permute.xlu0 1
    %4675 = vperm.xlu0 %4674, %v4669
    %v4676 = vpop.permute.xlu0 %4675
    %4679 = vset.pattern.permute.xlu0 1
    %4680 = vperm.xlu0 %4679, %v4670
    %v4681 = vpop.permute.xlu0 %4680
    %4684 = vset.pattern.permute.xlu0 1
    %4685 = vperm.xlu0 %4684, %v4671
    %v4686 = vpop.permute.xlu0 %4685
    %4689 = vset.pattern.permute.xlu0 1
    %4690 = vperm.xlu0 %4689, %v4672
    %v4691 = vpop.permute.xlu0 %4690
    %v4694 = vsel %vm840, %v4665, 0
    %v4697 = vsel %vm840, %v4666, 0
    %v4700 = vsel %vm840, %v4667, 0
    %v4703 = vsel %vm840, %v4668, 0
    %4705 = vmatpush.msra.mxu0 0.0
    %4706 = vmatpush.msra.mxu0 0.0
    %4707 = vmatpush.msra.mxu0 0.0
    %4708 = vmatpush.msra.mxu0 0.0
    %4709 = vmatpush.msra.mxu0 0.0
    %4710 = vmatpush.msra.mxu0 0.0
    %4711 = vmatpush.msra.mxu0 0.0
    %4712 = vmatpush.msra.mxu0 0.0
    %4713 = vmatpush.msra.mxu0 %v4663
    %4714 = vmatpush.msra.mxu0 %v4660
    %4715 = vmatpush.msra.mxu0 %v4657
    %4716 = vmatpush.msra.mxu0 %v4654
    %4717 = vmatpush.msra.mxu0 %v4319
    %4718 = vmatpush.msra.mxu0 %v4318
    %4719 = vmatpush.msra.mxu0 %v4317
    %4720 = vmatpush.msra.mxu0 %v4316
    %4721 = vmatmul.f32.gmra.mxu0 %v4694
    %v4722 = vpop.f32.mrf.mxu0
    %v4723 = vadd.f32 %v4676, %v4722
    %4724 = vmatmul.f32.gmra.mxu0 %v4697
    %v4725 = vpop.f32.mrf.mxu0
    %v4726 = vadd.f32 %v4681, %v4725
    %4727 = vmatmul.f32.gmra.mxu0 %v4700
    %v4728 = vpop.f32.mrf.mxu0
    %v4729 = vadd.f32 %v4686, %v4728
    %4730 = vmatmul.f32.gmra.mxu0 %v4703
    %v4731 = vpop.f32.mrf.mxu0
    %v4732 = vadd.f32 %v4691, %v4731
    %4733 = vdwg.mxu0
    %v4734 = vxor.u32 %v4723, 2147483648
    %v4735 = vxor.u32 %v4726, 2147483648
    %v4736 = vxor.u32 %v4729, 2147483648
    %v4737 = vxor.u32 %v4732, 2147483648
    %v4738 = vmul.f32 %v4734, 1.442695
    %v4739 = vpow.pop %v4738
    %v4740 = vmul.f32 %v4735, 1.442695
    %v4741 = vpow.pop %v4740
    %v4742 = vmul.f32 %v4736, 1.442695
    %v4743 = vpow.pop %v4742
    %v4744 = vmul.f32 %v4737, 1.442695
    %v4745 = vpow.pop %v4744
    %v4746 = vadd.f32 %v4739, 1.0
    %v4747 = vadd.f32 %v4741, 1.0
    %v4748 = vadd.f32 %v4743, 1.0
    %v4749 = vadd.f32 %v4745, 1.0
    %v4750 = vrcp.pop %v4746
    %v4751 = vmul.f32 %v4746, %v4750
    %v4752 = vsub.f32 1.0, %v4751
    %v4753 = vmul.f32 %v4750, %v4752
    %v4754 = vadd.f32 %v4750, %v4753
    %vm4755 = vweird.f32 %v4746
    %vm4756 = vweird.f32 %v4750
    %vm4757 = vmor %vm4755, %vm4756
    %v4758 = vsel %vm4757, %v4750, %v4754
    %v4759 = vand.u32 2147483647, %v4746
    %vm4760 = vcmp.eq.f32.partialorder %v4759, 8.507059e+37
    %v4761 = vand.u32 %v4746, 2147483648
    %v4762 = vor.u32 1.1754944e-38, %v4761
    %v4763 = vsel %vm4760, %v4762, %v4758
    %v4764 = vmul.f32 1.0, %v4763
    %v4765 = vrcp.pop %v4747
    %v4766 = vmul.f32 %v4747, %v4765
    %v4767 = vsub.f32 1.0, %v4766
    %v4768 = vmul.f32 %v4765, %v4767
    %v4769 = vadd.f32 %v4765, %v4768
    %vm4770 = vweird.f32 %v4747
    %vm4771 = vweird.f32 %v4765
    %vm4772 = vmor %vm4770, %vm4771
    %v4773 = vsel %vm4772, %v4765, %v4769
    %v4774 = vand.u32 2147483647, %v4747
    %vm4775 = vcmp.eq.f32.partialorder %v4774, 8.507059e+37
    %v4776 = vand.u32 %v4747, 2147483648
    %v4777 = vor.u32 1.1754944e-38, %v4776
    %v4778 = vsel %vm4775, %v4777, %v4773
    %v4779 = vmul.f32 1.0, %v4778
    %v4780 = vrcp.pop %v4748
    %v4781 = vmul.f32 %v4748, %v4780
    %v4782 = vsub.f32 1.0, %v4781
    %v4783 = vmul.f32 %v4780, %v4782
    %v4784 = vadd.f32 %v4780, %v4783
    %vm4785 = vweird.f32 %v4748
    %vm4786 = vweird.f32 %v4780
    %vm4787 = vmor %vm4785, %vm4786
    %v4788 = vsel %vm4787, %v4780, %v4784
    %v4789 = vand.u32 2147483647, %v4748
    %vm4790 = vcmp.eq.f32.partialorder %v4789, 8.507059e+37
    %v4791 = vand.u32 %v4748, 2147483648
    %v4792 = vor.u32 1.1754944e-38, %v4791
    %v4793 = vsel %vm4790, %v4792, %v4788
    %v4794 = vmul.f32 1.0, %v4793
    %v4795 = vrcp.pop %v4749
    %v4796 = vmul.f32 %v4749, %v4795
    %v4797 = vsub.f32 1.0, %v4796
    %v4798 = vmul.f32 %v4795, %v4797
    %v4799 = vadd.f32 %v4795, %v4798
    %vm4800 = vweird.f32 %v4749
    %vm4801 = vweird.f32 %v4795
    %vm4802 = vmor %vm4800, %vm4801
    %v4803 = vsel %vm4802, %v4795, %v4799
    %v4804 = vand.u32 2147483647, %v4749
    %vm4805 = vcmp.eq.f32.partialorder %v4804, 8.507059e+37
    %v4806 = vand.u32 %v4749, 2147483648
    %v4807 = vor.u32 1.1754944e-38, %v4806
    %v4808 = vsel %vm4805, %v4807, %v4803
    %v4809 = vmul.f32 1.0, %v4808
    %v4810 = vmul.f32 %v4723, %v4764
    %v4811 = vmul.f32 %v4726, %v4779
    %v4812 = vmul.f32 %v4729, %v4794
    %v4813 = vmul.f32 %v4732, %v4809
    %v4814 = vsel %vm4098, %v4810, 0.0
    %v4815 = vsel %vm4098, %v4811, 0.0
    %v4816 = vadd.f32 %v4814, %v4815
    %v4817 = vsel %vm4098, %v4812, 0.0
    %v4818 = vadd.f32 %v4816, %v4817
    %v4819 = vsel %vm4098, %v4813, 0.0
    %v4820 = vadd.f32 %v4818, %v4819
    %v4821 = vrot.slane %v4820, 4
    %v4822 = vadd.f32 %v4820, %v4821
    %v4823 = vrot.slane %v4822, 2
    %v4824 = vadd.f32 %v4822, %v4823
    %v4825 = vrot.slane %v4824, 1
    %v4826 = vadd.f32 %v4824, %v4825
    %v4827 = vrcp.pop 32.0
    %v4828 = vmul.f32 32.0, %v4827
    %v4829 = vsub.f32 1.0, %v4828
    %v4830 = vmul.f32 %v4827, %v4829
    %v4831 = vadd.f32 %v4827, %v4830
    %vm4832 = vweird.f32 %v4827
    %v4833 = vsel %vm4832, %v4827, %v4831
    %v4834 = vmul.f32 %v4826, %v4833
    %v4835 = vsub.f32 %v4810, %v4834
    %v4836 = vsub.f32 %v4811, %v4834
    %v4837 = vsub.f32 %v4812, %v4834
    %v4838 = vsub.f32 %v4813, %v4834
    %v4839 = vmul.f32 %v4835, %v4835
    %v4840 = vmul.f32 %v4836, %v4836
    %v4841 = vmul.f32 %v4837, %v4837
    %v4842 = vmul.f32 %v4838, %v4838
    %v4843 = vsel %vm4098, %v4839, 0.0
    %v4844 = vsel %vm4098, %v4840, 0.0
    %v4845 = vadd.f32 %v4843, %v4844
    %v4846 = vsel %vm4098, %v4841, 0.0
    %v4847 = vadd.f32 %v4845, %v4846
    %v4848 = vsel %vm4098, %v4842, 0.0
    %v4849 = vadd.f32 %v4847, %v4848
    %v4850 = vrot.slane %v4849, 4
    %v4851 = vadd.f32 %v4849, %v4850
    %v4852 = vrot.slane %v4851, 2
    %v4853 = vadd.f32 %v4851, %v4852
    %v4854 = vrot.slane %v4853, 1
    %v4855 = vadd.f32 %v4853, %v4854
    %v4856 = vmul.f32 %v4855, %v4833
    %v4857 = vadd.f32 %v4856, 1e-05
    %v4858 = vrsqrt.pop %v4857
    %v4859 = vmul.f32 %v4858, %v4857
    %v4860 = vmul.f32 %v4859, %v4858
    %v4861 = vmul.f32 0.5, %v4860
    %v4862 = vsub.f32 1.5, %v4861
    %v4863 = vmul.f32 %v4858, %v4862
    %vm4864 = vweird.f32 %v4857
    %vm4865 = vweird.f32 %v4858
    %vm4866 = vmor %vm4864, %vm4865
    %v4867 = vsel %vm4866, %v4858, %v4863
    %v4868 = vmul.f32 %v4835, %v4867
    %v4869 = vmul.f32 %v4836, %v4867
    %v4870 = vmul.f32 %v4837, %v4867
    %v4871 = vmul.f32 %v4838, %v4867
    %4872 = vset.pattern.permute.xlu0 2
    %4873 = vperm.xlu0 %4872, %v4669
    %v4874 = vpop.permute.xlu0 %4873
    %4876 = vset.pattern.permute.xlu0 2
    %4877 = vperm.xlu0 %4876, %v4670
    %v4878 = vpop.permute.xlu0 %4877
    %4880 = vset.pattern.permute.xlu0 2
    %4881 = vperm.xlu0 %4880, %v4671
    %v4882 = vpop.permute.xlu0 %4881
    %4884 = vset.pattern.permute.xlu0 2
    %4885 = vperm.xlu0 %4884, %v4672
    %v4886 = vpop.permute.xlu0 %4885
    %v4888 = vmul.f32 %v4868, %v4874
    %v4889 = vmul.f32 %v4869, %v4878
    %v4890 = vmul.f32 %v4870, %v4882
    %v4891 = vmul.f32 %v4871, %v4886
    %4892 = vset.pattern.permute.xlu0 3
    %4893 = vperm.xlu0 %4892, %v4669
    %v4894 = vpop.permute.xlu0 %4893
    %4896 = vset.pattern.permute.xlu0 3
    %4897 = vperm.xlu0 %4896, %v4670
    %v4898 = vpop.permute.xlu0 %4897
    %4900 = vset.pattern.permute.xlu0 3
    %4901 = vperm.xlu0 %4900, %v4671
    %v4902 = vpop.permute.xlu0 %4901
    %4904 = vset.pattern.permute.xlu0 3
    %4905 = vperm.xlu0 %4904, %v4672
    %v4906 = vpop.permute.xlu0 %4905
    %v4908 = vadd.f32 %v4888, %v4894
    %v4909 = vadd.f32 %v4889, %v4898
    %v4910 = vadd.f32 %v4890, %v4902
    %v4911 = vadd.f32 %v4891, %v4906
    %v4912 = vadd.f32 %v4320, %v4908
    %v4913 = vadd.f32 %v4321, %v4909
    %v4914 = vadd.f32 %v4322, %v4910
    %v4915 = vadd.f32 %v4323, %v4911
    %v4916 = vxor.u32 %v4912, 2147483648
    %v4917 = vxor.u32 %v4913, 2147483648
    %v4918 = vxor.u32 %v4914, 2147483648
    %v4919 = vxor.u32 %v4915, 2147483648
    %v4920 = vmul.f32 %v4916, 1.442695
    %v4921 = vpow.pop %v4920
    %v4922 = vmul.f32 %v4917, 1.442695
    %v4923 = vpow.pop %v4922
    %v4924 = vmul.f32 %v4918, 1.442695
    %v4925 = vpow.pop %v4924
    %v4926 = vmul.f32 %v4919, 1.442695
    %v4927 = vpow.pop %v4926
    %v4928 = vadd.f32 %v4921, 1.0
    %v4929 = vadd.f32 %v4923, 1.0
    %v4930 = vadd.f32 %v4925, 1.0
    %v4931 = vadd.f32 %v4927, 1.0
    %v4932 = vrcp.pop %v4928
    %v4933 = vmul.f32 %v4928, %v4932
    %v4934 = vsub.f32 1.0, %v4933
    %v4935 = vmul.f32 %v4932, %v4934
    %v4936 = vadd.f32 %v4932, %v4935
    %vm4937 = vweird.f32 %v4928
    %vm4938 = vweird.f32 %v4932
    %vm4939 = vmor %vm4937, %vm4938
    %v4940 = vsel %vm4939, %v4932, %v4936
    %v4941 = vand.u32 2147483647, %v4928
    %vm4942 = vcmp.eq.f32.partialorder %v4941, 8.507059e+37
    %v4943 = vand.u32 %v4928, 2147483648
    %v4944 = vor.u32 1.1754944e-38, %v4943
    %v4945 = vsel %vm4942, %v4944, %v4940
    %v4946 = vmul.f32 1.0, %v4945
    %v4947 = vrcp.pop %v4929
    %v4948 = vmul.f32 %v4929, %v4947
    %v4949 = vsub.f32 1.0, %v4948
    %v4950 = vmul.f32 %v4947, %v4949
    %v4951 = vadd.f32 %v4947, %v4950
    %vm4952 = vweird.f32 %v4929
    %vm4953 = vweird.f32 %v4947
    %vm4954 = vmor %vm4952, %vm4953
    %v4955 = vsel %vm4954, %v4947, %v4951
    %v4956 = vand.u32 2147483647, %v4929
    %vm4957 = vcmp.eq.f32.partialorder %v4956, 8.507059e+37
    %v4958 = vand.u32 %v4929, 2147483648
    %v4959 = vor.u32 1.1754944e-38, %v4958
    %v4960 = vsel %vm4957, %v4959, %v4955
    %v4961 = vmul.f32 1.0, %v4960
    %v4962 = vrcp.pop %v4930
    %v4963 = vmul.f32 %v4930, %v4962
    %v4964 = vsub.f32 1.0, %v4963
    %v4965 = vmul.f32 %v4962, %v4964
    %v4966 = vadd.f32 %v4962, %v4965
    %vm4967 = vweird.f32 %v4930
    %vm4968 = vweird.f32 %v4962
    %vm4969 = vmor %vm4967, %vm4968
    %v4970 = vsel %vm4969, %v4962, %v4966
    %v4971 = vand.u32 2147483647, %v4930
    %vm4972 = vcmp.eq.f32.partialorder %v4971, 8.507059e+37
    %v4973 = vand.u32 %v4930, 2147483648
    %v4974 = vor.u32 1.1754944e-38, %v4973
    %v4975 = vsel %vm4972, %v4974, %v4970
    %v4976 = vmul.f32 1.0, %v4975
    %v4977 = vrcp.pop %v4931
    %v4978 = vmul.f32 %v4931, %v4977
    %v4979 = vsub.f32 1.0, %v4978
    %v4980 = vmul.f32 %v4977, %v4979
    %v4981 = vadd.f32 %v4977, %v4980
    %vm4982 = vweird.f32 %v4931
    %vm4983 = vweird.f32 %v4977
    %vm4984 = vmor %vm4982, %vm4983
    %v4985 = vsel %vm4984, %v4977, %v4981
    %v4986 = vand.u32 2147483647, %v4931
    %vm4987 = vcmp.eq.f32.partialorder %v4986, 8.507059e+37
    %v4988 = vand.u32 %v4931, 2147483648
    %v4989 = vor.u32 1.1754944e-38, %v4988
    %v4990 = vsel %vm4987, %v4989, %v4985
    %v4991 = vmul.f32 1.0, %v4990
    %v4992 = vmul.f32 %v4912, %v4946
    %v4993 = vmul.f32 %v4913, %v4961
    %v4994 = vmul.f32 %v4914, %v4976
    %v4995 = vmul.f32 %v4915, %v4991
    %s4996 = scalar_lea.vmem %s8, 64
    %v4997 = vld [vmem:[%s4996] sm:$0xff]
    %v4998 = vld [vmem:[%s4996 + $0x8] sm:$0xff]
    %v4999 = vld [vmem:[%s4996 + $0x10] sm:$0xff]
    %v5000 = vld [vmem:[%s4996 + $0x18] sm:$0xff]
    %v5001 = vld [vmem:[%s4996 + $0x20] sm:$0xff]
    %v5002 = vld [vmem:[%s4996 + $0x28] sm:$0xff]
    %v5003 = vld [vmem:[%s4996 + $0x30] sm:$0xff]
    %v5004 = vld [vmem:[%s4996 + $0x38] sm:$0xff]
    %s5005 = scalar_lea.vmem %s10, 64
    %v5006 = vld [vmem:[%s5005] sm:$0xff]
    %v5007 = vld [vmem:[%s5005 + $0x8] sm:$0xff]
    %v5008 = vld [vmem:[%s5005 + $0x10] sm:$0xff]
    %v5009 = vld [vmem:[%s5005 + $0x18] sm:$0xff]
    %v5010 = vld [vmem:[%s5005 + $0x20] sm:$0xff]
    %v5011 = vld [vmem:[%s5005 + $0x28] sm:$0xff]
    %v5012 = vld [vmem:[%s5005 + $0x30] sm:$0xff]
    %v5013 = vld [vmem:[%s5005 + $0x38] sm:$0xff]
    %5015 = vset.pattern.permute.xlu0 0
    %5016 = vperm.xlu0 %5015, %v5006
    %v5017 = vpop.permute.xlu0 %5016
    %5020 = vset.pattern.permute.xlu0 0
    %5021 = vperm.xlu0 %5020, %v5007
    %v5022 = vpop.permute.xlu0 %5021
    %5025 = vset.pattern.permute.xlu0 0
    %5026 = vperm.xlu0 %5025, %v5008
    %v5027 = vpop.permute.xlu0 %5026
    %5030 = vset.pattern.permute.xlu0 0
    %5031 = vperm.xlu0 %5030, %v5009
    %v5032 = vpop.permute.xlu0 %5031
    %5035 = vset.pattern.permute.xlu0 0
    %5036 = vperm.xlu0 %5035, %v5010
    %v5037 = vpop.permute.xlu0 %5036
    %5040 = vset.pattern.permute.xlu0 0
    %5041 = vperm.xlu0 %5040, %v5011
    %v5042 = vpop.permute.xlu0 %5041
    %5045 = vset.pattern.permute.xlu0 0
    %5046 = vperm.xlu0 %5045, %v5012
    %v5047 = vpop.permute.xlu0 %5046
    %5050 = vset.pattern.permute.xlu0 0
    %5051 = vperm.xlu0 %5050, %v5013
    %v5052 = vpop.permute.xlu0 %5051
    %v5055 = vsel %vm4098, %v4997, 0
    %v5058 = vsel %vm4098, %v4998, 0
    %v5061 = vsel %vm4098, %v4999, 0
    %v5064 = vsel %vm4098, %v5000, 0
    %v5067 = vsel %vm4098, %v5001, 0
    %v5070 = vsel %vm4098, %v5002, 0
    %v5073 = vsel %vm4098, %v5003, 0
    %v5076 = vsel %vm4098, %v5004, 0
    %5078 = vmatpush.msra.mxu0 0.0
    %5079 = vmatpush.msra.mxu0 0.0
    %5080 = vmatpush.msra.mxu0 0.0
    %5081 = vmatpush.msra.mxu0 0.0
    %5082 = vmatpush.msra.mxu0 0.0
    %5083 = vmatpush.msra.mxu0 0.0
    %5084 = vmatpush.msra.mxu0 0.0
    %5085 = vmatpush.msra.mxu0 0.0
    %5086 = vmatpush.msra.mxu0 0.0
    %5087 = vmatpush.msra.mxu0 0.0
    %5088 = vmatpush.msra.mxu0 0.0
    %5089 = vmatpush.msra.mxu0 0.0
    %5090 = vmatpush.msra.mxu0 %v4995
    %5091 = vmatpush.msra.mxu0 %v4994
    %5092 = vmatpush.msra.mxu0 %v4993
    %5093 = vmatpush.msra.mxu0 %v4992
    %5094 = vmatmul.f32.gmra.mxu0 %v5055
    %v5095 = vpop.f32.mrf.mxu0
    %v5096 = vadd.f32 %v5017, %v5095
    %5097 = vmatmul.f32.gmra.mxu0 %v5058
    %v5098 = vpop.f32.mrf.mxu0
    %v5099 = vadd.f32 %v5022, %v5098
    %5100 = vmatmul.f32.gmra.mxu0 %v5061
    %v5101 = vpop.f32.mrf.mxu0
    %v5102 = vadd.f32 %v5027, %v5101
    %5103 = vmatmul.f32.gmra.mxu0 %v5064
    %v5104 = vpop.f32.mrf.mxu0
    %v5105 = vadd.f32 %v5032, %v5104
    %5106 = vmatmul.f32.gmra.mxu0 %v5067
    %v5107 = vpop.f32.mrf.mxu0
    %v5108 = vadd.f32 %v5037, %v5107
    %5109 = vmatmul.f32.gmra.mxu0 %v5070
    %v5110 = vpop.f32.mrf.mxu0
    %v5111 = vadd.f32 %v5042, %v5110
    %5112 = vmatmul.f32.gmra.mxu0 %v5073
    %v5113 = vpop.f32.mrf.mxu0
    %v5114 = vadd.f32 %v5047, %v5113
    %5115 = vmatmul.f32.gmra.mxu0 %v5076
    %v5116 = vpop.f32.mrf.mxu0
    %v5117 = vadd.f32 %v5052, %v5116
    %5118 = vdwg.mxu0
    %v5119 = vxor.u32 %v5096, 2147483648
    %v5120 = vxor.u32 %v5099, 2147483648
    %v5121 = vxor.u32 %v5102, 2147483648
    %v5122 = vxor.u32 %v5105, 2147483648
    %v5123 = vxor.u32 %v5108, 2147483648
    %v5124 = vxor.u32 %v5111, 2147483648
    %v5125 = vxor.u32 %v5114, 2147483648
    %v5126 = vxor.u32 %v5117, 2147483648
    %v5127 = vmul.f32 %v5119, 1.442695
    %v5128 = vpow.pop %v5127
    %v5129 = vmul.f32 %v5120, 1.442695
    %v5130 = vpow.pop %v5129
    %v5131 = vmul.f32 %v5121, 1.442695
    %v5132 = vpow.pop %v5131
    %v5133 = vmul.f32 %v5122, 1.442695
    %v5134 = vpow.pop %v5133
    %v5135 = vmul.f32 %v5123, 1.442695
    %v5136 = vpow.pop %v5135
    %v5137 = vmul.f32 %v5124, 1.442695
    %v5138 = vpow.pop %v5137
    %v5139 = vmul.f32 %v5125, 1.442695
    %v5140 = vpow.pop %v5139
    %v5141 = vmul.f32 %v5126, 1.442695
    %v5142 = vpow.pop %v5141
    %v5143 = vadd.f32 %v5128, 1.0
    %v5144 = vadd.f32 %v5130, 1.0
    %v5145 = vadd.f32 %v5132, 1.0
    %v5146 = vadd.f32 %v5134, 1.0
    %v5147 = vadd.f32 %v5136, 1.0
    %v5148 = vadd.f32 %v5138, 1.0
    %v5149 = vadd.f32 %v5140, 1.0
    %v5150 = vadd.f32 %v5142, 1.0
    %v5151 = vrcp.pop %v5143
    %v5152 = vmul.f32 %v5143, %v5151
    %v5153 = vsub.f32 1.0, %v5152
    %v5154 = vmul.f32 %v5151, %v5153
    %v5155 = vadd.f32 %v5151, %v5154
    %vm5156 = vweird.f32 %v5143
    %vm5157 = vweird.f32 %v5151
    %vm5158 = vmor %vm5156, %vm5157
    %v5159 = vsel %vm5158, %v5151, %v5155
    %v5160 = vand.u32 2147483647, %v5143
    %vm5161 = vcmp.eq.f32.partialorder %v5160, 8.507059e+37
    %v5162 = vand.u32 %v5143, 2147483648
    %v5163 = vor.u32 1.1754944e-38, %v5162
    %v5164 = vsel %vm5161, %v5163, %v5159
    %v5165 = vmul.f32 1.0, %v5164
    %v5166 = vrcp.pop %v5144
    %v5167 = vmul.f32 %v5144, %v5166
    %v5168 = vsub.f32 1.0, %v5167
    %v5169 = vmul.f32 %v5166, %v5168
    %v5170 = vadd.f32 %v5166, %v5169
    %vm5171 = vweird.f32 %v5144
    %vm5172 = vweird.f32 %v5166
    %vm5173 = vmor %vm5171, %vm5172
    %v5174 = vsel %vm5173, %v5166, %v5170
    %v5175 = vand.u32 2147483647, %v5144
    %vm5176 = vcmp.eq.f32.partialorder %v5175, 8.507059e+37
    %v5177 = vand.u32 %v5144, 2147483648
    %v5178 = vor.u32 1.1754944e-38, %v5177
    %v5179 = vsel %vm5176, %v5178, %v5174
    %v5180 = vmul.f32 1.0, %v5179
    %v5181 = vrcp.pop %v5145
    %v5182 = vmul.f32 %v5145, %v5181
    %v5183 = vsub.f32 1.0, %v5182
    %v5184 = vmul.f32 %v5181, %v5183
    %v5185 = vadd.f32 %v5181, %v5184
    %vm5186 = vweird.f32 %v5145
    %vm5187 = vweird.f32 %v5181
    %vm5188 = vmor %vm5186, %vm5187
    %v5189 = vsel %vm5188, %v5181, %v5185
    %v5190 = vand.u32 2147483647, %v5145
    %vm5191 = vcmp.eq.f32.partialorder %v5190, 8.507059e+37
    %v5192 = vand.u32 %v5145, 2147483648
    %v5193 = vor.u32 1.1754944e-38, %v5192
    %v5194 = vsel %vm5191, %v5193, %v5189
    %v5195 = vmul.f32 1.0, %v5194
    %v5196 = vrcp.pop %v5146
    %v5197 = vmul.f32 %v5146, %v5196
    %v5198 = vsub.f32 1.0, %v5197
    %v5199 = vmul.f32 %v5196, %v5198
    %v5200 = vadd.f32 %v5196, %v5199
    %vm5201 = vweird.f32 %v5146
    %vm5202 = vweird.f32 %v5196
    %vm5203 = vmor %vm5201, %vm5202
    %v5204 = vsel %vm5203, %v5196, %v5200
    %v5205 = vand.u32 2147483647, %v5146
    %vm5206 = vcmp.eq.f32.partialorder %v5205, 8.507059e+37
    %v5207 = vand.u32 %v5146, 2147483648
    %v5208 = vor.u32 1.1754944e-38, %v5207
    %v5209 = vsel %vm5206, %v5208, %v5204
    %v5210 = vmul.f32 1.0, %v5209
    %v5211 = vrcp.pop %v5147
    %v5212 = vmul.f32 %v5147, %v5211
    %v5213 = vsub.f32 1.0, %v5212
    %v5214 = vmul.f32 %v5211, %v5213
    %v5215 = vadd.f32 %v5211, %v5214
    %vm5216 = vweird.f32 %v5147
    %vm5217 = vweird.f32 %v5211
    %vm5218 = vmor %vm5216, %vm5217
    %v5219 = vsel %vm5218, %v5211, %v5215
    %v5220 = vand.u32 2147483647, %v5147
    %vm5221 = vcmp.eq.f32.partialorder %v5220, 8.507059e+37
    %v5222 = vand.u32 %v5147, 2147483648
    %v5223 = vor.u32 1.1754944e-38, %v5222
    %v5224 = vsel %vm5221, %v5223, %v5219
    %v5225 = vmul.f32 1.0, %v5224
    %v5226 = vrcp.pop %v5148
    %v5227 = vmul.f32 %v5148, %v5226
    %v5228 = vsub.f32 1.0, %v5227
    %v5229 = vmul.f32 %v5226, %v5228
    %v5230 = vadd.f32 %v5226, %v5229
    %vm5231 = vweird.f32 %v5148
    %vm5232 = vweird.f32 %v5226
    %vm5233 = vmor %vm5231, %vm5232
    %v5234 = vsel %vm5233, %v5226, %v5230
    %v5235 = vand.u32 2147483647, %v5148
    %vm5236 = vcmp.eq.f32.partialorder %v5235, 8.507059e+37
    %v5237 = vand.u32 %v5148, 2147483648
    %v5238 = vor.u32 1.1754944e-38, %v5237
    %v5239 = vsel %vm5236, %v5238, %v5234
    %v5240 = vmul.f32 1.0, %v5239
    %v5241 = vrcp.pop %v5149
    %v5242 = vmul.f32 %v5149, %v5241
    %v5243 = vsub.f32 1.0, %v5242
    %v5244 = vmul.f32 %v5241, %v5243
    %v5245 = vadd.f32 %v5241, %v5244
    %vm5246 = vweird.f32 %v5149
    %vm5247 = vweird.f32 %v5241
    %vm5248 = vmor %vm5246, %vm5247
    %v5249 = vsel %vm5248, %v5241, %v5245
    %v5250 = vand.u32 2147483647, %v5149
    %vm5251 = vcmp.eq.f32.partialorder %v5250, 8.507059e+37
    %v5252 = vand.u32 %v5149, 2147483648
    %v5253 = vor.u32 1.1754944e-38, %v5252
    %v5254 = vsel %vm5251, %v5253, %v5249
    %v5255 = vmul.f32 1.0, %v5254
    %v5256 = vrcp.pop %v5150
    %v5257 = vmul.f32 %v5150, %v5256
    %v5258 = vsub.f32 1.0, %v5257
    %v5259 = vmul.f32 %v5256, %v5258
    %v5260 = vadd.f32 %v5256, %v5259
    %vm5261 = vweird.f32 %v5150
    %vm5262 = vweird.f32 %v5256
    %vm5263 = vmor %vm5261, %vm5262
    %v5264 = vsel %vm5263, %v5256, %v5260
    %v5265 = vand.u32 2147483647, %v5150
    %vm5266 = vcmp.eq.f32.partialorder %v5265, 8.507059e+37
    %v5267 = vand.u32 %v5150, 2147483648
    %v5268 = vor.u32 1.1754944e-38, %v5267
    %v5269 = vsel %vm5266, %v5268, %v5264
    %v5270 = vmul.f32 1.0, %v5269
    %v5271 = vmul.f32 %v5096, %v5165
    %v5272 = vmul.f32 %v5099, %v5180
    %v5273 = vmul.f32 %v5102, %v5195
    %v5274 = vmul.f32 %v5105, %v5210
    %v5275 = vmul.f32 %v5108, %v5225
    %v5276 = vmul.f32 %v5111, %v5240
    %v5277 = vmul.f32 %v5114, %v5255
    %v5278 = vmul.f32 %v5117, %v5270
    %v5280 = vsel %vm4098, %v5271, 0
    %v5283 = vsel %vm4098, %v5272, 0
    %v5286 = vsel %vm4098, %v5273, 0
    %v5289 = vsel %vm4098, %v5274, 0
    %5291 = vmatpush.msra.mxu0 0.0
    %5292 = vmatpush.msra.mxu0 0.0
    %5293 = vmatpush.msra.mxu0 0.0
    %5294 = vmatpush.msra.mxu0 0.0
    %5295 = vmatpush.msra.mxu0 0.0
    %5296 = vmatpush.msra.mxu0 0.0
    %5297 = vmatpush.msra.mxu0 0.0
    %5298 = vmatpush.msra.mxu0 0.0
    %5299 = vmatpush.msra.mxu0 0.0
    %5300 = vmatpush.msra.mxu0 0.0
    %5301 = vmatpush.msra.mxu0 0.0
    %5302 = vmatpush.msra.mxu0 0.0
    %5303 = vmatpush.msra.mxu0 %v4336
    %5304 = vmatpush.msra.mxu0 %v4332
    %5305 = vmatpush.msra.mxu0 %v4328
    %5306 = vmatpush.msra.mxu0 %v4324
    %5307 = vmatmul.f32.gmra.mxu0 %v5280
    %v5308 = vpop.f32.mrf.mxu0
    %v5309 = vadd.f32 0.0, %v5308
    %5310 = vmatmul.f32.gmra.mxu0 %v5283
    %v5311 = vpop.f32.mrf.mxu0
    %v5312 = vadd.f32 0.0, %v5311
    %5313 = vmatmul.f32.gmra.mxu0 %v5286
    %v5314 = vpop.f32.mrf.mxu0
    %v5315 = vadd.f32 0.0, %v5314
    %5316 = vmatmul.f32.gmra.mxu0 %v5289
    %v5317 = vpop.f32.mrf.mxu0
    %v5318 = vadd.f32 0.0, %v5317
    %5319 = vdwg.mxu0
    %5320 = vmatpush.msra.mxu0 0.0
    %5321 = vmatpush.msra.mxu0 0.0
    %5322 = vmatpush.msra.mxu0 0.0
    %5323 = vmatpush.msra.mxu0 0.0
    %5324 = vmatpush.msra.mxu0 0.0
    %5325 = vmatpush.msra.mxu0 0.0
    %5326 = vmatpush.msra.mxu0 0.0
    %5327 = vmatpush.msra.mxu0 0.0
    %5328 = vmatpush.msra.mxu0 0.0
    %5329 = vmatpush.msra.mxu0 0.0
    %5330 = vmatpush.msra.mxu0 0.0
    %5331 = vmatpush.msra.mxu0 0.0
    %5332 = vmatpush.msra.mxu0 %v4337
    %5333 = vmatpush.msra.mxu0 %v4333
    %5334 = vmatpush.msra.mxu0 %v4329
    %5335 = vmatpush.msra.mxu0 %v4325
    %5336 = vmatmul.f32.gmra.mxu0 %v5280
    %v5337 = vpop.f32.mrf.mxu0
    %v5338 = vadd.f32 0.0, %v5337
    %5339 = vmatmul.f32.gmra.mxu0 %v5283
    %v5340 = vpop.f32.mrf.mxu0
    %v5341 = vadd.f32 0.0, %v5340
    %5342 = vmatmul.f32.gmra.mxu0 %v5286
    %v5343 = vpop.f32.mrf.mxu0
    %v5344 = vadd.f32 0.0, %v5343
    %5345 = vmatmul.f32.gmra.mxu0 %v5289
    %v5346 = vpop.f32.mrf.mxu0
    %v5347 = vadd.f32 0.0, %v5346
    %5348 = vdwg.mxu0
    %5349 = vmatpush.msra.mxu0 0.0
    %5350 = vmatpush.msra.mxu0 0.0
    %5351 = vmatpush.msra.mxu0 0.0
    %5352 = vmatpush.msra.mxu0 0.0
    %5353 = vmatpush.msra.mxu0 0.0
    %5354 = vmatpush.msra.mxu0 0.0
    %5355 = vmatpush.msra.mxu0 0.0
    %5356 = vmatpush.msra.mxu0 0.0
    %5357 = vmatpush.msra.mxu0 0.0
    %5358 = vmatpush.msra.mxu0 0.0
    %5359 = vmatpush.msra.mxu0 0.0
    %5360 = vmatpush.msra.mxu0 0.0
    %5361 = vmatpush.msra.mxu0 %v4338
    %5362 = vmatpush.msra.mxu0 %v4334
    %5363 = vmatpush.msra.mxu0 %v4330
    %5364 = vmatpush.msra.mxu0 %v4326
    %5365 = vmatmul.f32.gmra.mxu0 %v5280
    %v5366 = vpop.f32.mrf.mxu0
    %v5367 = vadd.f32 0.0, %v5366
    %5368 = vmatmul.f32.gmra.mxu0 %v5283
    %v5369 = vpop.f32.mrf.mxu0
    %v5370 = vadd.f32 0.0, %v5369
    %5371 = vmatmul.f32.gmra.mxu0 %v5286
    %v5372 = vpop.f32.mrf.mxu0
    %v5373 = vadd.f32 0.0, %v5372
    %5374 = vmatmul.f32.gmra.mxu0 %v5289
    %v5375 = vpop.f32.mrf.mxu0
    %v5376 = vadd.f32 0.0, %v5375
    %5377 = vdwg.mxu0
    %5378 = vmatpush.msra.mxu0 0.0
    %5379 = vmatpush.msra.mxu0 0.0
    %5380 = vmatpush.msra.mxu0 0.0
    %5381 = vmatpush.msra.mxu0 0.0
    %5382 = vmatpush.msra.mxu0 0.0
    %5383 = vmatpush.msra.mxu0 0.0
    %5384 = vmatpush.msra.mxu0 0.0
    %5385 = vmatpush.msra.mxu0 0.0
    %5386 = vmatpush.msra.mxu0 0.0
    %5387 = vmatpush.msra.mxu0 0.0
    %5388 = vmatpush.msra.mxu0 0.0
    %5389 = vmatpush.msra.mxu0 0.0
    %5390 = vmatpush.msra.mxu0 %v4339
    %5391 = vmatpush.msra.mxu0 %v4335
    %5392 = vmatpush.msra.mxu0 %v4331
    %5393 = vmatpush.msra.mxu0 %v4327
    %5394 = vmatmul.f32.gmra.mxu0 %v5280
    %v5395 = vpop.f32.mrf.mxu0
    %v5396 = vadd.f32 0.0, %v5395
    %5397 = vmatmul.f32.gmra.mxu0 %v5283
    %v5398 = vpop.f32.mrf.mxu0
    %v5399 = vadd.f32 0.0, %v5398
    %5400 = vmatmul.f32.gmra.mxu0 %v5286
    %v5401 = vpop.f32.mrf.mxu0
    %v5402 = vadd.f32 0.0, %v5401
    %5403 = vmatmul.f32.gmra.mxu0 %v5289
    %v5404 = vpop.f32.mrf.mxu0
    %v5405 = vadd.f32 0.0, %v5404
    %5406 = vdwg.mxu0
    %v5407 = vmul.f32 %v3846, %v5309
    %v5408 = vmul.f32 %v3847, %v5338
    %v5409 = vmul.f32 %v3848, %v5367
    %v5410 = vmul.f32 %v3849, %v5396
    %v5411 = vmul.f32 %v3850, %v5312
    %v5412 = vmul.f32 %v3851, %v5341
    %v5413 = vmul.f32 %v3852, %v5370
    %v5414 = vmul.f32 %v3853, %v5399
    %v5415 = vmul.f32 %v3854, %v5315
    %v5416 = vmul.f32 %v3855, %v5344
    %v5417 = vmul.f32 %v3856, %v5373
    %v5418 = vmul.f32 %v3857, %v5402
    %v5419 = vmul.f32 %v3858, %v5318
    %v5420 = vmul.f32 %v3859, %v5347
    %v5421 = vmul.f32 %v3860, %v5376
    %v5422 = vmul.f32 %v3861, %v5405
    %5423 = vmatpush.msra.mxu0 %v4500
    %5424 = vmatpush.msra.mxu0 %v4499
    %5425 = vmatpush.msra.mxu0 %v4498
    %5426 = vmatpush.msra.mxu0 %v4497
    %5427 = vmatpush.msra.mxu0 %v4496
    %5428 = vmatpush.msra.mxu0 %v4495
    %5429 = vmatpush.msra.mxu0 %v4494
    %5430 = vmatpush.msra.mxu0 %v4493
    %5431 = vmatpush.msra.mxu0 %v4492
    %5432 = vmatpush.msra.mxu0 %v4491
    %5433 = vmatpush.msra.mxu0 %v4490
    %5434 = vmatpush.msra.mxu0 %v4489
    %5435 = vmatpush.msra.mxu0 %v4488
    %5436 = vmatpush.msra.mxu0 %v4487
    %5437 = vmatpush.msra.mxu0 %v4486
    %5438 = vmatpush.msra.mxu0 %v4485
    %5439 = vmatmul.f32.gmra.mxu0 %v5407
    %v5440 = vpop.f32.mrf.mxu0
    %v5441 = vadd.f32 0.0, %v5440
    %5442 = vmatmul.f32.gmra.mxu0 %v5411
    %v5443 = vpop.f32.mrf.mxu0
    %v5444 = vadd.f32 0.0, %v5443
    %5445 = vmatmul.f32.gmra.mxu0 %v5415
    %v5446 = vpop.f32.mrf.mxu0
    %v5447 = vadd.f32 0.0, %v5446
    %5448 = vmatmul.f32.gmra.mxu0 %v5419
    %v5449 = vpop.f32.mrf.mxu0
    %v5450 = vadd.f32 0.0, %v5449
    %5451 = vdwg.mxu0
    %5452 = vmatpush.msra.mxu0 %v4516
    %5453 = vmatpush.msra.mxu0 %v4515
    %5454 = vmatpush.msra.mxu0 %v4514
    %5455 = vmatpush.msra.mxu0 %v4513
    %5456 = vmatpush.msra.mxu0 %v4512
    %5457 = vmatpush.msra.mxu0 %v4511
    %5458 = vmatpush.msra.mxu0 %v4510
    %5459 = vmatpush.msra.mxu0 %v4509
    %5460 = vmatpush.msra.mxu0 %v4508
    %5461 = vmatpush.msra.mxu0 %v4507
    %5462 = vmatpush.msra.mxu0 %v4506
    %5463 = vmatpush.msra.mxu0 %v4505
    %5464 = vmatpush.msra.mxu0 %v4504
    %5465 = vmatpush.msra.mxu0 %v4503
    %5466 = vmatpush.msra.mxu0 %v4502
    %5467 = vmatpush.msra.mxu0 %v4501
    %5468 = vmatmul.f32.gmra.mxu0 %v5408
    %v5469 = vpop.f32.mrf.mxu0
    %v5470 = vadd.f32 %v5441, %v5469
    %5471 = vmatmul.f32.gmra.mxu0 %v5412
    %v5472 = vpop.f32.mrf.mxu0
    %v5473 = vadd.f32 %v5444, %v5472
    %5474 = vmatmul.f32.gmra.mxu0 %v5416
    %v5475 = vpop.f32.mrf.mxu0
    %v5476 = vadd.f32 %v5447, %v5475
    %5477 = vmatmul.f32.gmra.mxu0 %v5420
    %v5478 = vpop.f32.mrf.mxu0
    %v5479 = vadd.f32 %v5450, %v5478
    %5480 = vdwg.mxu0
    %5481 = vmatpush.msra.mxu0 %v4532
    %5482 = vmatpush.msra.mxu0 %v4531
    %5483 = vmatpush.msra.mxu0 %v4530
    %5484 = vmatpush.msra.mxu0 %v4529
    %5485 = vmatpush.msra.mxu0 %v4528
    %5486 = vmatpush.msra.mxu0 %v4527
    %5487 = vmatpush.msra.mxu0 %v4526
    %5488 = vmatpush.msra.mxu0 %v4525
    %5489 = vmatpush.msra.mxu0 %v4524
    %5490 = vmatpush.msra.mxu0 %v4523
    %5491 = vmatpush.msra.mxu0 %v4522
    %5492 = vmatpush.msra.mxu0 %v4521
    %5493 = vmatpush.msra.mxu0 %v4520
    %5494 = vmatpush.msra.mxu0 %v4519
    %5495 = vmatpush.msra.mxu0 %v4518
    %5496 = vmatpush.msra.mxu0 %v4517
    %5497 = vmatmul.f32.gmra.mxu0 %v5409
    %v5498 = vpop.f32.mrf.mxu0
    %v5499 = vadd.f32 %v5470, %v5498
    %5500 = vmatmul.f32.gmra.mxu0 %v5413
    %v5501 = vpop.f32.mrf.mxu0
    %v5502 = vadd.f32 %v5473, %v5501
    %5503 = vmatmul.f32.gmra.mxu0 %v5417
    %v5504 = vpop.f32.mrf.mxu0
    %v5505 = vadd.f32 %v5476, %v5504
    %5506 = vmatmul.f32.gmra.mxu0 %v5421
    %v5507 = vpop.f32.mrf.mxu0
    %v5508 = vadd.f32 %v5479, %v5507
    %5509 = vdwg.mxu0
    %5510 = vmatpush.msra.mxu0 %v4548
    %5511 = vmatpush.msra.mxu0 %v4547
    %5512 = vmatpush.msra.mxu0 %v4546
    %5513 = vmatpush.msra.mxu0 %v4545
    %5514 = vmatpush.msra.mxu0 %v4544
    %5515 = vmatpush.msra.mxu0 %v4543
    %5516 = vmatpush.msra.mxu0 %v4542
    %5517 = vmatpush.msra.mxu0 %v4541
    %5518 = vmatpush.msra.mxu0 %v4540
    %5519 = vmatpush.msra.mxu0 %v4539
    %5520 = vmatpush.msra.mxu0 %v4538
    %5521 = vmatpush.msra.mxu0 %v4537
    %5522 = vmatpush.msra.mxu0 %v4536
    %5523 = vmatpush.msra.mxu0 %v4535
    %5524 = vmatpush.msra.mxu0 %v4534
    %5525 = vmatpush.msra.mxu0 %v4533
    %5526 = vmatmul.f32.gmra.mxu0 %v5410
    %v5527 = vpop.f32.mrf.mxu0
    %v5528 = vadd.f32 %v5499, %v5527
    %5529 = vmatmul.f32.gmra.mxu0 %v5414
    %v5530 = vpop.f32.mrf.mxu0
    %v5531 = vadd.f32 %v5502, %v5530
    %5532 = vmatmul.f32.gmra.mxu0 %v5418
    %v5533 = vpop.f32.mrf.mxu0
    %v5534 = vadd.f32 %v5505, %v5533
    %5535 = vmatmul.f32.gmra.mxu0 %v5422
    %v5536 = vpop.f32.mrf.mxu0
    %v5537 = vadd.f32 %v5508, %v5536
    %5538 = vdwg.mxu0
    %s5539 = scalar_lea.vmem %s9, 32
    %v5540 = vld [vmem:[%s5539] sm:$0xff]
    %v5541 = vld [vmem:[%s5539 + $0x8] sm:$0xff]
    %v5542 = vld [vmem:[%s5539 + $0x10] sm:$0xff]
    %v5543 = vld [vmem:[%s5539 + $0x18] sm:$0xff]
    %v5544 = vld [vmem:[%s5005] sm:$0xff]
    %v5545 = vld [vmem:[%s5005 + $0x8] sm:$0xff]
    %v5546 = vld [vmem:[%s5005 + $0x10] sm:$0xff]
    %v5547 = vld [vmem:[%s5005 + $0x18] sm:$0xff]
    %5549 = vset.pattern.permute.xlu0 1
    %5550 = vperm.xlu0 %5549, %v5544
    %v5551 = vpop.permute.xlu0 %5550
    %5554 = vset.pattern.permute.xlu0 1
    %5555 = vperm.xlu0 %5554, %v5545
    %v5556 = vpop.permute.xlu0 %5555
    %5559 = vset.pattern.permute.xlu0 1
    %5560 = vperm.xlu0 %5559, %v5546
    %v5561 = vpop.permute.xlu0 %5560
    %5564 = vset.pattern.permute.xlu0 1
    %5565 = vperm.xlu0 %5564, %v5547
    %v5566 = vpop.permute.xlu0 %5565
    %v5569 = vsel %vm840, %v5540, 0
    %v5572 = vsel %vm840, %v5541, 0
    %v5575 = vsel %vm840, %v5542, 0
    %v5578 = vsel %vm840, %v5543, 0
    %5580 = vmatpush.msra.mxu0 0.0
    %5581 = vmatpush.msra.mxu0 0.0
    %5582 = vmatpush.msra.mxu0 0.0
    %5583 = vmatpush.msra.mxu0 0.0
    %5584 = vmatpush.msra.mxu0 0.0
    %5585 = vmatpush.msra.mxu0 0.0
    %5586 = vmatpush.msra.mxu0 0.0
    %5587 = vmatpush.msra.mxu0 0.0
    %5588 = vmatpush.msra.mxu0 %v5537
    %5589 = vmatpush.msra.mxu0 %v5534
    %5590 = vmatpush.msra.mxu0 %v5531
    %5591 = vmatpush.msra.mxu0 %v5528
    %5592 = vmatpush.msra.mxu0 %v5274
    %5593 = vmatpush.msra.mxu0 %v5273
    %5594 = vmatpush.msra.mxu0 %v5272
    %5595 = vmatpush.msra.mxu0 %v5271
    %5596 = vmatmul.f32.gmra.mxu0 %v5569
    %v5597 = vpop.f32.mrf.mxu0
    %v5598 = vadd.f32 %v5551, %v5597
    %5599 = vmatmul.f32.gmra.mxu0 %v5572
    %v5600 = vpop.f32.mrf.mxu0
    %v5601 = vadd.f32 %v5556, %v5600
    %5602 = vmatmul.f32.gmra.mxu0 %v5575
    %v5603 = vpop.f32.mrf.mxu0
    %v5604 = vadd.f32 %v5561, %v5603
    %5605 = vmatmul.f32.gmra.mxu0 %v5578
    %v5606 = vpop.f32.mrf.mxu0
    %v5607 = vadd.f32 %v5566, %v5606
    %5608 = vdwg.mxu0
    %v5609 = vxor.u32 %v5598, 2147483648
    %v5610 = vxor.u32 %v5601, 2147483648
    %v5611 = vxor.u32 %v5604, 2147483648
    %v5612 = vxor.u32 %v5607, 2147483648
    %v5613 = vmul.f32 %v5609, 1.442695
    %v5614 = vpow.pop %v5613
    %v5615 = vmul.f32 %v5610, 1.442695
    %v5616 = vpow.pop %v5615
    %v5617 = vmul.f32 %v5611, 1.442695
    %v5618 = vpow.pop %v5617
    %v5619 = vmul.f32 %v5612, 1.442695
    %v5620 = vpow.pop %v5619
    %v5621 = vadd.f32 %v5614, 1.0
    %v5622 = vadd.f32 %v5616, 1.0
    %v5623 = vadd.f32 %v5618, 1.0
    %v5624 = vadd.f32 %v5620, 1.0
    %v5625 = vrcp.pop %v5621
    %v5626 = vmul.f32 %v5621, %v5625
    %v5627 = vsub.f32 1.0, %v5626
    %v5628 = vmul.f32 %v5625, %v5627
    %v5629 = vadd.f32 %v5625, %v5628
    %vm5630 = vweird.f32 %v5621
    %vm5631 = vweird.f32 %v5625
    %vm5632 = vmor %vm5630, %vm5631
    %v5633 = vsel %vm5632, %v5625, %v5629
    %v5634 = vand.u32 2147483647, %v5621
    %vm5635 = vcmp.eq.f32.partialorder %v5634, 8.507059e+37
    %v5636 = vand.u32 %v5621, 2147483648
    %v5637 = vor.u32 1.1754944e-38, %v5636
    %v5638 = vsel %vm5635, %v5637, %v5633
    %v5639 = vmul.f32 1.0, %v5638
    %v5640 = vrcp.pop %v5622
    %v5641 = vmul.f32 %v5622, %v5640
    %v5642 = vsub.f32 1.0, %v5641
    %v5643 = vmul.f32 %v5640, %v5642
    %v5644 = vadd.f32 %v5640, %v5643
    %vm5645 = vweird.f32 %v5622
    %vm5646 = vweird.f32 %v5640
    %vm5647 = vmor %vm5645, %vm5646
    %v5648 = vsel %vm5647, %v5640, %v5644
    %v5649 = vand.u32 2147483647, %v5622
    %vm5650 = vcmp.eq.f32.partialorder %v5649, 8.507059e+37
    %v5651 = vand.u32 %v5622, 2147483648
    %v5652 = vor.u32 1.1754944e-38, %v5651
    %v5653 = vsel %vm5650, %v5652, %v5648
    %v5654 = vmul.f32 1.0, %v5653
    %v5655 = vrcp.pop %v5623
    %v5656 = vmul.f32 %v5623, %v5655
    %v5657 = vsub.f32 1.0, %v5656
    %v5658 = vmul.f32 %v5655, %v5657
    %v5659 = vadd.f32 %v5655, %v5658
    %vm5660 = vweird.f32 %v5623
    %vm5661 = vweird.f32 %v5655
    %vm5662 = vmor %vm5660, %vm5661
    %v5663 = vsel %vm5662, %v5655, %v5659
    %v5664 = vand.u32 2147483647, %v5623
    %vm5665 = vcmp.eq.f32.partialorder %v5664, 8.507059e+37
    %v5666 = vand.u32 %v5623, 2147483648
    %v5667 = vor.u32 1.1754944e-38, %v5666
    %v5668 = vsel %vm5665, %v5667, %v5663
    %v5669 = vmul.f32 1.0, %v5668
    %v5670 = vrcp.pop %v5624
    %v5671 = vmul.f32 %v5624, %v5670
    %v5672 = vsub.f32 1.0, %v5671
    %v5673 = vmul.f32 %v5670, %v5672
    %v5674 = vadd.f32 %v5670, %v5673
    %vm5675 = vweird.f32 %v5624
    %vm5676 = vweird.f32 %v5670
    %vm5677 = vmor %vm5675, %vm5676
    %v5678 = vsel %vm5677, %v5670, %v5674
    %v5679 = vand.u32 2147483647, %v5624
    %vm5680 = vcmp.eq.f32.partialorder %v5679, 8.507059e+37
    %v5681 = vand.u32 %v5624, 2147483648
    %v5682 = vor.u32 1.1754944e-38, %v5681
    %v5683 = vsel %vm5680, %v5682, %v5678
    %v5684 = vmul.f32 1.0, %v5683
    %v5685 = vmul.f32 %v5598, %v5639
    %v5686 = vmul.f32 %v5601, %v5654
    %v5687 = vmul.f32 %v5604, %v5669
    %v5688 = vmul.f32 %v5607, %v5684
    %v5689 = vsel %vm4098, %v5685, 0.0
    %v5690 = vsel %vm4098, %v5686, 0.0
    %v5691 = vadd.f32 %v5689, %v5690
    %v5692 = vsel %vm4098, %v5687, 0.0
    %v5693 = vadd.f32 %v5691, %v5692
    %v5694 = vsel %vm4098, %v5688, 0.0
    %v5695 = vadd.f32 %v5693, %v5694
    %v5696 = vrot.slane %v5695, 4
    %v5697 = vadd.f32 %v5695, %v5696
    %v5698 = vrot.slane %v5697, 2
    %v5699 = vadd.f32 %v5697, %v5698
    %v5700 = vrot.slane %v5699, 1
    %v5701 = vadd.f32 %v5699, %v5700
    %v5702 = vmul.f32 %v5701, %v4833
    %v5703 = vsub.f32 %v5685, %v5702
    %v5704 = vsub.f32 %v5686, %v5702
    %v5705 = vsub.f32 %v5687, %v5702
    %v5706 = vsub.f32 %v5688, %v5702
    %v5707 = vmul.f32 %v5703, %v5703
    %v5708 = vmul.f32 %v5704, %v5704
    %v5709 = vmul.f32 %v5705, %v5705
    %v5710 = vmul.f32 %v5706, %v5706
    %v5711 = vsel %vm4098, %v5707, 0.0
    %v5712 = vsel %vm4098, %v5708, 0.0
    %v5713 = vadd.f32 %v5711, %v5712
    %v5714 = vsel %vm4098, %v5709, 0.0
    %v5715 = vadd.f32 %v5713, %v5714
    %v5716 = vsel %vm4098, %v5710, 0.0
    %v5717 = vadd.f32 %v5715, %v5716
    %v5718 = vrot.slane %v5717, 4
    %v5719 = vadd.f32 %v5717, %v5718
    %v5720 = vrot.slane %v5719, 2
    %v5721 = vadd.f32 %v5719, %v5720
    %v5722 = vrot.slane %v5721, 1
    %v5723 = vadd.f32 %v5721, %v5722
    %v5724 = vmul.f32 %v5723, %v4833
    %v5725 = vadd.f32 %v5724, 1e-05
    %v5726 = vrsqrt.pop %v5725
    %v5727 = vmul.f32 %v5726, %v5725
    %v5728 = vmul.f32 %v5727, %v5726
    %v5729 = vmul.f32 0.5, %v5728
    %v5730 = vsub.f32 1.5, %v5729
    %v5731 = vmul.f32 %v5726, %v5730
    %vm5732 = vweird.f32 %v5725
    %vm5733 = vweird.f32 %v5726
    %vm5734 = vmor %vm5732, %vm5733
    %v5735 = vsel %vm5734, %v5726, %v5731
    %v5736 = vmul.f32 %v5703, %v5735
    %v5737 = vmul.f32 %v5704, %v5735
    %v5738 = vmul.f32 %v5705, %v5735
    %v5739 = vmul.f32 %v5706, %v5735
    %5740 = vset.pattern.permute.xlu0 2
    %5741 = vperm.xlu0 %5740, %v5544
    %v5742 = vpop.permute.xlu0 %5741
    %5744 = vset.pattern.permute.xlu0 2
    %5745 = vperm.xlu0 %5744, %v5545
    %v5746 = vpop.permute.xlu0 %5745
    %5748 = vset.pattern.permute.xlu0 2
    %5749 = vperm.xlu0 %5748, %v5546
    %v5750 = vpop.permute.xlu0 %5749
    %5752 = vset.pattern.permute.xlu0 2
    %5753 = vperm.xlu0 %5752, %v5547
    %v5754 = vpop.permute.xlu0 %5753
    %v5756 = vmul.f32 %v5736, %v5742
    %v5757 = vmul.f32 %v5737, %v5746
    %v5758 = vmul.f32 %v5738, %v5750
    %v5759 = vmul.f32 %v5739, %v5754
    %5760 = vset.pattern.permute.xlu0 3
    %5761 = vperm.xlu0 %5760, %v5544
    %v5762 = vpop.permute.xlu0 %5761
    %5764 = vset.pattern.permute.xlu0 3
    %5765 = vperm.xlu0 %5764, %v5545
    %v5766 = vpop.permute.xlu0 %5765
    %5768 = vset.pattern.permute.xlu0 3
    %5769 = vperm.xlu0 %5768, %v5546
    %v5770 = vpop.permute.xlu0 %5769
    %5772 = vset.pattern.permute.xlu0 3
    %5773 = vperm.xlu0 %5772, %v5547
    %v5774 = vpop.permute.xlu0 %5773
    %v5776 = vadd.f32 %v5756, %v5762
    %v5777 = vadd.f32 %v5757, %v5766
    %v5778 = vadd.f32 %v5758, %v5770
    %v5779 = vadd.f32 %v5759, %v5774
    %v5780 = vadd.f32 %v5275, %v5776
    %v5781 = vadd.f32 %v5276, %v5777
    %v5782 = vadd.f32 %v5277, %v5778
    %v5783 = vadd.f32 %v5278, %v5779
    %v5784 = vxor.u32 %v5780, 2147483648
    %v5785 = vxor.u32 %v5781, 2147483648
    %v5786 = vxor.u32 %v5782, 2147483648
    %v5787 = vxor.u32 %v5783, 2147483648
    %v5788 = vmul.f32 %v5784, 1.442695
    %v5789 = vpow.pop %v5788
    %v5790 = vmul.f32 %v5785, 1.442695
    %v5791 = vpow.pop %v5790
    %v5792 = vmul.f32 %v5786, 1.442695
    %v5793 = vpow.pop %v5792
    %v5794 = vmul.f32 %v5787, 1.442695
    %v5795 = vpow.pop %v5794
    %v5796 = vadd.f32 %v5789, 1.0
    %v5797 = vadd.f32 %v5791, 1.0
    %v5798 = vadd.f32 %v5793, 1.0
    %v5799 = vadd.f32 %v5795, 1.0
    %v5800 = vrcp.pop %v5796
    %v5801 = vmul.f32 %v5796, %v5800
    %v5802 = vsub.f32 1.0, %v5801
    %v5803 = vmul.f32 %v5800, %v5802
    %v5804 = vadd.f32 %v5800, %v5803
    %vm5805 = vweird.f32 %v5796
    %vm5806 = vweird.f32 %v5800
    %vm5807 = vmor %vm5805, %vm5806
    %v5808 = vsel %vm5807, %v5800, %v5804
    %v5809 = vand.u32 2147483647, %v5796
    %vm5810 = vcmp.eq.f32.partialorder %v5809, 8.507059e+37
    %v5811 = vand.u32 %v5796, 2147483648
    %v5812 = vor.u32 1.1754944e-38, %v5811
    %v5813 = vsel %vm5810, %v5812, %v5808
    %v5814 = vmul.f32 1.0, %v5813
    %v5815 = vrcp.pop %v5797
    %v5816 = vmul.f32 %v5797, %v5815
    %v5817 = vsub.f32 1.0, %v5816
    %v5818 = vmul.f32 %v5815, %v5817
    %v5819 = vadd.f32 %v5815, %v5818
    %vm5820 = vweird.f32 %v5797
    %vm5821 = vweird.f32 %v5815
    %vm5822 = vmor %vm5820, %vm5821
    %v5823 = vsel %vm5822, %v5815, %v5819
    %v5824 = vand.u32 2147483647, %v5797
    %vm5825 = vcmp.eq.f32.partialorder %v5824, 8.507059e+37
    %v5826 = vand.u32 %v5797, 2147483648
    %v5827 = vor.u32 1.1754944e-38, %v5826
    %v5828 = vsel %vm5825, %v5827, %v5823
    %v5829 = vmul.f32 1.0, %v5828
    %v5830 = vrcp.pop %v5798
    %v5831 = vmul.f32 %v5798, %v5830
    %v5832 = vsub.f32 1.0, %v5831
    %v5833 = vmul.f32 %v5830, %v5832
    %v5834 = vadd.f32 %v5830, %v5833
    %vm5835 = vweird.f32 %v5798
    %vm5836 = vweird.f32 %v5830
    %vm5837 = vmor %vm5835, %vm5836
    %v5838 = vsel %vm5837, %v5830, %v5834
    %v5839 = vand.u32 2147483647, %v5798
    %vm5840 = vcmp.eq.f32.partialorder %v5839, 8.507059e+37
    %v5841 = vand.u32 %v5798, 2147483648
    %v5842 = vor.u32 1.1754944e-38, %v5841
    %v5843 = vsel %vm5840, %v5842, %v5838
    %v5844 = vmul.f32 1.0, %v5843
    %v5845 = vrcp.pop %v5799
    %v5846 = vmul.f32 %v5799, %v5845
    %v5847 = vsub.f32 1.0, %v5846
    %v5848 = vmul.f32 %v5845, %v5847
    %v5849 = vadd.f32 %v5845, %v5848
    %vm5850 = vweird.f32 %v5799
    %vm5851 = vweird.f32 %v5845
    %vm5852 = vmor %vm5850, %vm5851
    %v5853 = vsel %vm5852, %v5845, %v5849
    %v5854 = vand.u32 2147483647, %v5799
    %vm5855 = vcmp.eq.f32.partialorder %v5854, 8.507059e+37
    %v5856 = vand.u32 %v5799, 2147483648
    %v5857 = vor.u32 1.1754944e-38, %v5856
    %v5858 = vsel %vm5855, %v5857, %v5853
    %v5859 = vmul.f32 1.0, %v5858
    %v5860 = vmul.f32 %v5780, %v5814
    %v5861 = vmul.f32 %v5781, %v5829
    %v5862 = vmul.f32 %v5782, %v5844
    %v5863 = vmul.f32 %v5783, %v5859
    %v5864 = vld [vmem:[%s11] sm:$0xff]
    %v5865 = vld [vmem:[%s11 + $0x8] sm:$0xff]
    %v5866 = vld [vmem:[%s11 + $0x10] sm:$0xff]
    %v5867 = vld [vmem:[%s11 + $0x18] sm:$0xff]
    %5868 = vset.pattern.permute.xlu0 1
    %5869 = vperm.xlu0 %5868, %v3684
    %v5870 = vpop.permute.xlu0 %5869
    %5872 = vset.pattern.permute.xlu0 1
    %5873 = vperm.xlu0 %5872, %v3685
    %v5874 = vpop.permute.xlu0 %5873
    %5876 = vset.pattern.permute.xlu0 1
    %5877 = vperm.xlu0 %5876, %v3686
    %v5878 = vpop.permute.xlu0 %5877
    %5880 = vset.pattern.permute.xlu0 1
    %5881 = vperm.xlu0 %5880, %v3687
    %v5882 = vpop.permute.xlu0 %5881
    %v5885 = vsel %vm4098, %v5864, 0
    %v5888 = vsel %vm4098, %v5865, 0
    %v5891 = vsel %vm4098, %v5866, 0
    %v5894 = vsel %vm4098, %v5867, 0
    %5896 = vmatpush.msra.mxu0 0.0
    %5897 = vmatpush.msra.mxu0 0.0
    %5898 = vmatpush.msra.mxu0 0.0
    %5899 = vmatpush.msra.mxu0 0.0
    %5900 = vmatpush.msra.mxu0 0.0
    %5901 = vmatpush.msra.mxu0 0.0
    %5902 = vmatpush.msra.mxu0 0.0
    %5903 = vmatpush.msra.mxu0 0.0
    %5904 = vmatpush.msra.mxu0 0.0
    %5905 = vmatpush.msra.mxu0 0.0
    %5906 = vmatpush.msra.mxu0 0.0
    %5907 = vmatpush.msra.mxu0 0.0
    %5908 = vmatpush.msra.mxu0 %v5863
    %5909 = vmatpush.msra.mxu0 %v5862
    %5910 = vmatpush.msra.mxu0 %v5861
    %5911 = vmatpush.msra.mxu0 %v5860
    %5912 = vmatmul.f32.gmra.mxu0 %v5885
    %v5913 = vpop.f32.mrf.mxu0
    %v5914 = vadd.f32 %v5870, %v5913
    %5915 = vmatmul.f32.gmra.mxu0 %v5888
    %v5916 = vpop.f32.mrf.mxu0
    %v5917 = vadd.f32 %v5874, %v5916
    %5918 = vmatmul.f32.gmra.mxu0 %v5891
    %v5919 = vpop.f32.mrf.mxu0
    %v5920 = vadd.f32 %v5878, %v5919
    %5921 = vmatmul.f32.gmra.mxu0 %v5894
    %v5922 = vpop.f32.mrf.mxu0
    %v5923 = vadd.f32 %v5882, %v5922
    %5924 = vdwg.mxu0
    %v5925 = vxor.u32 %v5914, 2147483648
    %v5926 = vxor.u32 %v5917, 2147483648
    %v5927 = vxor.u32 %v5920, 2147483648
    %v5928 = vxor.u32 %v5923, 2147483648
    %v5929 = vmul.f32 %v5925, 1.442695
    %v5930 = vpow.pop %v5929
    %v5931 = vmul.f32 %v5926, 1.442695
    %v5932 = vpow.pop %v5931
    %v5933 = vmul.f32 %v5927, 1.442695
    %v5934 = vpow.pop %v5933
    %v5935 = vmul.f32 %v5928, 1.442695
    %v5936 = vpow.pop %v5935
    %v5937 = vadd.f32 %v5930, 1.0
    %v5938 = vadd.f32 %v5932, 1.0
    %v5939 = vadd.f32 %v5934, 1.0
    %v5940 = vadd.f32 %v5936, 1.0
    %v5941 = vrcp.pop %v5937
    %v5942 = vmul.f32 %v5937, %v5941
    %v5943 = vsub.f32 1.0, %v5942
    %v5944 = vmul.f32 %v5941, %v5943
    %v5945 = vadd.f32 %v5941, %v5944
    %vm5946 = vweird.f32 %v5937
    %vm5947 = vweird.f32 %v5941
    %vm5948 = vmor %vm5946, %vm5947
    %v5949 = vsel %vm5948, %v5941, %v5945
    %v5950 = vand.u32 2147483647, %v5937
    %vm5951 = vcmp.eq.f32.partialorder %v5950, 8.507059e+37
    %v5952 = vand.u32 %v5937, 2147483648
    %v5953 = vor.u32 1.1754944e-38, %v5952
    %v5954 = vsel %vm5951, %v5953, %v5949
    %v5955 = vmul.f32 1.0, %v5954
    %v5956 = vrcp.pop %v5938
    %v5957 = vmul.f32 %v5938, %v5956
    %v5958 = vsub.f32 1.0, %v5957
    %v5959 = vmul.f32 %v5956, %v5958
    %v5960 = vadd.f32 %v5956, %v5959
    %vm5961 = vweird.f32 %v5938
    %vm5962 = vweird.f32 %v5956
    %vm5963 = vmor %vm5961, %vm5962
    %v5964 = vsel %vm5963, %v5956, %v5960
    %v5965 = vand.u32 2147483647, %v5938
    %vm5966 = vcmp.eq.f32.partialorder %v5965, 8.507059e+37
    %v5967 = vand.u32 %v5938, 2147483648
    %v5968 = vor.u32 1.1754944e-38, %v5967
    %v5969 = vsel %vm5966, %v5968, %v5964
    %v5970 = vmul.f32 1.0, %v5969
    %v5971 = vrcp.pop %v5939
    %v5972 = vmul.f32 %v5939, %v5971
    %v5973 = vsub.f32 1.0, %v5972
    %v5974 = vmul.f32 %v5971, %v5973
    %v5975 = vadd.f32 %v5971, %v5974
    %vm5976 = vweird.f32 %v5939
    %vm5977 = vweird.f32 %v5971
    %vm5978 = vmor %vm5976, %vm5977
    %v5979 = vsel %vm5978, %v5971, %v5975
    %v5980 = vand.u32 2147483647, %v5939
    %vm5981 = vcmp.eq.f32.partialorder %v5980, 8.507059e+37
    %v5982 = vand.u32 %v5939, 2147483648
    %v5983 = vor.u32 1.1754944e-38, %v5982
    %v5984 = vsel %vm5981, %v5983, %v5979
    %v5985 = vmul.f32 1.0, %v5984
    %v5986 = vrcp.pop %v5940
    %v5987 = vmul.f32 %v5940, %v5986
    %v5988 = vsub.f32 1.0, %v5987
    %v5989 = vmul.f32 %v5986, %v5988
    %v5990 = vadd.f32 %v5986, %v5989
    %vm5991 = vweird.f32 %v5940
    %vm5992 = vweird.f32 %v5986
    %vm5993 = vmor %vm5991, %vm5992
    %v5994 = vsel %vm5993, %v5986, %v5990
    %v5995 = vand.u32 2147483647, %v5940
    %vm5996 = vcmp.eq.f32.partialorder %v5995, 8.507059e+37
    %v5997 = vand.u32 %v5940, 2147483648
    %v5998 = vor.u32 1.1754944e-38, %v5997
    %v5999 = vsel %vm5996, %v5998, %v5994
    %v6000 = vmul.f32 1.0, %v5999
    %v6001 = vmul.f32 %v5914, %v5955
    %v6002 = vmul.f32 %v5917, %v5970
    %v6003 = vmul.f32 %v5920, %v5985
    %v6004 = vmul.f32 %v5923, %v6000
    %6005 = vst.msk [vmem:[#allocation3] sm:$0xff] %vm4098, %v6001
    %6006 = vst.msk [vmem:[#allocation3 + $0x8] sm:$0xff] %vm4098, %v6002
    %6007 = vst.msk [vmem:[#allocation3 + $0x10] sm:$0xff] %vm4098, %v6003
    %6008 = vst.msk [vmem:[#allocation3 + $0x18] sm:$0xff] %vm4098, %v6004
    // Predicated region
    $region50: #{tpu_custom_call.1} parent=1 // pred_check
      _
    $region51: #{tpu_custom_call.1} parent=1 // pred_check_branch
      %6010 = sbr.rel (0) target = $region53
    $region52: #{tpu_custom_call.1} parent=1 // pred_region
      %6012 = vsyncadd [#allocation4], 0
      %s6013 = sshll.u32 [#allocation3], 4
      %s6014 = int_to_ptr.vmem [resolvable:$true] %s6013
      %s6015 = sshll.u32 %s12, 4
      %s6016 = int_to_ptr.hbm [resolvable:$true] %s6015
      %6021 = dma.vmem_to_hbm [thread:$0]  %s6014, 512, %s6016, [#allocation4], 128, 128, 8
    $region53: #{tpu_custom_call.1} parent=1 // pred_fallthru
      _
    // Predicated region
    $region54: #{tpu_custom_call.1} parent=1 // pred_check
      _
    $region55: #{tpu_custom_call.1} parent=1 // pred_check_branch
      %6023 = sbr.rel (0) target = $region57
    $region56: #{tpu_custom_call.1} parent=1 // pred_region
      %6025 = dma.done [#allocation4], 512
    $region57: #{tpu_custom_call.1} parent=1 // pred_fallthru
      _
    %6026 = vsyncpa [#allocation4], 1

</llo_original>
